<compile_context>
chip_gen: v7x
topology: tpu7x:2x2x1
jax: 0.10.0
libtpu: 0.0.40
codegen_flags: <defaults>
</compile_context>

<pallas_src>
import math
from functools import partial

import jax
import jax.numpy as jnp
from jax.experimental import pallas as pl
from jax.experimental.pallas import tpu as pltpu

LEAKY_SLOPE = 0.01  # nn.LeakyReLU() default


# ---------------------------------------------------------------------------
# Conv2d(k=4, s=2, p=1) as a per-output-row Pallas kernel on space-to-depth
# input.  After s2d (factor 2) the conv becomes a 2x2 / stride-1 conv with
# 4*Cin input channels, whose 4 taps are accumulated in-register.
# ---------------------------------------------------------------------------
def _conv_row_kernel(x_ref, w_ref, b_ref, o_ref, *, wo, slope):
    # x_ref: (Hs, Ws, 4*Cin) bf16  (full s2d image of this batch element)
    # w_ref: (2, 2, 4*Cin, Cout) bf16, b_ref: (1, Cout) f32
    # o_ref: (Wo, Cout) bf16  (one output row)
    oh = pl.program_id(1)
    acc = jnp.zeros(o_ref.shape, jnp.float32)
    for a in range(2):          # tap row
        for c in range(2):      # tap col
            xt = x_ref[oh + a, pl.ds(c, wo), :]          # (Wo, 4*Cin)
            acc = acc + jnp.dot(xt, w_ref[a, c],
                                preferred_element_type=jnp.float32)
    y = acc + b_ref[...]                                  # f32 epilogue
    o_ref[...] = jnp.where(y > 0.0, y, slope * y).astype(o_ref.dtype)


def conv_layer(x_nhwc, w, b):
    """x_nhwc: (B,H,W,C) bf16; w: (2,2,4C,Cout) bf16; b: (1,Cout) f32."""
    B, H, W, C = x_nhwc.shape
    Ho, Wo = H // 2, W // 2
    Hs, Ws = Ho + 1, Wo + 1
    Cout = w.shape[-1]
    # pad=1 then space-to-depth (factor 2): (B, Ho+1, Wo+1, 4C)
    xp = jnp.pad(x_nhwc, ((0, 0), (1, 1), (1, 1), (0, 0)))
    xs = xp.reshape(B, Hs, 2, Ws, 2, C)
    xs = jnp.transpose(xs, (0, 1, 3, 2, 4, 5)).reshape(B, Hs, Ws, 4 * C)

    return pl.pallas_call(
        partial(_conv_row_kernel, wo=Wo, slope=LEAKY_SLOPE),
        out_shape=jax.ShapeDtypeStruct((B, Ho, Wo, Cout), jnp.bfloat16),
        grid=(B, Ho),
        in_specs=[
            pl.BlockSpec((None, Hs, Ws, 4 * C), lambda bb, oh: (bb, 0, 0, 0)),
            pl.BlockSpec((2, 2, 4 * C, Cout), lambda bb, oh: (0, 0, 0, 0)),
            pl.BlockSpec((1, Cout), lambda bb, oh: (0, 0)),
        ],
        out_specs=pl.BlockSpec((None, None, Wo, Cout),
                               lambda bb, oh: (bb, oh, 0, 0)),
        compiler_params=pltpu.CompilerParams(
            dimension_semantics=("parallel", "parallel")),
    )(xs, w, b)


# ---------------------------------------------------------------------------
# Fused MLP tail:  l1 (K-tiled reduction) -> l2 -> l3 -> F.relu -> packed
# means/log_std heads -> clamp/exp/rsample/tanh.  Single pallas_call.
# ---------------------------------------------------------------------------
def _mlp_head_kernel(ximg_ref, w1_ref, xrs_ref, wrs_ref, b1_ref,
                     w2_ref, b2_ref, w3_ref, b3_ref,
                     wh_ref, bh_ref, eps_ref, o_ref, acc_ref,
                     *, npad, slope):
    k = pl.program_id(0)

    @pl.when(k == 0)
    def _():
        acc_ref[...] = jnp.zeros_like(acc_ref)

    acc_ref[...] += jnp.dot(ximg_ref[...], w1_ref[...],
                            preferred_element_type=jnp.float32)

    @pl.when(k == pl.num_programs(0) - 1)
    def _():
        h = acc_ref[...]
        h = h + jnp.dot(xrs_ref[...], wrs_ref[...],
                        preferred_element_type=jnp.float32)
        h = h + b1_ref[...]
        h = jnp.where(h > 0.0, h, slope * h)                     # LeakyReLU

        h = jnp.dot(h.astype(w2_ref.dtype), w2_ref[...],
                    preferred_element_type=jnp.float32) + b2_ref[...]
        h = jnp.where(h > 0.0, h, slope * h)                     # LeakyReLU

        h = jnp.dot(h.astype(w3_ref.dtype), w3_ref[...],
                    preferred_element_type=jnp.float32) + b3_ref[...]
        h = jnp.maximum(h, 0.0)                                  # F.relu

        y = jnp.dot(h.astype(wh_ref.dtype), wh_ref[...],
                    preferred_element_type=jnp.float32) + bh_ref[...]
        means = y[:, :npad]
        log_std = jnp.clip(y[:, npad:], -10.0, 2.0)
        # TODO(synk): PyTorch evaluates exp(log_std) / rsample in float64;
        # Pallas TPU has no f64 path, so this stays in float32.
        z = means + eps_ref[...] * jnp.exp(log_std)
        o_ref[...] = jnp.tanh(z).astype(o_ref.dtype)


def mlp_head(x_img, x_rs, eps, params):
    B, F = x_img.shape
    R = x_rs.shape[1]
    n = eps.shape[1]
    npad = params["h_w"].shape[1] // 2
    tk = math.gcd(F, 8192)          # K tile (divides F; F is a multiple of 256)
    kt = F // tk
    eps_p = jnp.pad(eps.astype(jnp.float32), ((0, 0), (0, npad - n)))

    out = pl.pallas_call(
        partial(_mlp_head_kernel, npad=npad, slope=LEAKY_SLOPE),
        out_shape=jax.ShapeDtypeStruct((B, npad), jnp.float32),
        grid=(kt,),
        in_specs=[
            pl.BlockSpec((B, tk), lambda k: (0, k)),              # x_img
            pl.BlockSpec((tk, 256), lambda k: (k, 0)),            # l1 img weight
            pl.BlockSpec((B, R), lambda k: (0, 0)),               # robot_state
            pl.BlockSpec((R, 256), lambda k: (0, 0)),             # l1 rs weight
            pl.BlockSpec((1, 256), lambda k: (0, 0)),             # b1
            pl.BlockSpec((256, 256), lambda k: (0, 0)),           # w2
            pl.BlockSpec((1, 256), lambda k: (0, 0)),             # b2
            pl.BlockSpec((256, 256), lambda k: (0, 0)),           # w3
            pl.BlockSpec((1, 256), lambda k: (0, 0)),             # b3
            pl.BlockSpec((256, 2 * npad), lambda k: (0, 0)),      # packed head w
            pl.BlockSpec((1, 2 * npad), lambda k: (0, 0)),        # packed head b
            pl.BlockSpec((B, npad), lambda k: (0, 0)),            # eps (padded)
        ],
        out_specs=pl.BlockSpec((B, npad), lambda k: (0, 0)),
        scratch_shapes=[pltpu.VMEM((B, 256), jnp.float32)],
        compiler_params=pltpu.CompilerParams(
            dimension_semantics=("arbitrary",)),
    )(x_img, params["l1_w"], x_rs, params["l1rs_w"], params["l1_b"],
      params["l2_w"], params["l2_b"], params["l3_w"], params["l3_b"],
      params["h_w"], params["h_b"], eps_p)
    return out[:, :n]


# ---------------------------------------------------------------------------
# Parameters (shapes from BC_Visual_Policy_Stochastic.__init__), stored in
# kernel-ready layouts: s2d-regrouped bf16 conv weights, NHWC-permuted l1
# rows, packed/padded head weights.
# ---------------------------------------------------------------------------
def init_params(key, robot_state_dim, num_classes, img_size):
    H3 = W3 = img_size // 8
    first_linear = 256 * H3 * W3
    npad = ((num_classes + 127) // 128) * 128
    ks = jax.random.split(key, 8)

    def conv_w(k, cin, cout):                 # kaiming_normal_(mode='fan_out')
        std = math.sqrt(2.0 / (cout * 16))
        w = std * jax.random.normal(k, (4, 4, cin, cout), jnp.float32)   # HWIO
        # regroup to the 2x2 s2d-conv layout: (a, c, r*2*Cin + s*Cin + cin, cout)
        w = w.reshape(2, 2, 2, 2, cin, cout).transpose(0, 2, 1, 3, 4, 5)
        return w.reshape(2, 2, 4 * cin, cout).astype(jnp.bfloat16)

    def lin_w(k, fin, fout):                  # normal_(0, 0.01), stored (in,out)
        return 0.01 * jax.random.normal(k, (fin, fout), jnp.float32)

    zb = lambda n_: jnp.zeros((1, n_), jnp.float32)

    # l1 generated in PyTorch flatten-NCHW row order, then rows permuted to
    # the NHWC flatten order used by the kernels (so no runtime transpose).
    l1_full = lin_w(ks[3], first_linear + robot_state_dim, 256)
    l1_img = (l1_full[:first_linear]
              .reshape(256, H3, W3, 256).transpose(1, 2, 0, 3)
              .reshape(first_linear, 256).astype(jnp.bfloat16))
    l1_rs = l1_full[first_linear:].astype(jnp.bfloat16)

    # means / log_std heads packed side by side, each padded to 128 lanes.
    wm = lin_w(ks[6], 256, num_classes)
    ws = lin_w(ks[7], 256, num_classes)
    wm_p = jnp.zeros((256, npad), jnp.float32).at[:, :num_classes].set(wm)
    ws_p = jnp.zeros((256, npad), jnp.float32).at[:, :num_classes].set(ws)
    h_w = jnp.concatenate([wm_p, ws_p], axis=1).astype(jnp.bfloat16)

    return dict(
        c1_w=conv_w(ks[0], 3, 64),    c1_b=zb(64),
        c2_w=conv_w(ks[1], 64, 128),  c2_b=zb(128),
        c3_w=conv_w(ks[2], 128, 256), c3_b=zb(256),
        l1_w=l1_img, l1rs_w=l1_rs, l1_b=zb(256),
        l2_w=lin_w(ks[4], 256, 256).astype(jnp.bfloat16), l2_b=zb(256),
        l3_w=lin_w(ks[5], 256, 256).astype(jnp.bfloat16), l3_b=zb(256),
        h_w=h_w, h_b=jnp.zeros((1, 2 * npad), jnp.float32),
    )


# ---------------------------------------------------------------------------
# Forward pass (mirrors BC_Visual_Policy_Stochastic.forward)
# ---------------------------------------------------------------------------
@jax.jit
def forward(params, x_nchw, robot_state, eps):
    B = x_nchw.shape[0]
    x = jnp.transpose(x_nchw, (0, 2, 3, 1)).astype(jnp.bfloat16)   # NCHW->NHWC
    x = conv_layer(x, params["c1_w"], params["c1_b"])              # + LeakyReLU
    x = conv_layer(x, params["c2_w"], params["c2_b"])              # + LeakyReLU
    x = conv_layer(x, params["c3_w"], params["c3_b"])              # + LeakyReLU
    x_flat = x.reshape(B, -1)          # NHWC flatten; l1 rows pre-permuted
    return mlp_head(x_flat, robot_state.astype(jnp.bfloat16), eps, params)


if __name__ == "__main__":
    B, IMG, ROBOT_DIM, NUM_CLASSES = 2, 16, 4, 32

    key = jax.random.PRNGKey(0)
    k_img, k_rs, k_eps, k_par = jax.random.split(key, 4)

    x_nchw = jax.random.normal(k_img, (B, 3, IMG, IMG), jnp.float32)
    robot_state = jax.random.normal(k_rs, (B, ROBOT_DIM), jnp.float32)
    eps = jax.random.normal(k_eps, (B, NUM_CLASSES), jnp.float32)   # rsample noise
    params = init_params(k_par, ROBOT_DIM, NUM_CLASSES, IMG)

    action = forward(params, x_nchw, robot_state, eps)
    action = jax.block_until_ready(action)
    assert action.shape == (B, NUM_CLASSES)
    assert bool(jnp.all(jnp.isfinite(action)))
    assert bool(jnp.all(jnp.abs(action) <= 1.0))                    # tanh-squashed
    print("KERNEL_OK")
</pallas_src>

<mosaic_0001>
module attributes {stable_mosaic.version = 11 : i64} {
  func.func @_conv_row_kernel(%arg0: i32, %arg1: i32, %arg2: memref<1x9x9x12xbf16, #tpu.memory_space<vmem>>, %arg3: memref<2x2x12x64xbf16, #tpu.memory_space<vmem>>, %arg4: memref<1x64xf32, #tpu.memory_space<vmem>>, %arg5: memref<1x1x8x64xbf16, #tpu.memory_space<vmem>>) attributes {dimension_semantics = [#tpu.dimension_semantics<parallel>, #tpu.dimension_semantics<parallel>], iteration_bounds = array<i64: 2, 8>, scalar_prefetch = 0 : i64, scratch_operands = 0 : i64, tpu.core_type = #tpu.core_type<tc>, window_params = [{transform_indices = @transform_0, window_bounds = array<i64: 1, 9, 9, 12>}, {pipeline_mode = #tpu.pipeline_mode<synchronous>, transform_indices = @transform_1, window_bounds = array<i64: 2, 2, 12, 64>}, {pipeline_mode = #tpu.pipeline_mode<synchronous>, transform_indices = @transform_2, window_bounds = array<i64: 1, 64>}, {transform_indices = @transform_3, window_bounds = array<i64: 1, 1, 8, 64>}]} {
    %cst = arith.constant 0.000000e+00 : f32
    %0 = vector.broadcast %cst : f32 to vector<8x64xf32>
    %c0_i32 = arith.constant 0 : i32
    %1 = arith.addi %arg1, %c0_i32 : i32
    %c0 = arith.constant 0 : index
    %2 = arith.index_cast %1 : i32 to index
    %c0_0 = arith.constant 0 : index
    %c0_1 = arith.constant 0 : index
    %3 = vector.load %arg2[%c0, %2, %c0_0, %c0_1] : memref<1x9x9x12xbf16, #tpu.memory_space<vmem>>, vector<1x1x8x12xbf16>
    %4 = vector.shape_cast %3 : vector<1x1x8x12xbf16> to vector<8x12xbf16>
    %c0_2 = arith.constant 0 : index
    %c0_3 = arith.constant 0 : index
    %c0_4 = arith.constant 0 : index
    %c0_5 = arith.constant 0 : index
    %5 = vector.load %arg3[%c0_2, %c0_3, %c0_4, %c0_5] : memref<2x2x12x64xbf16, #tpu.memory_space<vmem>>, vector<1x1x12x64xbf16>
    %6 = vector.shape_cast %5 : vector<1x1x12x64xbf16> to vector<12x64xbf16>
    %cst_6 = arith.constant dense<0.000000e+00> : vector<8x64xf32>
    %7 = tpu.matmul %4, %6, %cst_6 {dimension_numbers = #tpu.dot_dimension_numbers<[1], [0], [0], [1], [0, 0, 1, 1], [], []>} : vector<8x12xbf16>, vector<12x64xbf16>, vector<8x64xf32> -> vector<8x64xf32>
    %8 = arith.addf %0, %7 : vector<8x64xf32>
    %c0_i32_7 = arith.constant 0 : i32
    %9 = arith.addi %arg1, %c0_i32_7 : i32
    %c0_8 = arith.constant 0 : index
    %10 = arith.index_cast %9 : i32 to index
    %c1 = arith.constant 1 : index
    %c0_9 = arith.constant 0 : index
    %11 = vector.load %arg2[%c0_8, %10, %c1, %c0_9] : memref<1x9x9x12xbf16, #tpu.memory_space<vmem>>, vector<1x1x8x12xbf16>
    %12 = vector.shape_cast %11 : vector<1x1x8x12xbf16> to vector<8x12xbf16>
    %c0_10 = arith.constant 0 : index
    %c1_11 = arith.constant 1 : index
    %c0_12 = arith.constant 0 : index
    %c0_13 = arith.constant 0 : index
    %13 = vector.load %arg3[%c0_10, %c1_11, %c0_12, %c0_13] : memref<2x2x12x64xbf16, #tpu.memory_space<vmem>>, vector<1x1x12x64xbf16>
    %14 = vector.shape_cast %13 : vector<1x1x12x64xbf16> to vector<12x64xbf16>
    %cst_14 = arith.constant dense<0.000000e+00> : vector<8x64xf32>
    %15 = tpu.matmul %12, %14, %cst_14 {dimension_numbers = #tpu.dot_dimension_numbers<[1], [0], [0], [1], [0, 0, 1, 1], [], []>} : vector<8x12xbf16>, vector<12x64xbf16>, vector<8x64xf32> -> vector<8x64xf32>
    %16 = arith.addf %8, %15 : vector<8x64xf32>
    %c1_i32 = arith.constant 1 : i32
    %17 = arith.addi %arg1, %c1_i32 : i32
    %c0_15 = arith.constant 0 : index
    %18 = arith.index_cast %17 : i32 to index
    %c0_16 = arith.constant 0 : index
    %c0_17 = arith.constant 0 : index
    %19 = vector.load %arg2[%c0_15, %18, %c0_16, %c0_17] : memref<1x9x9x12xbf16, #tpu.memory_space<vmem>>, vector<1x1x8x12xbf16>
    %20 = vector.shape_cast %19 : vector<1x1x8x12xbf16> to vector<8x12xbf16>
    %c1_18 = arith.constant 1 : index
    %c0_19 = arith.constant 0 : index
    %c0_20 = arith.constant 0 : index
    %c0_21 = arith.constant 0 : index
    %21 = vector.load %arg3[%c1_18, %c0_19, %c0_20, %c0_21] : memref<2x2x12x64xbf16, #tpu.memory_space<vmem>>, vector<1x1x12x64xbf16>
    %22 = vector.shape_cast %21 : vector<1x1x12x64xbf16> to vector<12x64xbf16>
    %cst_22 = arith.constant dense<0.000000e+00> : vector<8x64xf32>
    %23 = tpu.matmul %20, %22, %cst_22 {dimension_numbers = #tpu.dot_dimension_numbers<[1], [0], [0], [1], [0, 0, 1, 1], [], []>} : vector<8x12xbf16>, vector<12x64xbf16>, vector<8x64xf32> -> vector<8x64xf32>
    %24 = arith.addf %16, %23 : vector<8x64xf32>
    %c1_i32_23 = arith.constant 1 : i32
    %25 = arith.addi %arg1, %c1_i32_23 : i32
    %c0_24 = arith.constant 0 : index
    %26 = arith.index_cast %25 : i32 to index
    %c1_25 = arith.constant 1 : index
    %c0_26 = arith.constant 0 : index
    %27 = vector.load %arg2[%c0_24, %26, %c1_25, %c0_26] : memref<1x9x9x12xbf16, #tpu.memory_space<vmem>>, vector<1x1x8x12xbf16>
    %28 = vector.shape_cast %27 : vector<1x1x8x12xbf16> to vector<8x12xbf16>
    %c1_27 = arith.constant 1 : index
    %c1_28 = arith.constant 1 : index
    %c0_29 = arith.constant 0 : index
    %c0_30 = arith.constant 0 : index
    %29 = vector.load %arg3[%c1_27, %c1_28, %c0_29, %c0_30] : memref<2x2x12x64xbf16, #tpu.memory_space<vmem>>, vector<1x1x12x64xbf16>
    %30 = vector.shape_cast %29 : vector<1x1x12x64xbf16> to vector<12x64xbf16>
    %cst_31 = arith.constant dense<0.000000e+00> : vector<8x64xf32>
    %31 = tpu.matmul %28, %30, %cst_31 {dimension_numbers = #tpu.dot_dimension_numbers<[1], [0], [0], [1], [0, 0, 1, 1], [], []>} : vector<8x12xbf16>, vector<12x64xbf16>, vector<8x64xf32> -> vector<8x64xf32>
    %32 = arith.addf %24, %31 : vector<8x64xf32>
    %c0_32 = arith.constant 0 : index
    %c0_33 = arith.constant 0 : index
    %33 = vector.load %arg4[%c0_32, %c0_33] : memref<1x64xf32, #tpu.memory_space<vmem>>, vector<1x64xf32>
    %34 = vector.broadcast %33 : vector<1x64xf32> to vector<8x64xf32>
    %35 = arith.addf %32, %34 : vector<8x64xf32>
    %cst_34 = arith.constant 0.000000e+00 : f32
    %36 = vector.broadcast %cst_34 : f32 to vector<8x64xf32>
    %37 = arith.cmpf ogt, %35, %36 : vector<8x64xf32>
    %cst_35 = arith.constant 0.00999999977 : f32
    %38 = vector.broadcast %cst_35 : f32 to vector<8x64xf32>
    %39 = arith.mulf %38, %35 : vector<8x64xf32>
    %40 = arith.select %37, %35, %39 : vector<8x64xi1>, vector<8x64xf32>
    %41 = arith.truncf %40 : vector<8x64xf32> to vector<8x64xbf16>
    %c0_36 = arith.constant 0 : index
    %c0_37 = arith.constant 0 : index
    %c0_38 = arith.constant 0 : index
    %c0_39 = arith.constant 0 : index
    %42 = vector.load %arg5[%c0_36, %c0_37, %c0_38, %c0_39] : memref<1x1x8x64xbf16, #tpu.memory_space<vmem>>, vector<1x1x8x64xbf16>
    %43 = vector.shape_cast %42 : vector<1x1x8x64xbf16> to vector<8x64xbf16>
    %44 = vector.shape_cast %41 : vector<8x64xbf16> to vector<1x1x8x64xbf16>
    tpu.vector_store %arg5[%c0_36, %c0_37, %c0_38, %c0_39], %44 {strides = array<i32>} : memref<1x1x8x64xbf16, #tpu.memory_space<vmem>>, vector<1x1x8x64xbf16>,
    return
  }
  func.func @transform_0(%arg0: i32, %arg1: i32) -> (i32, i32, i32, i32) {
    %c0_i32 = arith.constant 0 : i32
    %c0_i32_0 = arith.constant 0 : i32
    %c0_i32_1 = arith.constant 0 : i32
    %c0_i32_2 = arith.constant 0 : i32
    return %arg0, %c0_i32, %c0_i32_0, %c0_i32_1 : i32, i32, i32, i32
  }
  func.func @transform_1(%arg0: i32, %arg1: i32) -> (i32, i32, i32, i32) {
    %c0_i32 = arith.constant 0 : i32
    %c0_i32_0 = arith.constant 0 : i32
    %c0_i32_1 = arith.constant 0 : i32
    %c0_i32_2 = arith.constant 0 : i32
    %c0_i32_3 = arith.constant 0 : i32
    return %c0_i32, %c0_i32_0, %c0_i32_1, %c0_i32_2 : i32, i32, i32, i32
  }
  func.func @transform_2(%arg0: i32, %arg1: i32) -> (i32, i32) {
    %c0_i32 = arith.constant 0 : i32
    %c0_i32_0 = arith.constant 0 : i32
    %c0_i32_1 = arith.constant 0 : i32
    return %c0_i32, %c0_i32_0 : i32, i32
  }
  func.func @transform_3(%arg0: i32, %arg1: i32) -> (i32, i32, i32, i32) {
    %c0_i32 = arith.constant 0 : i32
    %c0_i32_0 = arith.constant 0 : i32
    %c0_i32_1 = arith.constant 0 : i32
    return %arg0, %arg1, %c0_i32, %c0_i32_0 : i32, i32, i32, i32
  }
}

module attributes {stable_mosaic.version = 11 : i64} {
  func.func @_conv_row_kernel(%arg0: i32, %arg1: i32, %arg2: memref<1x5x5x256xbf16, #tpu.memory_space<vmem>>, %arg3: memref<2x2x256x128xbf16, #tpu.memory_space<vmem>>, %arg4: memref<1x128xf32, #tpu.memory_space<vmem>>, %arg5: memref<1x1x4x128xbf16, #tpu.memory_space<vmem>>) attributes {dimension_semantics = [#tpu.dimension_semantics<parallel>, #tpu.dimension_semantics<parallel>], iteration_bounds = array<i64: 2, 4>, scalar_prefetch = 0 : i64, scratch_operands = 0 : i64, tpu.core_type = #tpu.core_type<tc>, window_params = [{transform_indices = @transform_0, window_bounds = array<i64: 1, 5, 5, 256>}, {pipeline_mode = #tpu.pipeline_mode<synchronous>, transform_indices = @transform_1, window_bounds = array<i64: 2, 2, 256, 128>}, {pipeline_mode = #tpu.pipeline_mode<synchronous>, transform_indices = @transform_2, window_bounds = array<i64: 1, 128>}, {transform_indices = @transform_3, window_bounds = array<i64: 1, 1, 4, 128>}]} {
    %cst = arith.constant 0.000000e+00 : f32
    %0 = vector.broadcast %cst : f32 to vector<4x128xf32>
    %c0_i32 = arith.constant 0 : i32
    %1 = arith.addi %arg1, %c0_i32 : i32
    %c0 = arith.constant 0 : index
    %2 = arith.index_cast %1 : i32 to index
    %c0_0 = arith.constant 0 : index
    %c0_1 = arith.constant 0 : index
    %3 = vector.load %arg2[%c0, %2, %c0_0, %c0_1] : memref<1x5x5x256xbf16, #tpu.memory_space<vmem>>, vector<1x1x4x256xbf16>
    %4 = vector.shape_cast %3 : vector<1x1x4x256xbf16> to vector<4x256xbf16>
    %c0_2 = arith.constant 0 : index
    %c0_3 = arith.constant 0 : index
    %c0_4 = arith.constant 0 : index
    %c0_5 = arith.constant 0 : index
    %5 = vector.load %arg3[%c0_2, %c0_3, %c0_4, %c0_5] : memref<2x2x256x128xbf16, #tpu.memory_space<vmem>>, vector<1x1x256x128xbf16>
    %6 = vector.shape_cast %5 : vector<1x1x256x128xbf16> to vector<256x128xbf16>
    %cst_6 = arith.constant dense<0.000000e+00> : vector<4x128xf32>
    %7 = tpu.matmul %4, %6, %cst_6 {dimension_numbers = #tpu.dot_dimension_numbers<[1], [0], [0], [1], [0, 0, 1, 1], [], []>} : vector<4x256xbf16>, vector<256x128xbf16>, vector<4x128xf32> -> vector<4x128xf32>
    %8 = arith.addf %0, %7 : vector<4x128xf32>
    %c0_i32_7 = arith.constant 0 : i32
    %9 = arith.addi %arg1, %c0_i32_7 : i32
    %c0_8 = arith.constant 0 : index
    %10 = arith.index_cast %9 : i32 to index
    %c1 = arith.constant 1 : index
    %c0_9 = arith.constant 0 : index
    %11 = vector.load %arg2[%c0_8, %10, %c1, %c0_9] : memref<1x5x5x256xbf16, #tpu.memory_space<vmem>>, vector<1x1x4x256xbf16>
    %12 = vector.shape_cast %11 : vector<1x1x4x256xbf16> to vector<4x256xbf16>
    %c0_10 = arith.constant 0 : index
    %c1_11 = arith.constant 1 : index
    %c0_12 = arith.constant 0 : index
    %c0_13 = arith.constant 0 : index
    %13 = vector.load %arg3[%c0_10, %c1_11, %c0_12, %c0_13] : memref<2x2x256x128xbf16, #tpu.memory_space<vmem>>, vector<1x1x256x128xbf16>
    %14 = vector.shape_cast %13 : vector<1x1x256x128xbf16> to vector<256x128xbf16>
    %cst_14 = arith.constant dense<0.000000e+00> : vector<4x128xf32>
    %15 = tpu.matmul %12, %14, %cst_14 {dimension_numbers = #tpu.dot_dimension_numbers<[1], [0], [0], [1], [0, 0, 1, 1], [], []>} : vector<4x256xbf16>, vector<256x128xbf16>, vector<4x128xf32> -> vector<4x128xf32>
    %16 = arith.addf %8, %15 : vector<4x128xf32>
    %c1_i32 = arith.constant 1 : i32
    %17 = arith.addi %arg1, %c1_i32 : i32
    %c0_15 = arith.constant 0 : index
    %18 = arith.index_cast %17 : i32 to index
    %c0_16 = arith.constant 0 : index
    %c0_17 = arith.constant 0 : index
    %19 = vector.load %arg2[%c0_15, %18, %c0_16, %c0_17] : memref<1x5x5x256xbf16, #tpu.memory_space<vmem>>, vector<1x1x4x256xbf16>
    %20 = vector.shape_cast %19 : vector<1x1x4x256xbf16> to vector<4x256xbf16>
    %c1_18 = arith.constant 1 : index
    %c0_19 = arith.constant 0 : index
    %c0_20 = arith.constant 0 : index
    %c0_21 = arith.constant 0 : index
    %21 = vector.load %arg3[%c1_18, %c0_19, %c0_20, %c0_21] : memref<2x2x256x128xbf16, #tpu.memory_space<vmem>>, vector<1x1x256x128xbf16>
    %22 = vector.shape_cast %21 : vector<1x1x256x128xbf16> to vector<256x128xbf16>
    %cst_22 = arith.constant dense<0.000000e+00> : vector<4x128xf32>
    %23 = tpu.matmul %20, %22, %cst_22 {dimension_numbers = #tpu.dot_dimension_numbers<[1], [0], [0], [1], [0, 0, 1, 1], [], []>} : vector<4x256xbf16>, vector<256x128xbf16>, vector<4x128xf32> -> vector<4x128xf32>
    %24 = arith.addf %16, %23 : vector<4x128xf32>
    %c1_i32_23 = arith.constant 1 : i32
    %25 = arith.addi %arg1, %c1_i32_23 : i32
    %c0_24 = arith.constant 0 : index
    %26 = arith.index_cast %25 : i32 to index
    %c1_25 = arith.constant 1 : index
    %c0_26 = arith.constant 0 : index
    %27 = vector.load %arg2[%c0_24, %26, %c1_25, %c0_26] : memref<1x5x5x256xbf16, #tpu.memory_space<vmem>>, vector<1x1x4x256xbf16>
    %28 = vector.shape_cast %27 : vector<1x1x4x256xbf16> to vector<4x256xbf16>
    %c1_27 = arith.constant 1 : index
    %c1_28 = arith.constant 1 : index
    %c0_29 = arith.constant 0 : index
    %c0_30 = arith.constant 0 : index
    %29 = vector.load %arg3[%c1_27, %c1_28, %c0_29, %c0_30] : memref<2x2x256x128xbf16, #tpu.memory_space<vmem>>, vector<1x1x256x128xbf16>
    %30 = vector.shape_cast %29 : vector<1x1x256x128xbf16> to vector<256x128xbf16>
    %cst_31 = arith.constant dense<0.000000e+00> : vector<4x128xf32>
    %31 = tpu.matmul %28, %30, %cst_31 {dimension_numbers = #tpu.dot_dimension_numbers<[1], [0], [0], [1], [0, 0, 1, 1], [], []>} : vector<4x256xbf16>, vector<256x128xbf16>, vector<4x128xf32> -> vector<4x128xf32>
    %32 = arith.addf %24, %31 : vector<4x128xf32>
    %c0_32 = arith.constant 0 : index
    %c0_33 = arith.constant 0 : index
    %33 = vector.load %arg4[%c0_32, %c0_33] : memref<1x128xf32, #tpu.memory_space<vmem>>, vector<1x128xf32>
    %34 = vector.broadcast %33 : vector<1x128xf32> to vector<4x128xf32>
    %35 = arith.addf %32, %34 : vector<4x128xf32>
    %cst_34 = arith.constant 0.000000e+00 : f32
    %36 = vector.broadcast %cst_34 : f32 to vector<4x128xf32>
    %37 = arith.cmpf ogt, %35, %36 : vector<4x128xf32>
    %cst_35 = arith.constant 0.00999999977 : f32
    %38 = vector.broadcast %cst_35 : f32 to vector<4x128xf32>
    %39 = arith.mulf %38, %35 : vector<4x128xf32>
    %40 = arith.select %37, %35, %39 : vector<4x128xi1>, vector<4x128xf32>
    %41 = arith.truncf %40 : vector<4x128xf32> to vector<4x128xbf16>
    %c0_36 = arith.constant 0 : index
    %c0_37 = arith.constant 0 : index
    %c0_38 = arith.constant 0 : index
    %c0_39 = arith.constant 0 : index
    %42 = vector.load %arg5[%c0_36, %c0_37, %c0_38, %c0_39] : memref<1x1x4x128xbf16, #tpu.memory_space<vmem>>, vector<1x1x4x128xbf16>
    %43 = vector.shape_cast %42 : vector<1x1x4x128xbf16> to vector<4x128xbf16>
    %44 = vector.shape_cast %41 : vector<4x128xbf16> to vector<1x1x4x128xbf16>
    tpu.vector_store %arg5[%c0_36, %c0_37, %c0_38, %c0_39], %44 {strides = array<i32>} : memref<1x1x4x128xbf16, #tpu.memory_space<vmem>>, vector<1x1x4x128xbf16>,
    return
  }
  func.func @transform_0(%arg0: i32, %arg1: i32) -> (i32, i32, i32, i32) {
    %c0_i32 = arith.constant 0 : i32
    %c0_i32_0 = arith.constant 0 : i32
    %c0_i32_1 = arith.constant 0 : i32
    %c0_i32_2 = arith.constant 0 : i32
    return %arg0, %c0_i32, %c0_i32_0, %c0_i32_1 : i32, i32, i32, i32
  }
  func.func @transform_1(%arg0: i32, %arg1: i32) -> (i32, i32, i32, i32) {
    %c0_i32 = arith.constant 0 : i32
    %c0_i32_0 = arith.constant 0 : i32
    %c0_i32_1 = arith.constant 0 : i32
    %c0_i32_2 = arith.constant 0 : i32
    %c0_i32_3 = arith.constant 0 : i32
    return %c0_i32, %c0_i32_0, %c0_i32_1, %c0_i32_2 : i32, i32, i32, i32
  }
  func.func @transform_2(%arg0: i32, %arg1: i32) -> (i32, i32) {
    %c0_i32 = arith.constant 0 : i32
    %c0_i32_0 = arith.constant 0 : i32
    %c0_i32_1 = arith.constant 0 : i32
    return %c0_i32, %c0_i32_0 : i32, i32
  }
  func.func @transform_3(%arg0: i32, %arg1: i32) -> (i32, i32, i32, i32) {
    %c0_i32 = arith.constant 0 : i32
    %c0_i32_0 = arith.constant 0 : i32
    %c0_i32_1 = arith.constant 0 : i32
    return %arg0, %arg1, %c0_i32, %c0_i32_0 : i32, i32, i32, i32
  }
}

module attributes {stable_mosaic.version = 11 : i64} {
  func.func @_conv_row_kernel(%arg0: i32, %arg1: i32, %arg2: memref<1x3x3x512xbf16, #tpu.memory_space<vmem>>, %arg3: memref<2x2x512x256xbf16, #tpu.memory_space<vmem>>, %arg4: memref<1x256xf32, #tpu.memory_space<vmem>>, %arg5: memref<1x1x2x256xbf16, #tpu.memory_space<vmem>>) attributes {dimension_semantics = [#tpu.dimension_semantics<parallel>, #tpu.dimension_semantics<parallel>], iteration_bounds = array<i64: 2, 2>, scalar_prefetch = 0 : i64, scratch_operands = 0 : i64, tpu.core_type = #tpu.core_type<tc>, window_params = [{transform_indices = @transform_0, window_bounds = array<i64: 1, 3, 3, 512>}, {pipeline_mode = #tpu.pipeline_mode<synchronous>, transform_indices = @transform_1, window_bounds = array<i64: 2, 2, 512, 256>}, {pipeline_mode = #tpu.pipeline_mode<synchronous>, transform_indices = @transform_2, window_bounds = array<i64: 1, 256>}, {transform_indices = @transform_3, window_bounds = array<i64: 1, 1, 2, 256>}]} {
    %cst = arith.constant 0.000000e+00 : f32
    %0 = vector.broadcast %cst : f32 to vector<2x256xf32>
    %c0_i32 = arith.constant 0 : i32
    %1 = arith.addi %arg1, %c0_i32 : i32
    %c0 = arith.constant 0 : index
    %2 = arith.index_cast %1 : i32 to index
    %c0_0 = arith.constant 0 : index
    %c0_1 = arith.constant 0 : index
    %3 = vector.load %arg2[%c0, %2, %c0_0, %c0_1] : memref<1x3x3x512xbf16, #tpu.memory_space<vmem>>, vector<1x1x2x512xbf16>
    %4 = vector.shape_cast %3 : vector<1x1x2x512xbf16> to vector<2x512xbf16>
    %c0_2 = arith.constant 0 : index
    %c0_3 = arith.constant 0 : index
    %c0_4 = arith.constant 0 : index
    %c0_5 = arith.constant 0 : index
    %5 = vector.load %arg3[%c0_2, %c0_3, %c0_4, %c0_5] : memref<2x2x512x256xbf16, #tpu.memory_space<vmem>>, vector<1x1x512x256xbf16>
    %6 = vector.shape_cast %5 : vector<1x1x512x256xbf16> to vector<512x256xbf16>
    %cst_6 = arith.constant dense<0.000000e+00> : vector<2x256xf32>
    %7 = tpu.matmul %4, %6, %cst_6 {dimension_numbers = #tpu.dot_dimension_numbers<[1], [0], [0], [1], [0, 0, 1, 1], [], []>} : vector<2x512xbf16>, vector<512x256xbf16>, vector<2x256xf32> -> vector<2x256xf32>
    %8 = arith.addf %0, %7 : vector<2x256xf32>
    %c0_i32_7 = arith.constant 0 : i32
    %9 = arith.addi %arg1, %c0_i32_7 : i32
    %c0_8 = arith.constant 0 : index
    %10 = arith.index_cast %9 : i32 to index
    %c1 = arith.constant 1 : index
    %c0_9 = arith.constant 0 : index
    %11 = vector.load %arg2[%c0_8, %10, %c1, %c0_9] : memref<1x3x3x512xbf16, #tpu.memory_space<vmem>>, vector<1x1x2x512xbf16>
    %12 = vector.shape_cast %11 : vector<1x1x2x512xbf16> to vector<2x512xbf16>
    %c0_10 = arith.constant 0 : index
    %c1_11 = arith.constant 1 : index
    %c0_12 = arith.constant 0 : index
    %c0_13 = arith.constant 0 : index
    %13 = vector.load %arg3[%c0_10, %c1_11, %c0_12, %c0_13] : memref<2x2x512x256xbf16, #tpu.memory_space<vmem>>, vector<1x1x512x256xbf16>
    %14 = vector.shape_cast %13 : vector<1x1x512x256xbf16> to vector<512x256xbf16>
    %cst_14 = arith.constant dense<0.000000e+00> : vector<2x256xf32>
    %15 = tpu.matmul %12, %14, %cst_14 {dimension_numbers = #tpu.dot_dimension_numbers<[1], [0], [0], [1], [0, 0, 1, 1], [], []>} : vector<2x512xbf16>, vector<512x256xbf16>, vector<2x256xf32> -> vector<2x256xf32>
    %16 = arith.addf %8, %15 : vector<2x256xf32>
    %c1_i32 = arith.constant 1 : i32
    %17 = arith.addi %arg1, %c1_i32 : i32
    %c0_15 = arith.constant 0 : index
    %18 = arith.index_cast %17 : i32 to index
    %c0_16 = arith.constant 0 : index
    %c0_17 = arith.constant 0 : index
    %19 = vector.load %arg2[%c0_15, %18, %c0_16, %c0_17] : memref<1x3x3x512xbf16, #tpu.memory_space<vmem>>, vector<1x1x2x512xbf16>
    %20 = vector.shape_cast %19 : vector<1x1x2x512xbf16> to vector<2x512xbf16>
    %c1_18 = arith.constant 1 : index
    %c0_19 = arith.constant 0 : index
    %c0_20 = arith.constant 0 : index
    %c0_21 = arith.constant 0 : index
    %21 = vector.load %arg3[%c1_18, %c0_19, %c0_20, %c0_21] : memref<2x2x512x256xbf16, #tpu.memory_space<vmem>>, vector<1x1x512x256xbf16>
    %22 = vector.shape_cast %21 : vector<1x1x512x256xbf16> to vector<512x256xbf16>
    %cst_22 = arith.constant dense<0.000000e+00> : vector<2x256xf32>
    %23 = tpu.matmul %20, %22, %cst_22 {dimension_numbers = #tpu.dot_dimension_numbers<[1], [0], [0], [1], [0, 0, 1, 1], [], []>} : vector<2x512xbf16>, vector<512x256xbf16>, vector<2x256xf32> -> vector<2x256xf32>
    %24 = arith.addf %16, %23 : vector<2x256xf32>
    %c1_i32_23 = arith.constant 1 : i32
    %25 = arith.addi %arg1, %c1_i32_23 : i32
    %c0_24 = arith.constant 0 : index
    %26 = arith.index_cast %25 : i32 to index
    %c1_25 = arith.constant 1 : index
    %c0_26 = arith.constant 0 : index
    %27 = vector.load %arg2[%c0_24, %26, %c1_25, %c0_26] : memref<1x3x3x512xbf16, #tpu.memory_space<vmem>>, vector<1x1x2x512xbf16>
    %28 = vector.shape_cast %27 : vector<1x1x2x512xbf16> to vector<2x512xbf16>
    %c1_27 = arith.constant 1 : index
    %c1_28 = arith.constant 1 : index
    %c0_29 = arith.constant 0 : index
    %c0_30 = arith.constant 0 : index
    %29 = vector.load %arg3[%c1_27, %c1_28, %c0_29, %c0_30] : memref<2x2x512x256xbf16, #tpu.memory_space<vmem>>, vector<1x1x512x256xbf16>
    %30 = vector.shape_cast %29 : vector<1x1x512x256xbf16> to vector<512x256xbf16>
    %cst_31 = arith.constant dense<0.000000e+00> : vector<2x256xf32>
    %31 = tpu.matmul %28, %30, %cst_31 {dimension_numbers = #tpu.dot_dimension_numbers<[1], [0], [0], [1], [0, 0, 1, 1], [], []>} : vector<2x512xbf16>, vector<512x256xbf16>, vector<2x256xf32> -> vector<2x256xf32>
    %32 = arith.addf %24, %31 : vector<2x256xf32>
    %c0_32 = arith.constant 0 : index
    %c0_33 = arith.constant 0 : index
    %33 = vector.load %arg4[%c0_32, %c0_33] : memref<1x256xf32, #tpu.memory_space<vmem>>, vector<1x256xf32>
    %34 = vector.broadcast %33 : vector<1x256xf32> to vector<2x256xf32>
    %35 = arith.addf %32, %34 : vector<2x256xf32>
    %cst_34 = arith.constant 0.000000e+00 : f32
    %36 = vector.broadcast %cst_34 : f32 to vector<2x256xf32>
    %37 = arith.cmpf ogt, %35, %36 : vector<2x256xf32>
    %cst_35 = arith.constant 0.00999999977 : f32
    %38 = vector.broadcast %cst_35 : f32 to vector<2x256xf32>
    %39 = arith.mulf %38, %35 : vector<2x256xf32>
    %40 = arith.select %37, %35, %39 : vector<2x256xi1>, vector<2x256xf32>
    %41 = arith.truncf %40 : vector<2x256xf32> to vector<2x256xbf16>
    %c0_36 = arith.constant 0 : index
    %c0_37 = arith.constant 0 : index
    %c0_38 = arith.constant 0 : index
    %c0_39 = arith.constant 0 : index
    %42 = vector.load %arg5[%c0_36, %c0_37, %c0_38, %c0_39] : memref<1x1x2x256xbf16, #tpu.memory_space<vmem>>, vector<1x1x2x256xbf16>
    %43 = vector.shape_cast %42 : vector<1x1x2x256xbf16> to vector<2x256xbf16>
    %44 = vector.shape_cast %41 : vector<2x256xbf16> to vector<1x1x2x256xbf16>
    tpu.vector_store %arg5[%c0_36, %c0_37, %c0_38, %c0_39], %44 {strides = array<i32>} : memref<1x1x2x256xbf16, #tpu.memory_space<vmem>>, vector<1x1x2x256xbf16>,
    return
  }
  func.func @transform_0(%arg0: i32, %arg1: i32) -> (i32, i32, i32, i32) {
    %c0_i32 = arith.constant 0 : i32
    %c0_i32_0 = arith.constant 0 : i32
    %c0_i32_1 = arith.constant 0 : i32
    %c0_i32_2 = arith.constant 0 : i32
    return %arg0, %c0_i32, %c0_i32_0, %c0_i32_1 : i32, i32, i32, i32
  }
  func.func @transform_1(%arg0: i32, %arg1: i32) -> (i32, i32, i32, i32) {
    %c0_i32 = arith.constant 0 : i32
    %c0_i32_0 = arith.constant 0 : i32
    %c0_i32_1 = arith.constant 0 : i32
    %c0_i32_2 = arith.constant 0 : i32
    %c0_i32_3 = arith.constant 0 : i32
    return %c0_i32, %c0_i32_0, %c0_i32_1, %c0_i32_2 : i32, i32, i32, i32
  }
  func.func @transform_2(%arg0: i32, %arg1: i32) -> (i32, i32) {
    %c0_i32 = arith.constant 0 : i32
    %c0_i32_0 = arith.constant 0 : i32
    %c0_i32_1 = arith.constant 0 : i32
    return %c0_i32, %c0_i32_0 : i32, i32
  }
  func.func @transform_3(%arg0: i32, %arg1: i32) -> (i32, i32, i32, i32) {
    %c0_i32 = arith.constant 0 : i32
    %c0_i32_0 = arith.constant 0 : i32
    %c0_i32_1 = arith.constant 0 : i32
    return %arg0, %arg1, %c0_i32, %c0_i32_0 : i32, i32, i32, i32
  }
}

module attributes {stable_mosaic.version = 11 : i64} {
  func.func @_mlp_head_kernel(%arg0: i32, %arg1: memref<2x1024xbf16, #tpu.memory_space<vmem>>, %arg2: memref<1024x256xbf16, #tpu.memory_space<vmem>>, %arg3: memref<2x4xbf16, #tpu.memory_space<vmem>>, %arg4: memref<4x256xbf16, #tpu.memory_space<vmem>>, %arg5: memref<1x256xf32, #tpu.memory_space<vmem>>, %arg6: memref<256x256xbf16, #tpu.memory_space<vmem>>, %arg7: memref<1x256xf32, #tpu.memory_space<vmem>>, %arg8: memref<256x256xbf16, #tpu.memory_space<vmem>>, %arg9: memref<1x256xf32, #tpu.memory_space<vmem>>, %arg10: memref<256x256xbf16, #tpu.memory_space<vmem>>, %arg11: memref<1x256xf32, #tpu.memory_space<vmem>>, %arg12: memref<2x128xf32, #tpu.memory_space<vmem>>, %arg13: memref<2x128xf32, #tpu.memory_space<vmem>>, %arg14: memref<2x256xf32, #tpu.memory_space<vmem>>) attributes {dimension_semantics = [#tpu.dimension_semantics<arbitrary>], iteration_bounds = array<i64: 1>, scalar_prefetch = 0 : i64, scratch_operands = 1 : i64, tpu.core_type = #tpu.core_type<tc>, window_params = [{transform_indices = @transform_0, window_bounds = array<i64: 2, 1024>}, {transform_indices = @transform_1, window_bounds = array<i64: 1024, 256>}, {pipeline_mode = #tpu.pipeline_mode<synchronous>, transform_indices = @transform_2, window_bounds = array<i64: 2, 4>}, {pipeline_mode = #tpu.pipeline_mode<synchronous>, transform_indices = @transform_3, window_bounds = array<i64: 4, 256>}, {pipeline_mode = #tpu.pipeline_mode<synchronous>, transform_indices = @transform_4, window_bounds = array<i64: 1, 256>}, {pipeline_mode = #tpu.pipeline_mode<synchronous>, transform_indices = @transform_5, window_bounds = array<i64: 256, 256>}, {pipeline_mode = #tpu.pipeline_mode<synchronous>, transform_indices = @transform_6, window_bounds = array<i64: 1, 256>}, {pipeline_mode = #tpu.pipeline_mode<synchronous>, transform_indices = @transform_7, window_bounds = array<i64: 256, 256>}, {pipeline_mode = #tpu.pipeline_mode<synchronous>, transform_indices = @transform_8, window_bounds = array<i64: 1, 256>}, {pipeline_mode = #tpu.pipeline_mode<synchronous>, transform_indices = @transform_9, window_bounds = array<i64: 256, 256>}, {pipeline_mode = #tpu.pipeline_mode<synchronous>, transform_indices = @transform_10, window_bounds = array<i64: 1, 256>}, {pipeline_mode = #tpu.pipeline_mode<synchronous>, transform_indices = @transform_11, window_bounds = array<i64: 2, 128>}, {pipeline_mode = #tpu.pipeline_mode<synchronous>, transform_indices = @transform_12, window_bounds = array<i64: 2, 128>}]} {
    %c0_i32 = arith.constant 0 : i32
    %0 = arith.cmpi eq, %arg0, %c0_i32 : i32
    %1 = arith.extui %0 : i1 to i32
    %c0_i32_0 = arith.constant 0 : i32
    %2 = arith.cmpi ne, %1, %c0_i32_0 : i32
    scf.if %2 {
      %cst_10 = arith.constant 0.000000e+00 : f32
      %12 = vector.broadcast %cst_10 : f32 to vector<2x256xf32>
      %c0_11 = arith.constant 0 : index
      %c0_12 = arith.constant 0 : index
      %13 = vector.load %arg14[%c0_11, %c0_12] : memref<2x256xf32, #tpu.memory_space<vmem>>, vector<2x256xf32>
      tpu.vector_store %arg14[%c0_11, %c0_12], %12 {strides = array<i32>} : memref<2x256xf32, #tpu.memory_space<vmem>>, vector<2x256xf32>,
    } else {
    }
    %c0 = arith.constant 0 : index
    %c0_1 = arith.constant 0 : index
    %3 = vector.load %arg14[%c0, %c0_1] : memref<2x256xf32, #tpu.memory_space<vmem>>, vector<2x256xf32>
    %c0_2 = arith.constant 0 : index
    %c0_3 = arith.constant 0 : index
    %4 = vector.load %arg1[%c0_2, %c0_3] : memref<2x1024xbf16, #tpu.memory_space<vmem>>, vector<2x1024xbf16>
    %c0_4 = arith.constant 0 : index
    %c0_5 = arith.constant 0 : index
    %5 = vector.load %arg2[%c0_4, %c0_5] : memref<1024x256xbf16, #tpu.memory_space<vmem>>, vector<1024x256xbf16>
    %cst = arith.constant dense<0.000000e+00> : vector<2x256xf32>
    %6 = tpu.matmul %4, %5, %cst {dimension_numbers = #tpu.dot_dimension_numbers<[1], [0], [0], [1], [0, 0, 1, 1], [], []>} : vector<2x1024xbf16>, vector<1024x256xbf16>, vector<2x256xf32> -> vector<2x256xf32>
    %7 = arith.addf %3, %6 : vector<2x256xf32>
    %c0_6 = arith.constant 0 : index
    %c0_7 = arith.constant 0 : index
    %8 = vector.load %arg14[%c0_6, %c0_7] : memref<2x256xf32, #tpu.memory_space<vmem>>, vector<2x256xf32>
    tpu.vector_store %arg14[%c0_6, %c0_7], %7 {strides = array<i32>} : memref<2x256xf32, #tpu.memory_space<vmem>>, vector<2x256xf32>,
    %c0_i32_8 = arith.constant 0 : i32
    %9 = arith.cmpi eq, %arg0, %c0_i32_8 : i32
    %10 = arith.extui %9 : i1 to i32
    %c0_i32_9 = arith.constant 0 : i32
    %11 = arith.cmpi ne, %10, %c0_i32_9 : i32
    scf.if %11 {
      %c0_10 = arith.constant 0 : index
      %c0_11 = arith.constant 0 : index
      %12 = vector.load %arg14[%c0_10, %c0_11] : memref<2x256xf32, #tpu.memory_space<vmem>>, vector<2x256xf32>
      %c0_12 = arith.constant 0 : index
      %c0_13 = arith.constant 0 : index
      %13 = vector.load %arg3[%c0_12, %c0_13] : memref<2x4xbf16, #tpu.memory_space<vmem>>, vector<2x4xbf16>
      %c0_14 = arith.constant 0 : index
      %c0_15 = arith.constant 0 : index
      %14 = vector.load %arg4[%c0_14, %c0_15] : memref<4x256xbf16, #tpu.memory_space<vmem>>, vector<4x256xbf16>
      %cst_16 = arith.constant dense<0.000000e+00> : vector<2x256xf32>
      %15 = tpu.matmul %13, %14, %cst_16 {dimension_numbers = #tpu.dot_dimension_numbers<[1], [0], [0], [1], [0, 0, 1, 1], [], []>} : vector<2x4xbf16>, vector<4x256xbf16>, vector<2x256xf32> -> vector<2x256xf32>
      %16 = arith.addf %12, %15 : vector<2x256xf32>
      %c0_17 = arith.constant 0 : index
      %c0_18 = arith.constant 0 : index
      %17 = vector.load %arg5[%c0_17, %c0_18] : memref<1x256xf32, #tpu.memory_space<vmem>>, vector<1x256xf32>
      %18 = vector.broadcast %17 : vector<1x256xf32> to vector<2x256xf32>
      %19 = arith.addf %16, %18 : vector<2x256xf32>
      %cst_19 = arith.constant 0.000000e+00 : f32
      %20 = vector.broadcast %cst_19 : f32 to vector<2x256xf32>
      %21 = arith.cmpf ogt, %19, %20 : vector<2x256xf32>
      %cst_20 = arith.constant 0.00999999977 : f32
      %22 = vector.broadcast %cst_20 : f32 to vector<2x256xf32>
      %23 = arith.mulf %22, %19 : vector<2x256xf32>
      %24 = arith.select %21, %19, %23 : vector<2x256xi1>, vector<2x256xf32>
      %25 = arith.truncf %24 : vector<2x256xf32> to vector<2x256xbf16>
      %c0_21 = arith.constant 0 : index
      %c0_22 = arith.constant 0 : index
      %26 = vector.load %arg6[%c0_21, %c0_22] : memref<256x256xbf16, #tpu.memory_space<vmem>>, vector<256x256xbf16>
      %cst_23 = arith.constant dense<0.000000e+00> : vector<2x256xf32>
      %27 = tpu.matmul %25, %26, %cst_23 {dimension_numbers = #tpu.dot_dimension_numbers<[1], [0], [0], [1], [0, 0, 1, 1], [], []>} : vector<2x256xbf16>, vector<256x256xbf16>, vector<2x256xf32> -> vector<2x256xf32>
      %c0_24 = arith.constant 0 : index
      %c0_25 = arith.constant 0 : index
      %28 = vector.load %arg7[%c0_24, %c0_25] : memref<1x256xf32, #tpu.memory_space<vmem>>, vector<1x256xf32>
      %29 = vector.broadcast %28 : vector<1x256xf32> to vector<2x256xf32>
      %30 = arith.addf %27, %29 : vector<2x256xf32>
      %cst_26 = arith.constant 0.000000e+00 : f32
      %31 = vector.broadcast %cst_26 : f32 to vector<2x256xf32>
      %32 = arith.cmpf ogt, %30, %31 : vector<2x256xf32>
      %cst_27 = arith.constant 0.00999999977 : f32
      %33 = vector.broadcast %cst_27 : f32 to vector<2x256xf32>
      %34 = arith.mulf %33, %30 : vector<2x256xf32>
      %35 = arith.select %32, %30, %34 : vector<2x256xi1>, vector<2x256xf32>
      %36 = arith.truncf %35 : vector<2x256xf32> to vector<2x256xbf16>
      %c0_28 = arith.constant 0 : index
      %c0_29 = arith.constant 0 : index
      %37 = vector.load %arg8[%c0_28, %c0_29] : memref<256x256xbf16, #tpu.memory_space<vmem>>, vector<256x256xbf16>
      %cst_30 = arith.constant dense<0.000000e+00> : vector<2x256xf32>
      %38 = tpu.matmul %36, %37, %cst_30 {dimension_numbers = #tpu.dot_dimension_numbers<[1], [0], [0], [1], [0, 0, 1, 1], [], []>} : vector<2x256xbf16>, vector<256x256xbf16>, vector<2x256xf32> -> vector<2x256xf32>
      %c0_31 = arith.constant 0 : index
      %c0_32 = arith.constant 0 : index
      %39 = vector.load %arg9[%c0_31, %c0_32] : memref<1x256xf32, #tpu.memory_space<vmem>>, vector<1x256xf32>
      %40 = vector.broadcast %39 : vector<1x256xf32> to vector<2x256xf32>
      %41 = arith.addf %38, %40 : vector<2x256xf32>
      %cst_33 = arith.constant 0.000000e+00 : f32
      %42 = vector.broadcast %cst_33 : f32 to vector<2x256xf32>
      %43 = arith.maximumf %41, %42 : vector<2x256xf32>
      %44 = arith.truncf %43 : vector<2x256xf32> to vector<2x256xbf16>
      %c0_34 = arith.constant 0 : index
      %c0_35 = arith.constant 0 : index
      %45 = vector.load %arg10[%c0_34, %c0_35] : memref<256x256xbf16, #tpu.memory_space<vmem>>, vector<256x256xbf16>
      %cst_36 = arith.constant dense<0.000000e+00> : vector<2x256xf32>
      %46 = tpu.matmul %44, %45, %cst_36 {dimension_numbers = #tpu.dot_dimension_numbers<[1], [0], [0], [1], [0, 0, 1, 1], [], []>} : vector<2x256xbf16>, vector<256x256xbf16>, vector<2x256xf32> -> vector<2x256xf32>
      %c0_37 = arith.constant 0 : index
      %c0_38 = arith.constant 0 : index
      %47 = vector.load %arg11[%c0_37, %c0_38] : memref<1x256xf32, #tpu.memory_space<vmem>>, vector<1x256xf32>
      %48 = vector.broadcast %47 : vector<1x256xf32> to vector<2x256xf32>
      %49 = arith.addf %46, %48 : vector<2x256xf32>
      %50 = vector.extract_strided_slice %49 {offsets = [0, 0], sizes = [2, 128], strides = [1, 1]} : vector<2x256xf32> to vector<2x128xf32>
      %51 = vector.extract_strided_slice %49 {offsets = [0, 128], sizes = [2, 128], strides = [1, 1]} : vector<2x256xf32> to vector<2x128xf32>
      %cst_39 = arith.constant -1.000000e+01 : f32
      %cst_40 = arith.constant 2.000000e+00 : f32
      %52 = vector.broadcast %cst_39 : f32 to vector<2x128xf32>
      %53 = arith.maximumf %52, %51 : vector<2x128xf32>
      %54 = vector.broadcast %cst_40 : f32 to vector<2x128xf32>
      %55 = arith.minimumf %54, %53 : vector<2x128xf32>
      %c0_41 = arith.constant 0 : index
      %c0_42 = arith.constant 0 : index
      %56 = vector.load %arg12[%c0_41, %c0_42] : memref<2x128xf32, #tpu.memory_space<vmem>>, vector<2x128xf32>
      %57 = math.exp %55 : vector<2x128xf32>
      %58 = arith.mulf %56, %57 : vector<2x128xf32>
      %59 = arith.addf %50, %58 : vector<2x128xf32>
      %60 = math.tanh %59 : vector<2x128xf32>
      %c0_43 = arith.constant 0 : index
      %c0_44 = arith.constant 0 : index
      %61 = vector.load %arg13[%c0_43, %c0_44] : memref<2x128xf32, #tpu.memory_space<vmem>>, vector<2x128xf32>
      tpu.vector_store %arg13[%c0_43, %c0_44], %60 {strides = array<i32>} : memref<2x128xf32, #tpu.memory_space<vmem>>, vector<2x128xf32>,
    } else {
    }
    return
  }
  func.func @transform_0(%arg0: i32) -> (i32, i32) {
    %c0_i32 = arith.constant 0 : i32
    %c0_i32_0 = arith.constant 0 : i32
    return %c0_i32, %arg0 : i32, i32
  }
  func.func @transform_1(%arg0: i32) -> (i32, i32) {
    %c0_i32 = arith.constant 0 : i32
    %c0_i32_0 = arith.constant 0 : i32
    return %arg0, %c0_i32 : i32, i32
  }
  func.func @transform_2(%arg0: i32) -> (i32, i32) {
    %c0_i32 = arith.constant 0 : i32
    %c0_i32_0 = arith.constant 0 : i32
    %c0_i32_1 = arith.constant 0 : i32
    return %c0_i32, %c0_i32_0 : i32, i32
  }
  func.func @transform_3(%arg0: i32) -> (i32, i32) {
    %c0_i32 = arith.constant 0 : i32
    %c0_i32_0 = arith.constant 0 : i32
    %c0_i32_1 = arith.constant 0 : i32
    return %c0_i32, %c0_i32_0 : i32, i32
  }
  func.func @transform_4(%arg0: i32) -> (i32, i32) {
    %c0_i32 = arith.constant 0 : i32
    %c0_i32_0 = arith.constant 0 : i32
    %c0_i32_1 = arith.constant 0 : i32
    return %c0_i32, %c0_i32_0 : i32, i32
  }
  func.func @transform_5(%arg0: i32) -> (i32, i32) {
    %c0_i32 = arith.constant 0 : i32
    %c0_i32_0 = arith.constant 0 : i32
    %c0_i32_1 = arith.constant 0 : i32
    return %c0_i32, %c0_i32_0 : i32, i32
  }
  func.func @transform_6(%arg0: i32) -> (i32, i32) {
    %c0_i32 = arith.constant 0 : i32
    %c0_i32_0 = arith.constant 0 : i32
    %c0_i32_1 = arith.constant 0 : i32
    return %c0_i32, %c0_i32_0 : i32, i32
  }
  func.func @transform_7(%arg0: i32) -> (i32, i32) {
    %c0_i32 = arith.constant 0 : i32
    %c0_i32_0 = arith.constant 0 : i32
    %c0_i32_1 = arith.constant 0 : i32
    return %c0_i32, %c0_i32_0 : i32, i32
  }
  func.func @transform_8(%arg0: i32) -> (i32, i32) {
    %c0_i32 = arith.constant 0 : i32
    %c0_i32_0 = arith.constant 0 : i32
    %c0_i32_1 = arith.constant 0 : i32
    return %c0_i32, %c0_i32_0 : i32, i32
  }
  func.func @transform_9(%arg0: i32) -> (i32, i32) {
    %c0_i32 = arith.constant 0 : i32
    %c0_i32_0 = arith.constant 0 : i32
    %c0_i32_1 = arith.constant 0 : i32
    return %c0_i32, %c0_i32_0 : i32, i32
  }
  func.func @transform_10(%arg0: i32) -> (i32, i32) {
    %c0_i32 = arith.constant 0 : i32
    %c0_i32_0 = arith.constant 0 : i32
    %c0_i32_1 = arith.constant 0 : i32
    return %c0_i32, %c0_i32_0 : i32, i32
  }
  func.func @transform_11(%arg0: i32) -> (i32, i32) {
    %c0_i32 = arith.constant 0 : i32
    %c0_i32_0 = arith.constant 0 : i32
    %c0_i32_1 = arith.constant 0 : i32
    return %c0_i32, %c0_i32_0 : i32, i32
  }
  func.func @transform_12(%arg0: i32) -> (i32, i32) {
    %c0_i32 = arith.constant 0 : i32
    %c0_i32_0 = arith.constant 0 : i32
    %c0_i32_1 = arith.constant 0 : i32
    return %c0_i32, %c0_i32_0 : i32, i32
  }
}

</mosaic_0001>

<llo_original>
// kernel: forward.4
$region0: #{forward.4}
  #allocation0 [shape = 'u32[]', space=smem, size = 0x4, offset = 0x4, fixed_abs, tag = 'smem constant byte address 0x4 - core index']
  #allocation1 [shape = 'u32[144,128]{1,0:T(1,128)}', space=vmem, size = 0x12000, scoped, tag = 'internal scratch']
  %s0 = inlined_call_operand.vmem [shape: bf16[2,9,9,12], index: 0, kind: input, shape index: {}]
  %s1 = inlined_call_operand.vmem [shape: bf16[2,2,12,64], index: 1, kind: input, shape index: {}]
  %s2 = inlined_call_operand.vmem [shape: f32[1,64], index: 2, kind: input, shape index: {}]
  %s3 = inlined_call_operand.vmem [shape: bf16[2,8,8,64], index: 3, kind: output, shape index: {}]
  %s4 = sld [smem:[#allocation0]]
  $region45: #{forward.4} parent=0
    _
  %s6 = ssub.s32 1, %s4
  %s7 = scalar_select 0, %s6, %s4
  loop: start=0, step=1, limit=18
  $region2: #{forward.4} parent=0 // loop_pre_header
    _
  $region3: #{forward.4} parent=0 // loop_header
    %s9 = sphi 0, %s13
    %p10 = scmp.ge.s32.totalorder %s9, 18
    %s16 = sphi 0, %s28
    %s17 = sphi 0, %s24
    %s18 = sphi 0, %s16
    %s19 = sphi 0, %s17
    %s20 = sphi 0, %s18
    %s21 = sphi 0, %s19
    %s31 = sphi 0, %s33
    %s34 = sphi 0, %s31
    %s35 = sphi 0, %s34
    %s51 = sphi 0, %s35
    %s55 = sphi 0, %s55
    %s57 = sphi 0, %s55
    %s58 = sphi 0, %s57
    %s72 = sphi 0, %s58
    %s76 = sphi 0, %s76
    %s78 = sphi 0, %s76
    %s79 = sphi 0, %s78
    %s93 = sphi 0, %s79
    %s101 = sphi 0, %s103
    %s104 = sphi 0, %s101
    %s105 = sphi 0, %s104
    %s121 = sphi 0, %s105
  $region4: #{forward.4} parent=0 // loop_header_branch
    %12 = sbr.rel (%p10) target = $region8
  $region5: #{forward.4} parent=0 // loop_body
    %s14 = ssub.s32 %s9, 1
    %s15 = ssub.s32 %s9, 2
    %s22 = sadd.s32 1, %s17
    %p23 = scmp.ge.s32.totalorder %s22, 8
    %s24 = scalar_select %p23, 0, %s22
    %s25 = sadd.s32 1, %s16
    %s26 = scalar_select %p23, %s25, %s16
    %p27 = scmp.ge.s32.totalorder %s26, 2
    %s28 = scalar_select %p27, 0, %s26
    %s29 = ssub.s32 %s16, %s28
    %p30 = scmp.eq.s32.totalorder %s29, 0
    %s32 = sadd.s32 %s31, 1
    %s33 = scalar_select %p30, %s31, %s32
    %p36 = pneg %p30
    %p37 = scmp.eq.s32.totalorder %s9, 15
    %p38 = por %p36, %p37
    %p39 = scmp.ne.s32.totalorder %s31, %s34
    %p40 = scmp.eq.s32.totalorder %s9, 0
    %p41 = por %p39, %p40
    %p42 = scmp.ne.s32.totalorder %s31, %s34
    %p43 = scmp.eq.s32.totalorder %s14, 15
    %p44 = por %p42, %p43
    %p45 = scmp.ne.s32.totalorder %s34, %s35
    %p46 = scmp.eq.s32.totalorder %s14, 0
    %p47 = por %p45, %p46
    %p48 = scmp.ne.s32.totalorder %s34, %s35
    %p49 = scmp.eq.s32.totalorder %s15, 15
    %p50 = por %p48, %p49
    %p52 = scmp.ne.s32.totalorder %s35, %s51
    %p53 = scmp.eq.s32.totalorder %s15, 0
    %p54 = por %p52, %p53
    %s56 = sadd.s32 %s55, 1
    %p59 = scmp.eq.s32.totalorder %s9, 15
    %p60 = scmp.ne.s32.totalorder %s55, %s57
    %p61 = scmp.eq.s32.totalorder %s9, 0
    %p62 = por %p60, %p61
    %p63 = scmp.ne.s32.totalorder %s55, %s57
    %p64 = scmp.eq.s32.totalorder %s14, 15
    %p65 = por %p63, %p64
    %p66 = scmp.ne.s32.totalorder %s57, %s58
    %p67 = scmp.eq.s32.totalorder %s14, 0
    %p68 = por %p66, %p67
    %p69 = scmp.ne.s32.totalorder %s57, %s58
    %p70 = scmp.eq.s32.totalorder %s15, 15
    %p71 = por %p69, %p70
    %p73 = scmp.ne.s32.totalorder %s58, %s72
    %p74 = scmp.eq.s32.totalorder %s15, 0
    %p75 = por %p73, %p74
    %s77 = sadd.s32 %s76, 1
    %p80 = scmp.eq.s32.totalorder %s9, 15
    %p81 = scmp.ne.s32.totalorder %s76, %s78
    %p82 = scmp.eq.s32.totalorder %s9, 0
    %p83 = por %p81, %p82
    %p84 = scmp.ne.s32.totalorder %s76, %s78
    %p85 = scmp.eq.s32.totalorder %s14, 15
    %p86 = por %p84, %p85
    %p87 = scmp.ne.s32.totalorder %s78, %s79
    %p88 = scmp.eq.s32.totalorder %s14, 0
    %p89 = por %p87, %p88
    %p90 = scmp.ne.s32.totalorder %s78, %s79
    %p91 = scmp.eq.s32.totalorder %s15, 15
    %p92 = por %p90, %p91
    %p94 = scmp.ne.s32.totalorder %s79, %s93
    %p95 = scmp.eq.s32.totalorder %s15, 0
    %p96 = por %p94, %p95
    %s97 = ssub.s32 %s16, %s28
    %s98 = ssub.s32 %s17, %s24
    %s99 = sor.u32 %s97, %s98
    %p100 = scmp.eq.s32.totalorder %s99, 0
    %s102 = sadd.s32 %s101, 1
    %s103 = scalar_select %p100, %s101, %s102
    %p106 = pneg %p100
    %p107 = scmp.eq.s32.totalorder %s9, 15
    %p108 = por %p106, %p107
    %p109 = scmp.ne.s32.totalorder %s101, %s104
    %p110 = scmp.eq.s32.totalorder %s9, 0
    %p111 = por %p109, %p110
    %p112 = scmp.ne.s32.totalorder %s101, %s104
    %p113 = scmp.eq.s32.totalorder %s14, 15
    %p114 = por %p112, %p113
    %p115 = scmp.ne.s32.totalorder %s104, %s105
    %p116 = scmp.eq.s32.totalorder %s14, 0
    %p117 = por %p115, %p116
    %p118 = scmp.ne.s32.totalorder %s104, %s105
    %p119 = scmp.eq.s32.totalorder %s15, 15
    %p120 = por %p118, %p119
    %p122 = scmp.ne.s32.totalorder %s105, %s121
    %p123 = scmp.eq.s32.totalorder %s15, 0
    %p124 = por %p122, %p123
    %p125 = scmp.le.s32.totalorder 1, %s9
    %p126 = scmp.lt.s32.totalorder %s9, 17
    %p127 = pnand %p125, %p126
    %p128 = pneg %p127
    // Predicated region
    $region9: #{forward.4} parent=5 // pred_check
      _
    $region10: #{forward.4} parent=5 // pred_check_branch
      %130 = sbr.rel (%p127) target = $region12
    $region11: #{forward.4} parent=5 // pred_region
      %s131 = ssub.s32 %s9, 1
      // Predicated region
      $region13: #{forward.4} parent=11 // pred_check
        %p132 = pneg %p68
      $region14: #{forward.4} parent=11 // pred_check_branch
        %134 = sbr.rel (%p132) target = $region16
      $region15: #{forward.4} parent=11 // pred_region
        _
      $region16: #{forward.4} parent=11 // pred_fallthru
        _
      // Predicated region
      $region17: #{forward.4} parent=11 // pred_check
        %p135 = pneg %p89
      $region18: #{forward.4} parent=11 // pred_check_branch
        %137 = sbr.rel (%p135) target = $region20
      $region19: #{forward.4} parent=11 // pred_region
        _
      $region20: #{forward.4} parent=11 // pred_fallthru
        _
    $region12: #{forward.4} parent=5 // pred_fallthru
      _
    %p138 = scmp.lt.s32.totalorder %s9, 16
    // Predicated region
    $region21: #{forward.4} parent=5 // pred_check
      %p139 = pneg %p138
    $region22: #{forward.4} parent=5 // pred_check_branch
      %141 = sbr.rel (%p139) target = $region24
    $region23: #{forward.4} parent=5 // pred_region
      // Predicated region
      $region25: #{forward.4} parent=23 // pred_check
        %p142 = pneg %p41
      $region26: #{forward.4} parent=23 // pred_check_branch
        %144 = sbr.rel (%p142) target = $region28
      $region27: #{forward.4} parent=23 // pred_region
        %p145 = scmp.lt.s32.totalorder %s16, 1
        %s146 = scalar_select %p145, %s16, 1
        %s147 = smul.addr %s146, 18
        %s148 = smul.addr %s147, 4
        %s149 = scalar_lea.vmem %s0, %s148
      $region28: #{forward.4} parent=23 // pred_fallthru
        _
    $region24: #{forward.4} parent=5 // pred_fallthru
      _
    %p150 = scmp.le.s32.totalorder 1, %s9
    %p151 = scmp.lt.s32.totalorder %s9, 17
    %p152 = pnand %p150, %p151
    %p153 = pneg %p152
    // Predicated region
    $region29: #{forward.4} parent=5 // pred_check
      _
    $region30: #{forward.4} parent=5 // pred_check_branch
      %155 = sbr.rel (%p152) target = $region32
    $region31: #{forward.4} parent=5 // pred_region
      %s156 = ssub.s32 %s9, 1
      %p157 = scmp.lt.s32.totalorder %s18, 1
      %s158 = scalar_select %p157, %s18, 1
      %s159 = smul.addr %s158, 18
      %s160 = smul.addr %s159, 4
      %s161 = scalar_lea.vmem %s0, %s160
      %p162 = pneg %p47
      %p163 = pneg %p44
      %p164 = pneg %p68
      %p165 = pneg %p65
      %p166 = pneg %p89
      %p167 = pneg %p86
      %p168 = pneg %p117
      %p169 = pneg %p114
      %p170 = scmp.lt.s32.totalorder %s18, 1
      %s171 = scalar_select %p170, %s18, 1
      %p172 = scmp.lt.s32.totalorder %s19, 7
      %s173 = scalar_select %p172, %s19, 7
      %s174 = smul.addr %s171, 8
      %s175 = sadd.s32 %s173, %s174
      %s176 = smul.addr %s175, 4
      %s177 = scalar_lea.vmem %s3, %s176
      %p178 = scmp.lt.s32.totalorder %s18, 1
      %s179 = scalar_select %p178, %s18, 1
      %s180 = smul.addr %s179, 18
      %s181 = smul.addr %s180, 4
      %s182 = scalar_lea.vmem %s0, %s181
      %p183 = scmp.lt.s32.totalorder %s18, 1
      %s184 = scalar_select %p183, %s18, 1
      %p185 = scmp.lt.s32.totalorder %s19, 7
      %s186 = scalar_select %p185, %s19, 7
      %s187 = smul.addr %s184, 8
      %s188 = sadd.s32 %s186, %s187
      %s189 = smul.addr %s188, 4
      %s190 = scalar_lea.vmem %s3, %s189
      %s192 = smul.u32 %s19, 2
      %s193 = smul.addr %s192, 4
      %s194 = scalar_lea.vmem %s182, %s193
      %v195 = vld [vmem:[%s194] sm:$0xf]
      %v196 = vld [vmem:[%s1] sm:$0xf]
      %v197 = vld [vmem:[%s1 + $0x4] sm:$0x3]
      %v198 = vld [vmem:[%s194 + $0x4] sm:$0x1]
      %s199 = scalar_lea.vmem %s1, 8
      %v200 = vld [vmem:[%s199] sm:$0xf]
      %v201 = vld [vmem:[%s199 + $0x4] sm:$0x3]
      %v204 = vunpack.c.l.b16 %v195
      %v205 = vunpack.c.l.b16 %v198
      %v206 = vpack.c.b16 %v205, %v204
      %v208 = vshrl.u32 %v206, 16
      %v210 = vshll.u32 %v206, 16
      %v212 = vrot.slane %v210, 1
      %v213 = vor.u32 %v208, %v212
      %v216 = vunpack.c.l.b16 %v200
      %v217 = vunpack.c.l.b16 %v201
      %v218 = vpack.c.b16 %v217, %v216
      %vm219 = vcmask 97280
      %v221 = vsel %vm219, %v213, 0
      %vm223 = vcmask 1045504
      %v225 = vsel %vm223, %v218, 0
      %227 = vmatprep.subr.bf16.mxu0 0
      %228 = vmatpush1.bf16.msra.mxu0 %v225
      %229 = vmatprep.subr.bf16.mxu0 0
      %230 = vmatpush1.bf16.msra.mxu0 0
      %231 = vmatprep.subr.bf16.mxu0 0
      %232 = vmatpush1.bf16.msra.mxu0 0
      %233 = vmatprep.subr.bf16.mxu0 0
      %234 = vmatpush1.bf16.msra.mxu0 0
      %235 = vmatprep.subr.bf16.mxu0 0
      %236 = vmatpush1.bf16.msra.mxu0 0
      %237 = vmatprep.subr.bf16.mxu0 0
      %238 = vmatpush1.bf16.msra.mxu0 0
      %239 = vmatprep.subr.bf16.mxu0 0
      %240 = vmatpush1.bf16.msra.mxu0 0
      %241 = vmatprep.subr.bf16.mxu0 0
      %242 = vmatpush1.bf16.msra.mxu0 0
      %243 = vmatprep.subr.bf16.mxu0 0
      %244 = vmatpush1.bf16.msra.mxu0 0
      %245 = vmatprep.subr.bf16.mxu0 0
      %246 = vmatpush1.bf16.msra.mxu0 0
      %247 = vmatprep.subr.bf16.mxu0 0
      %248 = vmatpush1.bf16.msra.mxu0 0
      %249 = vmatprep.subr.bf16.mxu0 0
      %250 = vmatpush1.bf16.msra.mxu0 0
      %251 = vmatprep.subr.bf16.mxu0 0
      %252 = vmatpush1.bf16.msra.mxu0 0
      %253 = vmatprep.subr.bf16.mxu0 0
      %254 = vmatpush1.bf16.msra.mxu0 0
      %255 = vmatprep.subr.bf16.mxu0 0
      %256 = vmatpush1.bf16.msra.mxu0 0
      %257 = vmatprep.subr.bf16.mxu0 0
      %258 = vmatpush1.bf16.msra.mxu0 0
      %259 = vmatprep.mubr.bf16.mxu0 0
      %260 = vmatmul.mubr.bf16.gmra.mrb[0].mxu0 %v221
      %v261 = vpop.f32.mrb[0].mxu0
      %v262 = vadd.f32 0.0, %v261
      %v263 = vpop.f32.mrb[0].mxu0
      %v264 = vpop.f32.mrb[0].mxu0
      %v265 = vpop.f32.mrb[0].mxu0
      %266 = vdwg.mxu0
      %v269 = vunpack.c.l.b16 %v196
      %v270 = vunpack.c.l.b16 %v197
      %v271 = vpack.c.b16 %v270, %v269
      %v273 = vsel %vm219, %v195, 0
      %v276 = vsel %vm223, %v271, 0
      %278 = vmatprep.subr.bf16.mxu0 0
      %279 = vmatpush1.bf16.msra.mxu0 %v276
      %280 = vmatprep.subr.bf16.mxu0 0
      %281 = vmatpush1.bf16.msra.mxu0 0
      %282 = vmatprep.subr.bf16.mxu0 0
      %283 = vmatpush1.bf16.msra.mxu0 0
      %284 = vmatprep.subr.bf16.mxu0 0
      %285 = vmatpush1.bf16.msra.mxu0 0
      %286 = vmatprep.subr.bf16.mxu0 0
      %287 = vmatpush1.bf16.msra.mxu0 0
      %288 = vmatprep.subr.bf16.mxu0 0
      %289 = vmatpush1.bf16.msra.mxu0 0
      %290 = vmatprep.subr.bf16.mxu0 0
      %291 = vmatpush1.bf16.msra.mxu0 0
      %292 = vmatprep.subr.bf16.mxu0 0
      %293 = vmatpush1.bf16.msra.mxu0 0
      %294 = vmatprep.subr.bf16.mxu0 0
      %295 = vmatpush1.bf16.msra.mxu0 0
      %296 = vmatprep.subr.bf16.mxu0 0
      %297 = vmatpush1.bf16.msra.mxu0 0
      %298 = vmatprep.subr.bf16.mxu0 0
      %299 = vmatpush1.bf16.msra.mxu0 0
      %300 = vmatprep.subr.bf16.mxu0 0
      %301 = vmatpush1.bf16.msra.mxu0 0
      %302 = vmatprep.subr.bf16.mxu0 0
      %303 = vmatpush1.bf16.msra.mxu0 0
      %304 = vmatprep.subr.bf16.mxu0 0
      %305 = vmatpush1.bf16.msra.mxu0 0
      %306 = vmatprep.subr.bf16.mxu0 0
      %307 = vmatpush1.bf16.msra.mxu0 0
      %308 = vmatprep.subr.bf16.mxu0 0
      %309 = vmatpush1.bf16.msra.mxu0 0
      %310 = vmatprep.mubr.bf16.mxu0 0
      %311 = vmatmul.mubr.bf16.gmra.mrb[0].mxu0 %v273
      %v312 = vpop.f32.mrb[0].mxu0
      %v313 = vadd.f32 %v262, %v312
      %v314 = vpop.f32.mrb[0].mxu0
      %v315 = vpop.f32.mrb[0].mxu0
      %v316 = vpop.f32.mrb[0].mxu0
      %317 = vdwg.mxu0
      %s318 = sadd.s32 %s19, 1
      %s319 = smul.u32 %s318, 2
      %s320 = smul.addr %s319, 4
      %s321 = scalar_lea.vmem %s182, %s320
      %v322 = vld [vmem:[%s321] sm:$0xf]
      %s323 = scalar_lea.vmem %s1, 16
      %v324 = vld [vmem:[%s323] sm:$0xf]
      %v325 = vld [vmem:[%s323 + $0x4] sm:$0x3]
      %v328 = vunpack.c.l.b16 %v324
      %v329 = vunpack.c.l.b16 %v325
      %v330 = vpack.c.b16 %v329, %v328
      %v332 = vsel %vm219, %v322, 0
      %v335 = vsel %vm223, %v330, 0
      %337 = vmatprep.subr.bf16.mxu0 0
      %338 = vmatpush1.bf16.msra.mxu0 %v335
      %339 = vmatprep.subr.bf16.mxu0 0
      %340 = vmatpush1.bf16.msra.mxu0 0
      %341 = vmatprep.subr.bf16.mxu0 0
      %342 = vmatpush1.bf16.msra.mxu0 0
      %343 = vmatprep.subr.bf16.mxu0 0
      %344 = vmatpush1.bf16.msra.mxu0 0
      %345 = vmatprep.subr.bf16.mxu0 0
      %346 = vmatpush1.bf16.msra.mxu0 0
      %347 = vmatprep.subr.bf16.mxu0 0
      %348 = vmatpush1.bf16.msra.mxu0 0
      %349 = vmatprep.subr.bf16.mxu0 0
      %350 = vmatpush1.bf16.msra.mxu0 0
      %351 = vmatprep.subr.bf16.mxu0 0
      %352 = vmatpush1.bf16.msra.mxu0 0
      %353 = vmatprep.subr.bf16.mxu0 0
      %354 = vmatpush1.bf16.msra.mxu0 0
      %355 = vmatprep.subr.bf16.mxu0 0
      %356 = vmatpush1.bf16.msra.mxu0 0
      %357 = vmatprep.subr.bf16.mxu0 0
      %358 = vmatpush1.bf16.msra.mxu0 0
      %359 = vmatprep.subr.bf16.mxu0 0
      %360 = vmatpush1.bf16.msra.mxu0 0
      %361 = vmatprep.subr.bf16.mxu0 0
      %362 = vmatpush1.bf16.msra.mxu0 0
      %363 = vmatprep.subr.bf16.mxu0 0
      %364 = vmatpush1.bf16.msra.mxu0 0
      %365 = vmatprep.subr.bf16.mxu0 0
      %366 = vmatpush1.bf16.msra.mxu0 0
      %367 = vmatprep.subr.bf16.mxu0 0
      %368 = vmatpush1.bf16.msra.mxu0 0
      %369 = vmatprep.mubr.bf16.mxu0 0
      %370 = vmatmul.mubr.bf16.gmra.mrb[0].mxu0 %v332
      %v371 = vpop.f32.mrb[0].mxu0
      %v372 = vadd.f32 0.0, %v371
      %v373 = vpop.f32.mrb[0].mxu0
      %v374 = vpop.f32.mrb[0].mxu0
      %v375 = vpop.f32.mrb[0].mxu0
      %376 = vdwg.mxu0
      %v377 = vadd.f32 %v313, %v372
      %v378 = vld [vmem:[%s321] sm:$0xf]
      %v379 = vld [vmem:[%s321 + $0x4] sm:$0x1]
      %s380 = scalar_lea.vmem %s1, 24
      %v381 = vld [vmem:[%s380] sm:$0xf]
      %v382 = vld [vmem:[%s380 + $0x4] sm:$0x3]
      %v385 = vunpack.c.l.b16 %v378
      %v386 = vunpack.c.l.b16 %v379
      %v387 = vpack.c.b16 %v386, %v385
      %v389 = vshrl.u32 %v387, 16
      %v391 = vshll.u32 %v387, 16
      %v393 = vrot.slane %v391, 1
      %v394 = vor.u32 %v389, %v393
      %v397 = vunpack.c.l.b16 %v381
      %v398 = vunpack.c.l.b16 %v382
      %v399 = vpack.c.b16 %v398, %v397
      %v401 = vsel %vm219, %v394, 0
      %v404 = vsel %vm223, %v399, 0
      %406 = vmatprep.subr.bf16.mxu0 0
      %407 = vmatpush1.bf16.msra.mxu0 %v404
      %408 = vmatprep.subr.bf16.mxu0 0
      %409 = vmatpush1.bf16.msra.mxu0 0
      %410 = vmatprep.subr.bf16.mxu0 0
      %411 = vmatpush1.bf16.msra.mxu0 0
      %412 = vmatprep.subr.bf16.mxu0 0
      %413 = vmatpush1.bf16.msra.mxu0 0
      %414 = vmatprep.subr.bf16.mxu0 0
      %415 = vmatpush1.bf16.msra.mxu0 0
      %416 = vmatprep.subr.bf16.mxu0 0
      %417 = vmatpush1.bf16.msra.mxu0 0
      %418 = vmatprep.subr.bf16.mxu0 0
      %419 = vmatpush1.bf16.msra.mxu0 0
      %420 = vmatprep.subr.bf16.mxu0 0
      %421 = vmatpush1.bf16.msra.mxu0 0
      %422 = vmatprep.subr.bf16.mxu0 0
      %423 = vmatpush1.bf16.msra.mxu0 0
      %424 = vmatprep.subr.bf16.mxu0 0
      %425 = vmatpush1.bf16.msra.mxu0 0
      %426 = vmatprep.subr.bf16.mxu0 0
      %427 = vmatpush1.bf16.msra.mxu0 0
      %428 = vmatprep.subr.bf16.mxu0 0
      %429 = vmatpush1.bf16.msra.mxu0 0
      %430 = vmatprep.subr.bf16.mxu0 0
      %431 = vmatpush1.bf16.msra.mxu0 0
      %432 = vmatprep.subr.bf16.mxu0 0
      %433 = vmatpush1.bf16.msra.mxu0 0
      %434 = vmatprep.subr.bf16.mxu0 0
      %435 = vmatpush1.bf16.msra.mxu0 0
      %436 = vmatprep.subr.bf16.mxu0 0
      %437 = vmatpush1.bf16.msra.mxu0 0
      %438 = vmatprep.mubr.bf16.mxu0 0
      %439 = vmatmul.mubr.bf16.gmra.mrb[0].mxu0 %v401
      %v440 = vpop.f32.mrb[0].mxu0
      %v441 = vadd.f32 0.0, %v440
      %v442 = vpop.f32.mrb[0].mxu0
      %v443 = vpop.f32.mrb[0].mxu0
      %v444 = vpop.f32.mrb[0].mxu0
      %445 = vdwg.mxu0
      %v446 = vadd.f32 %v377, %v441
      %v447 = vld [vmem:[%s2] sm:$0x1]
      %v449 = vlaneseq
      %v450 = vshrl.u32 %v449, 7
      %v451 = vsub.s32 0, %v450
      %v452 = vrot.slane %v447, %v451
      %v454 = vadd.f32 %v446, %v452
      %vm455 = vcmp.gt.f32.partialorder %v454, 0.0
      %v456 = vmul.f32 %v454, 0.01
      %v457 = vsel %vm455, %v454, %v456
      %v458 = vpack.c.bf16 %v457, %v457
      %vm459 = vcmask 519168
      %460 = vst.msk [vmem:[%s190] sm:$0xf] %vm459, %v458
      %p461 = scmp.lt.s32.totalorder %s18, 1
      %s462 = scalar_select %p461, %s18, 1
      %p463 = scmp.lt.s32.totalorder %s19, 7
      %s464 = scalar_select %p463, %s19, 7
      %s465 = smul.addr %s462, 8
      %s466 = sadd.s32 %s464, %s465
      %s467 = smul.addr %s466, 4
      %s468 = scalar_lea.vmem %s3, %s467
      // Predicated region
      $region33: #{forward.4} parent=31 // pred_check
        %p469 = pneg %p114
      $region34: #{forward.4} parent=31 // pred_check_branch
        %471 = sbr.rel (%p469) target = $region36
      $region35: #{forward.4} parent=31 // pred_region
        _
      $region36: #{forward.4} parent=31 // pred_fallthru
        _
    $region32: #{forward.4} parent=5 // pred_fallthru
      _
    %p472 = scmp.le.s32.totalorder 2, %s9
    // Predicated region
    $region37: #{forward.4} parent=5 // pred_check
      %p473 = pneg %p472
    $region38: #{forward.4} parent=5 // pred_check_branch
      %475 = sbr.rel (%p473) target = $region40
    $region39: #{forward.4} parent=5 // pred_region
      %s476 = ssub.s32 %s9, 2
      // Predicated region
      $region41: #{forward.4} parent=39 // pred_check
        %p477 = pneg %p120
      $region42: #{forward.4} parent=39 // pred_check_branch
        %479 = sbr.rel (%p477) target = $region44
      $region43: #{forward.4} parent=39 // pred_region
        %p480 = scmp.lt.s32.totalorder %s20, 1
        %s481 = scalar_select %p480, %s20, 1
        %p482 = scmp.lt.s32.totalorder %s21, 7
        %s483 = scalar_select %p482, %s21, 7
        %s484 = smul.addr %s481, 8
        %s485 = sadd.s32 %s483, %s484
        %s486 = smul.addr %s485, 4
        %s487 = scalar_lea.vmem %s3, %s486
      $region44: #{forward.4} parent=39 // pred_fallthru
        _
    $region40: #{forward.4} parent=5 // pred_fallthru
      _
  $region6: #{forward.4} parent=0 // loop_footer
    %s13 = sadd.s32 1, %s9
  $region7: #{forward.4} parent=0 // loop_footer_branch
    %8 = sbr.rel target = $region3
  $region8: #{forward.4} parent=0 // loop_exit
    _

// kernel: forward.5
$region0: #{forward.5}
  #allocation0 [shape = 'u32[]', space=smem, size = 0x4, offset = 0x4, fixed_abs, tag = 'smem constant byte address 0x4 - core index']
  #allocation1 [shape = 'u32[144,128]{1,0:T(1,128)}', space=vmem, size = 0x12000, scoped, tag = 'internal scratch']
  %s0 = inlined_call_operand.vmem [shape: bf16[2,5,5,256], index: 0, kind: input, shape index: {}]
  %s1 = inlined_call_operand.vmem [shape: bf16[2,2,256,128], index: 1, kind: input, shape index: {}]
  %s2 = inlined_call_operand.vmem [shape: f32[1,128], index: 2, kind: input, shape index: {}]
  %s3 = inlined_call_operand.vmem [shape: bf16[2,4,4,128], index: 3, kind: output, shape index: {}]
  %s4 = sld [smem:[#allocation0]]
  $region45: #{forward.5} parent=0
    _
  %s6 = ssub.s32 1, %s4
  %s7 = scalar_select 0, %s6, %s4
  loop: start=0, step=1, limit=10
  $region2: #{forward.5} parent=0 // loop_pre_header
    _
  $region3: #{forward.5} parent=0 // loop_header
    %s9 = sphi 0, %s13
    %p10 = scmp.ge.s32.totalorder %s9, 10
    %s16 = sphi 0, %s28
    %s17 = sphi 0, %s24
    %s18 = sphi 0, %s16
    %s19 = sphi 0, %s17
    %s20 = sphi 0, %s18
    %s21 = sphi 0, %s19
    %s31 = sphi 0, %s33
    %s34 = sphi 0, %s31
    %s35 = sphi 0, %s34
    %s51 = sphi 0, %s35
    %s55 = sphi 0, %s55
    %s57 = sphi 0, %s55
    %s58 = sphi 0, %s57
    %s72 = sphi 0, %s58
    %s76 = sphi 0, %s76
    %s78 = sphi 0, %s76
    %s79 = sphi 0, %s78
    %s93 = sphi 0, %s79
    %s101 = sphi 0, %s103
    %s104 = sphi 0, %s101
    %s105 = sphi 0, %s104
    %s121 = sphi 0, %s105
  $region4: #{forward.5} parent=0 // loop_header_branch
    %12 = sbr.rel (%p10) target = $region8
  $region5: #{forward.5} parent=0 // loop_body
    %s14 = ssub.s32 %s9, 1
    %s15 = ssub.s32 %s9, 2
    %s22 = sadd.s32 1, %s17
    %p23 = scmp.ge.s32.totalorder %s22, 4
    %s24 = scalar_select %p23, 0, %s22
    %s25 = sadd.s32 1, %s16
    %s26 = scalar_select %p23, %s25, %s16
    %p27 = scmp.ge.s32.totalorder %s26, 2
    %s28 = scalar_select %p27, 0, %s26
    %s29 = ssub.s32 %s16, %s28
    %p30 = scmp.eq.s32.totalorder %s29, 0
    %s32 = sadd.s32 %s31, 1
    %s33 = scalar_select %p30, %s31, %s32
    %p36 = pneg %p30
    %p37 = scmp.eq.s32.totalorder %s9, 7
    %p38 = por %p36, %p37
    %p39 = scmp.ne.s32.totalorder %s31, %s34
    %p40 = scmp.eq.s32.totalorder %s9, 0
    %p41 = por %p39, %p40
    %p42 = scmp.ne.s32.totalorder %s31, %s34
    %p43 = scmp.eq.s32.totalorder %s14, 7
    %p44 = por %p42, %p43
    %p45 = scmp.ne.s32.totalorder %s34, %s35
    %p46 = scmp.eq.s32.totalorder %s14, 0
    %p47 = por %p45, %p46
    %p48 = scmp.ne.s32.totalorder %s34, %s35
    %p49 = scmp.eq.s32.totalorder %s15, 7
    %p50 = por %p48, %p49
    %p52 = scmp.ne.s32.totalorder %s35, %s51
    %p53 = scmp.eq.s32.totalorder %s15, 0
    %p54 = por %p52, %p53
    %s56 = sadd.s32 %s55, 1
    %p59 = scmp.eq.s32.totalorder %s9, 7
    %p60 = scmp.ne.s32.totalorder %s55, %s57
    %p61 = scmp.eq.s32.totalorder %s9, 0
    %p62 = por %p60, %p61
    %p63 = scmp.ne.s32.totalorder %s55, %s57
    %p64 = scmp.eq.s32.totalorder %s14, 7
    %p65 = por %p63, %p64
    %p66 = scmp.ne.s32.totalorder %s57, %s58
    %p67 = scmp.eq.s32.totalorder %s14, 0
    %p68 = por %p66, %p67
    %p69 = scmp.ne.s32.totalorder %s57, %s58
    %p70 = scmp.eq.s32.totalorder %s15, 7
    %p71 = por %p69, %p70
    %p73 = scmp.ne.s32.totalorder %s58, %s72
    %p74 = scmp.eq.s32.totalorder %s15, 0
    %p75 = por %p73, %p74
    %s77 = sadd.s32 %s76, 1
    %p80 = scmp.eq.s32.totalorder %s9, 7
    %p81 = scmp.ne.s32.totalorder %s76, %s78
    %p82 = scmp.eq.s32.totalorder %s9, 0
    %p83 = por %p81, %p82
    %p84 = scmp.ne.s32.totalorder %s76, %s78
    %p85 = scmp.eq.s32.totalorder %s14, 7
    %p86 = por %p84, %p85
    %p87 = scmp.ne.s32.totalorder %s78, %s79
    %p88 = scmp.eq.s32.totalorder %s14, 0
    %p89 = por %p87, %p88
    %p90 = scmp.ne.s32.totalorder %s78, %s79
    %p91 = scmp.eq.s32.totalorder %s15, 7
    %p92 = por %p90, %p91
    %p94 = scmp.ne.s32.totalorder %s79, %s93
    %p95 = scmp.eq.s32.totalorder %s15, 0
    %p96 = por %p94, %p95
    %s97 = ssub.s32 %s16, %s28
    %s98 = ssub.s32 %s17, %s24
    %s99 = sor.u32 %s97, %s98
    %p100 = scmp.eq.s32.totalorder %s99, 0
    %s102 = sadd.s32 %s101, 1
    %s103 = scalar_select %p100, %s101, %s102
    %p106 = pneg %p100
    %p107 = scmp.eq.s32.totalorder %s9, 7
    %p108 = por %p106, %p107
    %p109 = scmp.ne.s32.totalorder %s101, %s104
    %p110 = scmp.eq.s32.totalorder %s9, 0
    %p111 = por %p109, %p110
    %p112 = scmp.ne.s32.totalorder %s101, %s104
    %p113 = scmp.eq.s32.totalorder %s14, 7
    %p114 = por %p112, %p113
    %p115 = scmp.ne.s32.totalorder %s104, %s105
    %p116 = scmp.eq.s32.totalorder %s14, 0
    %p117 = por %p115, %p116
    %p118 = scmp.ne.s32.totalorder %s104, %s105
    %p119 = scmp.eq.s32.totalorder %s15, 7
    %p120 = por %p118, %p119
    %p122 = scmp.ne.s32.totalorder %s105, %s121
    %p123 = scmp.eq.s32.totalorder %s15, 0
    %p124 = por %p122, %p123
    %p125 = scmp.le.s32.totalorder 1, %s9
    %p126 = scmp.lt.s32.totalorder %s9, 9
    %p127 = pnand %p125, %p126
    %p128 = pneg %p127
    // Predicated region
    $region9: #{forward.5} parent=5 // pred_check
      _
    $region10: #{forward.5} parent=5 // pred_check_branch
      %130 = sbr.rel (%p127) target = $region12
    $region11: #{forward.5} parent=5 // pred_region
      %s131 = ssub.s32 %s9, 1
      // Predicated region
      $region13: #{forward.5} parent=11 // pred_check
        %p132 = pneg %p68
      $region14: #{forward.5} parent=11 // pred_check_branch
        %134 = sbr.rel (%p132) target = $region16
      $region15: #{forward.5} parent=11 // pred_region
        _
      $region16: #{forward.5} parent=11 // pred_fallthru
        _
      // Predicated region
      $region17: #{forward.5} parent=11 // pred_check
        %p135 = pneg %p89
      $region18: #{forward.5} parent=11 // pred_check_branch
        %137 = sbr.rel (%p135) target = $region20
      $region19: #{forward.5} parent=11 // pred_region
        _
      $region20: #{forward.5} parent=11 // pred_fallthru
        _
    $region12: #{forward.5} parent=5 // pred_fallthru
      _
    %p138 = scmp.lt.s32.totalorder %s9, 8
    // Predicated region
    $region21: #{forward.5} parent=5 // pred_check
      %p139 = pneg %p138
    $region22: #{forward.5} parent=5 // pred_check_branch
      %141 = sbr.rel (%p139) target = $region24
    $region23: #{forward.5} parent=5 // pred_region
      // Predicated region
      $region25: #{forward.5} parent=23 // pred_check
        %p142 = pneg %p41
      $region26: #{forward.5} parent=23 // pred_check_branch
        %144 = sbr.rel (%p142) target = $region28
      $region27: #{forward.5} parent=23 // pred_region
        %p145 = scmp.lt.s32.totalorder %s16, 1
        %s146 = scalar_select %p145, %s16, 1
        %s147 = smul.addr %s146, 10
        %s148 = smul.addr %s147, 4
        %s149 = scalar_lea.vmem %s0, %s148
      $region28: #{forward.5} parent=23 // pred_fallthru
        _
    $region24: #{forward.5} parent=5 // pred_fallthru
      _
    %p150 = scmp.le.s32.totalorder 1, %s9
    %p151 = scmp.lt.s32.totalorder %s9, 9
    %p152 = pnand %p150, %p151
    %p153 = pneg %p152
    // Predicated region
    $region29: #{forward.5} parent=5 // pred_check
      _
    $region30: #{forward.5} parent=5 // pred_check_branch
      %155 = sbr.rel (%p152) target = $region32
    $region31: #{forward.5} parent=5 // pred_region
      %s156 = ssub.s32 %s9, 1
      %p157 = scmp.lt.s32.totalorder %s18, 1
      %s158 = scalar_select %p157, %s18, 1
      %s159 = smul.addr %s158, 10
      %s160 = smul.addr %s159, 4
      %s161 = scalar_lea.vmem %s0, %s160
      %p162 = pneg %p47
      %p163 = pneg %p44
      %p164 = pneg %p68
      %p165 = pneg %p65
      %p166 = pneg %p89
      %p167 = pneg %p86
      %p168 = pneg %p117
      %p169 = pneg %p114
      %p170 = scmp.lt.s32.totalorder %s18, 1
      %s171 = scalar_select %p170, %s18, 1
      %p172 = scmp.lt.s32.totalorder %s19, 3
      %s173 = scalar_select %p172, %s19, 3
      %s174 = smul.addr %s171, 4
      %s175 = sadd.s32 %s173, %s174
      %s176 = smul.addr %s175, 2
      %s177 = scalar_lea.vmem %s3, %s176
      %p178 = scmp.lt.s32.totalorder %s18, 1
      %s179 = scalar_select %p178, %s18, 1
      %s180 = smul.addr %s179, 10
      %s181 = smul.addr %s180, 4
      %s182 = scalar_lea.vmem %s0, %s181
      %p183 = scmp.lt.s32.totalorder %s18, 1
      %s184 = scalar_select %p183, %s18, 1
      %p185 = scmp.lt.s32.totalorder %s19, 3
      %s186 = scalar_select %p185, %s19, 3
      %s187 = smul.addr %s184, 4
      %s188 = sadd.s32 %s186, %s187
      %s189 = smul.addr %s188, 2
      %s190 = scalar_lea.vmem %s3, %s189
      %s192 = smul.u32 %s19, 2
      %s193 = smul.addr %s192, 4
      %s194 = scalar_lea.vmem %s182, %s193
      %v195 = vld [vmem:[%s194] sm:$0x33]
      %v196 = vld [vmem:[%s1] sm:$0xf]
      %v197 = vld [vmem:[%s1 + $0x4] sm:$0xf]
      %v198 = vld [vmem:[%s1 + $0x8] sm:$0xf]
      %v199 = vld [vmem:[%s1 + $0xc] sm:$0xf]
      %v200 = vld [vmem:[%s1 + $0x10] sm:$0xf]
      %v201 = vld [vmem:[%s1 + $0x14] sm:$0xf]
      %v202 = vld [vmem:[%s1 + $0x18] sm:$0xf]
      %v203 = vld [vmem:[%s1 + $0x1c] sm:$0xf]
      %v204 = vld [vmem:[%s1 + $0x20] sm:$0xf]
      %v205 = vld [vmem:[%s1 + $0x24] sm:$0xf]
      %v206 = vld [vmem:[%s1 + $0x28] sm:$0xf]
      %v207 = vld [vmem:[%s1 + $0x2c] sm:$0xf]
      %v208 = vld [vmem:[%s1 + $0x30] sm:$0xf]
      %v209 = vld [vmem:[%s1 + $0x34] sm:$0xf]
      %v210 = vld [vmem:[%s1 + $0x38] sm:$0xf]
      %v211 = vld [vmem:[%s1 + $0x3c] sm:$0xf]
      %v212 = vld [vmem:[%s1 + $0x40] sm:$0xf]
      %v213 = vld [vmem:[%s1 + $0x44] sm:$0xf]
      %v214 = vld [vmem:[%s1 + $0x48] sm:$0xf]
      %v215 = vld [vmem:[%s1 + $0x4c] sm:$0xf]
      %v216 = vld [vmem:[%s1 + $0x50] sm:$0xf]
      %v217 = vld [vmem:[%s1 + $0x54] sm:$0xf]
      %v218 = vld [vmem:[%s1 + $0x58] sm:$0xf]
      %v219 = vld [vmem:[%s1 + $0x5c] sm:$0xf]
      %v220 = vld [vmem:[%s1 + $0x60] sm:$0xf]
      %v221 = vld [vmem:[%s1 + $0x64] sm:$0xf]
      %v222 = vld [vmem:[%s1 + $0x68] sm:$0xf]
      %v223 = vld [vmem:[%s1 + $0x6c] sm:$0xf]
      %v224 = vld [vmem:[%s1 + $0x70] sm:$0xf]
      %v225 = vld [vmem:[%s1 + $0x74] sm:$0xf]
      %v226 = vld [vmem:[%s1 + $0x78] sm:$0xf]
      %v227 = vld [vmem:[%s1 + $0x7c] sm:$0xf]
      %v228 = vld [vmem:[%s194] sm:$0x77]
      %s229 = scalar_lea.vmem %s1, 128
      %v230 = vld [vmem:[%s229] sm:$0xf]
      %v231 = vld [vmem:[%s229 + $0x4] sm:$0xf]
      %v232 = vld [vmem:[%s229 + $0x8] sm:$0xf]
      %v233 = vld [vmem:[%s229 + $0xc] sm:$0xf]
      %v234 = vld [vmem:[%s229 + $0x10] sm:$0xf]
      %v235 = vld [vmem:[%s229 + $0x14] sm:$0xf]
      %v236 = vld [vmem:[%s229 + $0x18] sm:$0xf]
      %v237 = vld [vmem:[%s229 + $0x1c] sm:$0xf]
      %v238 = vld [vmem:[%s229 + $0x20] sm:$0xf]
      %v239 = vld [vmem:[%s229 + $0x24] sm:$0xf]
      %v240 = vld [vmem:[%s229 + $0x28] sm:$0xf]
      %v241 = vld [vmem:[%s229 + $0x2c] sm:$0xf]
      %v242 = vld [vmem:[%s229 + $0x30] sm:$0xf]
      %v243 = vld [vmem:[%s229 + $0x34] sm:$0xf]
      %v244 = vld [vmem:[%s229 + $0x38] sm:$0xf]
      %v245 = vld [vmem:[%s229 + $0x3c] sm:$0xf]
      %v246 = vld [vmem:[%s229 + $0x40] sm:$0xf]
      %v247 = vld [vmem:[%s229 + $0x44] sm:$0xf]
      %v248 = vld [vmem:[%s229 + $0x48] sm:$0xf]
      %v249 = vld [vmem:[%s229 + $0x4c] sm:$0xf]
      %v250 = vld [vmem:[%s229 + $0x50] sm:$0xf]
      %v251 = vld [vmem:[%s229 + $0x54] sm:$0xf]
      %v252 = vld [vmem:[%s229 + $0x58] sm:$0xf]
      %v253 = vld [vmem:[%s229 + $0x5c] sm:$0xf]
      %v254 = vld [vmem:[%s229 + $0x60] sm:$0xf]
      %v255 = vld [vmem:[%s229 + $0x64] sm:$0xf]
      %v256 = vld [vmem:[%s229 + $0x68] sm:$0xf]
      %v257 = vld [vmem:[%s229 + $0x6c] sm:$0xf]
      %v258 = vld [vmem:[%s229 + $0x70] sm:$0xf]
      %v259 = vld [vmem:[%s229 + $0x74] sm:$0xf]
      %v260 = vld [vmem:[%s229 + $0x78] sm:$0xf]
      %v261 = vld [vmem:[%s229 + $0x7c] sm:$0xf]
      %v263 = vunpack.c.l.b16 %v228
      %v264 = vunpack.c.h.b16 %v228
      %v265 = vpack.c.b16 %v263, %v263
      %v266 = vpack.c.b16 %v264, %v264
      %v268 = vshrl.u32 %v265, 16
      %v270 = vshll.u32 %v265, 16
      %v272 = vrot.slane %v270, 1
      %v273 = vor.u32 %v268, %v272
      %v275 = vshrl.u32 %v266, 16
      %v277 = vshll.u32 %v266, 16
      %v279 = vrot.slane %v277, 1
      %v280 = vor.u32 %v275, %v279
      %v315 = vunpack.c.l.b16 %v230
      %v316 = vunpack.c.l.b16 %v231
      %v317 = vunpack.c.l.b16 %v232
      %v318 = vunpack.c.l.b16 %v233
      %v319 = vunpack.c.l.b16 %v234
      %v320 = vunpack.c.l.b16 %v235
      %v321 = vunpack.c.l.b16 %v236
      %v322 = vunpack.c.l.b16 %v237
      %v323 = vunpack.c.l.b16 %v238
      %v324 = vunpack.c.l.b16 %v239
      %v325 = vunpack.c.l.b16 %v240
      %v326 = vunpack.c.l.b16 %v241
      %v327 = vunpack.c.l.b16 %v242
      %v328 = vunpack.c.l.b16 %v243
      %v329 = vunpack.c.l.b16 %v244
      %v330 = vunpack.c.l.b16 %v245
      %v331 = vunpack.c.l.b16 %v246
      %v332 = vunpack.c.l.b16 %v247
      %v333 = vunpack.c.l.b16 %v248
      %v334 = vunpack.c.l.b16 %v249
      %v335 = vunpack.c.l.b16 %v250
      %v336 = vunpack.c.l.b16 %v251
      %v337 = vunpack.c.l.b16 %v252
      %v338 = vunpack.c.l.b16 %v253
      %v339 = vunpack.c.l.b16 %v254
      %v340 = vunpack.c.l.b16 %v255
      %v341 = vunpack.c.l.b16 %v256
      %v342 = vunpack.c.l.b16 %v257
      %v343 = vunpack.c.l.b16 %v258
      %v344 = vunpack.c.l.b16 %v259
      %v345 = vunpack.c.l.b16 %v260
      %v346 = vunpack.c.l.b16 %v261
      %v347 = vpack.c.b16 %v316, %v315
      %v348 = vpack.c.b16 %v318, %v317
      %v349 = vpack.c.b16 %v320, %v319
      %v350 = vpack.c.b16 %v322, %v321
      %v351 = vpack.c.b16 %v324, %v323
      %v352 = vpack.c.b16 %v326, %v325
      %v353 = vpack.c.b16 %v328, %v327
      %v354 = vpack.c.b16 %v330, %v329
      %v355 = vpack.c.b16 %v332, %v331
      %v356 = vpack.c.b16 %v334, %v333
      %v357 = vpack.c.b16 %v336, %v335
      %v358 = vpack.c.b16 %v338, %v337
      %v359 = vpack.c.b16 %v340, %v339
      %v360 = vpack.c.b16 %v342, %v341
      %v361 = vpack.c.b16 %v344, %v343
      %v362 = vpack.c.b16 %v346, %v345
      %379 = vmatprep.subr.bf16.mxu0 0
      %380 = vmatpush1.bf16.msra.mxu0 %v347
      %381 = vmatprep.subr.bf16.mxu0 0
      %382 = vmatpush1.bf16.msra.mxu0 %v348
      %383 = vmatprep.subr.bf16.mxu0 0
      %384 = vmatpush1.bf16.msra.mxu0 %v349
      %385 = vmatprep.subr.bf16.mxu0 0
      %386 = vmatpush1.bf16.msra.mxu0 %v350
      %387 = vmatprep.subr.bf16.mxu0 0
      %388 = vmatpush1.bf16.msra.mxu0 %v351
      %389 = vmatprep.subr.bf16.mxu0 0
      %390 = vmatpush1.bf16.msra.mxu0 %v352
      %391 = vmatprep.subr.bf16.mxu0 0
      %392 = vmatpush1.bf16.msra.mxu0 %v353
      %393 = vmatprep.subr.bf16.mxu0 0
      %394 = vmatpush1.bf16.msra.mxu0 %v354
      %395 = vmatprep.subr.bf16.mxu0 0
      %396 = vmatpush1.bf16.msra.mxu0 %v355
      %397 = vmatprep.subr.bf16.mxu0 0
      %398 = vmatpush1.bf16.msra.mxu0 %v356
      %399 = vmatprep.subr.bf16.mxu0 0
      %400 = vmatpush1.bf16.msra.mxu0 %v357
      %401 = vmatprep.subr.bf16.mxu0 0
      %402 = vmatpush1.bf16.msra.mxu0 %v358
      %403 = vmatprep.subr.bf16.mxu0 0
      %404 = vmatpush1.bf16.msra.mxu0 %v359
      %405 = vmatprep.subr.bf16.mxu0 0
      %406 = vmatpush1.bf16.msra.mxu0 %v360
      %407 = vmatprep.subr.bf16.mxu0 0
      %408 = vmatpush1.bf16.msra.mxu0 %v361
      %409 = vmatprep.subr.bf16.mxu0 0
      %410 = vmatpush1.bf16.msra.mxu0 %v362
      %411 = vmatprep.mubr.bf16.mxu0 %v280
      %412 = vmatmul.mubr.bf16.gmra.mrb[0].mxu0 %v273
      %v413 = vpop.f32.mrb[0].mxu0
      %v414 = vadd.f32 0.0, %v413
      %v415 = vpop.f32.mrb[0].mxu0
      %v416 = vpop.f32.mrb[0].mxu0
      %v417 = vpop.f32.mrb[0].mxu0
      %418 = vdwg.mxu0
      %v420 = vunpack.c.l.b16 %v195
      %v421 = vunpack.c.h.b16 %v195
      %v422 = vpack.c.b16 %v420, %v420
      %v423 = vpack.c.b16 %v421, %v421
      %v458 = vunpack.c.l.b16 %v196
      %v459 = vunpack.c.l.b16 %v197
      %v460 = vunpack.c.l.b16 %v198
      %v461 = vunpack.c.l.b16 %v199
      %v462 = vunpack.c.l.b16 %v200
      %v463 = vunpack.c.l.b16 %v201
      %v464 = vunpack.c.l.b16 %v202
      %v465 = vunpack.c.l.b16 %v203
      %v466 = vunpack.c.l.b16 %v204
      %v467 = vunpack.c.l.b16 %v205
      %v468 = vunpack.c.l.b16 %v206
      %v469 = vunpack.c.l.b16 %v207
      %v470 = vunpack.c.l.b16 %v208
      %v471 = vunpack.c.l.b16 %v209
      %v472 = vunpack.c.l.b16 %v210
      %v473 = vunpack.c.l.b16 %v211
      %v474 = vunpack.c.l.b16 %v212
      %v475 = vunpack.c.l.b16 %v213
      %v476 = vunpack.c.l.b16 %v214
      %v477 = vunpack.c.l.b16 %v215
      %v478 = vunpack.c.l.b16 %v216
      %v479 = vunpack.c.l.b16 %v217
      %v480 = vunpack.c.l.b16 %v218
      %v481 = vunpack.c.l.b16 %v219
      %v482 = vunpack.c.l.b16 %v220
      %v483 = vunpack.c.l.b16 %v221
      %v484 = vunpack.c.l.b16 %v222
      %v485 = vunpack.c.l.b16 %v223
      %v486 = vunpack.c.l.b16 %v224
      %v487 = vunpack.c.l.b16 %v225
      %v488 = vunpack.c.l.b16 %v226
      %v489 = vunpack.c.l.b16 %v227
      %v490 = vpack.c.b16 %v459, %v458
      %v491 = vpack.c.b16 %v461, %v460
      %v492 = vpack.c.b16 %v463, %v462
      %v493 = vpack.c.b16 %v465, %v464
      %v494 = vpack.c.b16 %v467, %v466
      %v495 = vpack.c.b16 %v469, %v468
      %v496 = vpack.c.b16 %v471, %v470
      %v497 = vpack.c.b16 %v473, %v472
      %v498 = vpack.c.b16 %v475, %v474
      %v499 = vpack.c.b16 %v477, %v476
      %v500 = vpack.c.b16 %v479, %v478
      %v501 = vpack.c.b16 %v481, %v480
      %v502 = vpack.c.b16 %v483, %v482
      %v503 = vpack.c.b16 %v485, %v484
      %v504 = vpack.c.b16 %v487, %v486
      %v505 = vpack.c.b16 %v489, %v488
      %522 = vmatprep.subr.bf16.mxu0 0
      %523 = vmatpush1.bf16.msra.mxu0 %v490
      %524 = vmatprep.subr.bf16.mxu0 0
      %525 = vmatpush1.bf16.msra.mxu0 %v491
      %526 = vmatprep.subr.bf16.mxu0 0
      %527 = vmatpush1.bf16.msra.mxu0 %v492
      %528 = vmatprep.subr.bf16.mxu0 0
      %529 = vmatpush1.bf16.msra.mxu0 %v493
      %530 = vmatprep.subr.bf16.mxu0 0
      %531 = vmatpush1.bf16.msra.mxu0 %v494
      %532 = vmatprep.subr.bf16.mxu0 0
      %533 = vmatpush1.bf16.msra.mxu0 %v495
      %534 = vmatprep.subr.bf16.mxu0 0
      %535 = vmatpush1.bf16.msra.mxu0 %v496
      %536 = vmatprep.subr.bf16.mxu0 0
      %537 = vmatpush1.bf16.msra.mxu0 %v497
      %538 = vmatprep.subr.bf16.mxu0 0
      %539 = vmatpush1.bf16.msra.mxu0 %v498
      %540 = vmatprep.subr.bf16.mxu0 0
      %541 = vmatpush1.bf16.msra.mxu0 %v499
      %542 = vmatprep.subr.bf16.mxu0 0
      %543 = vmatpush1.bf16.msra.mxu0 %v500
      %544 = vmatprep.subr.bf16.mxu0 0
      %545 = vmatpush1.bf16.msra.mxu0 %v501
      %546 = vmatprep.subr.bf16.mxu0 0
      %547 = vmatpush1.bf16.msra.mxu0 %v502
      %548 = vmatprep.subr.bf16.mxu0 0
      %549 = vmatpush1.bf16.msra.mxu0 %v503
      %550 = vmatprep.subr.bf16.mxu0 0
      %551 = vmatpush1.bf16.msra.mxu0 %v504
      %552 = vmatprep.subr.bf16.mxu0 0
      %553 = vmatpush1.bf16.msra.mxu0 %v505
      %554 = vmatprep.mubr.bf16.mxu0 %v423
      %555 = vmatmul.mubr.bf16.gmra.mrb[0].mxu0 %v422
      %v556 = vpop.f32.mrb[0].mxu0
      %v557 = vadd.f32 %v414, %v556
      %v558 = vpop.f32.mrb[0].mxu0
      %v559 = vpop.f32.mrb[0].mxu0
      %v560 = vpop.f32.mrb[0].mxu0
      %561 = vdwg.mxu0
      %s562 = sadd.s32 %s19, 1
      %s563 = smul.u32 %s562, 2
      %s564 = smul.addr %s563, 4
      %s565 = scalar_lea.vmem %s182, %s564
      %v566 = vld [vmem:[%s565] sm:$0x33]
      %s567 = scalar_lea.vmem %s1, 256
      %v568 = vld [vmem:[%s567] sm:$0xf]
      %v569 = vld [vmem:[%s567 + $0x4] sm:$0xf]
      %v570 = vld [vmem:[%s567 + $0x8] sm:$0xf]
      %v571 = vld [vmem:[%s567 + $0xc] sm:$0xf]
      %v572 = vld [vmem:[%s567 + $0x10] sm:$0xf]
      %v573 = vld [vmem:[%s567 + $0x14] sm:$0xf]
      %v574 = vld [vmem:[%s567 + $0x18] sm:$0xf]
      %v575 = vld [vmem:[%s567 + $0x1c] sm:$0xf]
      %v576 = vld [vmem:[%s567 + $0x20] sm:$0xf]
      %v577 = vld [vmem:[%s567 + $0x24] sm:$0xf]
      %v578 = vld [vmem:[%s567 + $0x28] sm:$0xf]
      %v579 = vld [vmem:[%s567 + $0x2c] sm:$0xf]
      %v580 = vld [vmem:[%s567 + $0x30] sm:$0xf]
      %v581 = vld [vmem:[%s567 + $0x34] sm:$0xf]
      %v582 = vld [vmem:[%s567 + $0x38] sm:$0xf]
      %v583 = vld [vmem:[%s567 + $0x3c] sm:$0xf]
      %v584 = vld [vmem:[%s567 + $0x40] sm:$0xf]
      %v585 = vld [vmem:[%s567 + $0x44] sm:$0xf]
      %v586 = vld [vmem:[%s567 + $0x48] sm:$0xf]
      %v587 = vld [vmem:[%s567 + $0x4c] sm:$0xf]
      %v588 = vld [vmem:[%s567 + $0x50] sm:$0xf]
      %v589 = vld [vmem:[%s567 + $0x54] sm:$0xf]
      %v590 = vld [vmem:[%s567 + $0x58] sm:$0xf]
      %v591 = vld [vmem:[%s567 + $0x5c] sm:$0xf]
      %v592 = vld [vmem:[%s567 + $0x60] sm:$0xf]
      %v593 = vld [vmem:[%s567 + $0x64] sm:$0xf]
      %v594 = vld [vmem:[%s567 + $0x68] sm:$0xf]
      %v595 = vld [vmem:[%s567 + $0x6c] sm:$0xf]
      %v596 = vld [vmem:[%s567 + $0x70] sm:$0xf]
      %v597 = vld [vmem:[%s567 + $0x74] sm:$0xf]
      %v598 = vld [vmem:[%s567 + $0x78] sm:$0xf]
      %v599 = vld [vmem:[%s567 + $0x7c] sm:$0xf]
      %v601 = vunpack.c.l.b16 %v566
      %v602 = vunpack.c.h.b16 %v566
      %v603 = vpack.c.b16 %v601, %v601
      %v604 = vpack.c.b16 %v602, %v602
      %v639 = vunpack.c.l.b16 %v568
      %v640 = vunpack.c.l.b16 %v569
      %v641 = vunpack.c.l.b16 %v570
      %v642 = vunpack.c.l.b16 %v571
      %v643 = vunpack.c.l.b16 %v572
      %v644 = vunpack.c.l.b16 %v573
      %v645 = vunpack.c.l.b16 %v574
      %v646 = vunpack.c.l.b16 %v575
      %v647 = vunpack.c.l.b16 %v576
      %v648 = vunpack.c.l.b16 %v577
      %v649 = vunpack.c.l.b16 %v578
      %v650 = vunpack.c.l.b16 %v579
      %v651 = vunpack.c.l.b16 %v580
      %v652 = vunpack.c.l.b16 %v581
      %v653 = vunpack.c.l.b16 %v582
      %v654 = vunpack.c.l.b16 %v583
      %v655 = vunpack.c.l.b16 %v584
      %v656 = vunpack.c.l.b16 %v585
      %v657 = vunpack.c.l.b16 %v586
      %v658 = vunpack.c.l.b16 %v587
      %v659 = vunpack.c.l.b16 %v588
      %v660 = vunpack.c.l.b16 %v589
      %v661 = vunpack.c.l.b16 %v590
      %v662 = vunpack.c.l.b16 %v591
      %v663 = vunpack.c.l.b16 %v592
      %v664 = vunpack.c.l.b16 %v593
      %v665 = vunpack.c.l.b16 %v594
      %v666 = vunpack.c.l.b16 %v595
      %v667 = vunpack.c.l.b16 %v596
      %v668 = vunpack.c.l.b16 %v597
      %v669 = vunpack.c.l.b16 %v598
      %v670 = vunpack.c.l.b16 %v599
      %v671 = vpack.c.b16 %v640, %v639
      %v672 = vpack.c.b16 %v642, %v641
      %v673 = vpack.c.b16 %v644, %v643
      %v674 = vpack.c.b16 %v646, %v645
      %v675 = vpack.c.b16 %v648, %v647
      %v676 = vpack.c.b16 %v650, %v649
      %v677 = vpack.c.b16 %v652, %v651
      %v678 = vpack.c.b16 %v654, %v653
      %v679 = vpack.c.b16 %v656, %v655
      %v680 = vpack.c.b16 %v658, %v657
      %v681 = vpack.c.b16 %v660, %v659
      %v682 = vpack.c.b16 %v662, %v661
      %v683 = vpack.c.b16 %v664, %v663
      %v684 = vpack.c.b16 %v666, %v665
      %v685 = vpack.c.b16 %v668, %v667
      %v686 = vpack.c.b16 %v670, %v669
      %703 = vmatprep.subr.bf16.mxu0 0
      %704 = vmatpush1.bf16.msra.mxu0 %v671
      %705 = vmatprep.subr.bf16.mxu0 0
      %706 = vmatpush1.bf16.msra.mxu0 %v672
      %707 = vmatprep.subr.bf16.mxu0 0
      %708 = vmatpush1.bf16.msra.mxu0 %v673
      %709 = vmatprep.subr.bf16.mxu0 0
      %710 = vmatpush1.bf16.msra.mxu0 %v674
      %711 = vmatprep.subr.bf16.mxu0 0
      %712 = vmatpush1.bf16.msra.mxu0 %v675
      %713 = vmatprep.subr.bf16.mxu0 0
      %714 = vmatpush1.bf16.msra.mxu0 %v676
      %715 = vmatprep.subr.bf16.mxu0 0
      %716 = vmatpush1.bf16.msra.mxu0 %v677
      %717 = vmatprep.subr.bf16.mxu0 0
      %718 = vmatpush1.bf16.msra.mxu0 %v678
      %719 = vmatprep.subr.bf16.mxu0 0
      %720 = vmatpush1.bf16.msra.mxu0 %v679
      %721 = vmatprep.subr.bf16.mxu0 0
      %722 = vmatpush1.bf16.msra.mxu0 %v680
      %723 = vmatprep.subr.bf16.mxu0 0
      %724 = vmatpush1.bf16.msra.mxu0 %v681
      %725 = vmatprep.subr.bf16.mxu0 0
      %726 = vmatpush1.bf16.msra.mxu0 %v682
      %727 = vmatprep.subr.bf16.mxu0 0
      %728 = vmatpush1.bf16.msra.mxu0 %v683
      %729 = vmatprep.subr.bf16.mxu0 0
      %730 = vmatpush1.bf16.msra.mxu0 %v684
      %731 = vmatprep.subr.bf16.mxu0 0
      %732 = vmatpush1.bf16.msra.mxu0 %v685
      %733 = vmatprep.subr.bf16.mxu0 0
      %734 = vmatpush1.bf16.msra.mxu0 %v686
      %735 = vmatprep.mubr.bf16.mxu0 %v604
      %736 = vmatmul.mubr.bf16.gmra.mrb[0].mxu0 %v603
      %v737 = vpop.f32.mrb[0].mxu0
      %v738 = vadd.f32 0.0, %v737
      %v739 = vpop.f32.mrb[0].mxu0
      %v740 = vpop.f32.mrb[0].mxu0
      %v741 = vpop.f32.mrb[0].mxu0
      %742 = vdwg.mxu0
      %v743 = vadd.f32 %v557, %v738
      %v744 = vld [vmem:[%s565] sm:$0x77]
      %s745 = scalar_lea.vmem %s1, 384
      %v746 = vld [vmem:[%s745] sm:$0xf]
      %v747 = vld [vmem:[%s745 + $0x4] sm:$0xf]
      %v748 = vld [vmem:[%s745 + $0x8] sm:$0xf]
      %v749 = vld [vmem:[%s745 + $0xc] sm:$0xf]
      %v750 = vld [vmem:[%s745 + $0x10] sm:$0xf]
      %v751 = vld [vmem:[%s745 + $0x14] sm:$0xf]
      %v752 = vld [vmem:[%s745 + $0x18] sm:$0xf]
      %v753 = vld [vmem:[%s745 + $0x1c] sm:$0xf]
      %v754 = vld [vmem:[%s745 + $0x20] sm:$0xf]
      %v755 = vld [vmem:[%s745 + $0x24] sm:$0xf]
      %v756 = vld [vmem:[%s745 + $0x28] sm:$0xf]
      %v757 = vld [vmem:[%s745 + $0x2c] sm:$0xf]
      %v758 = vld [vmem:[%s745 + $0x30] sm:$0xf]
      %v759 = vld [vmem:[%s745 + $0x34] sm:$0xf]
      %v760 = vld [vmem:[%s745 + $0x38] sm:$0xf]
      %v761 = vld [vmem:[%s745 + $0x3c] sm:$0xf]
      %v762 = vld [vmem:[%s745 + $0x40] sm:$0xf]
      %v763 = vld [vmem:[%s745 + $0x44] sm:$0xf]
      %v764 = vld [vmem:[%s745 + $0x48] sm:$0xf]
      %v765 = vld [vmem:[%s745 + $0x4c] sm:$0xf]
      %v766 = vld [vmem:[%s745 + $0x50] sm:$0xf]
      %v767 = vld [vmem:[%s745 + $0x54] sm:$0xf]
      %v768 = vld [vmem:[%s745 + $0x58] sm:$0xf]
      %v769 = vld [vmem:[%s745 + $0x5c] sm:$0xf]
      %v770 = vld [vmem:[%s745 + $0x60] sm:$0xf]
      %v771 = vld [vmem:[%s745 + $0x64] sm:$0xf]
      %v772 = vld [vmem:[%s745 + $0x68] sm:$0xf]
      %v773 = vld [vmem:[%s745 + $0x6c] sm:$0xf]
      %v774 = vld [vmem:[%s745 + $0x70] sm:$0xf]
      %v775 = vld [vmem:[%s745 + $0x74] sm:$0xf]
      %v776 = vld [vmem:[%s745 + $0x78] sm:$0xf]
      %v777 = vld [vmem:[%s745 + $0x7c] sm:$0xf]
      %v779 = vunpack.c.l.b16 %v744
      %v780 = vunpack.c.h.b16 %v744
      %v781 = vpack.c.b16 %v779, %v779
      %v782 = vpack.c.b16 %v780, %v780
      %v784 = vshrl.u32 %v781, 16
      %v786 = vshll.u32 %v781, 16
      %v788 = vrot.slane %v786, 1
      %v789 = vor.u32 %v784, %v788
      %v791 = vshrl.u32 %v782, 16
      %v793 = vshll.u32 %v782, 16
      %v795 = vrot.slane %v793, 1
      %v796 = vor.u32 %v791, %v795
      %v831 = vunpack.c.l.b16 %v746
      %v832 = vunpack.c.l.b16 %v747
      %v833 = vunpack.c.l.b16 %v748
      %v834 = vunpack.c.l.b16 %v749
      %v835 = vunpack.c.l.b16 %v750
      %v836 = vunpack.c.l.b16 %v751
      %v837 = vunpack.c.l.b16 %v752
      %v838 = vunpack.c.l.b16 %v753
      %v839 = vunpack.c.l.b16 %v754
      %v840 = vunpack.c.l.b16 %v755
      %v841 = vunpack.c.l.b16 %v756
      %v842 = vunpack.c.l.b16 %v757
      %v843 = vunpack.c.l.b16 %v758
      %v844 = vunpack.c.l.b16 %v759
      %v845 = vunpack.c.l.b16 %v760
      %v846 = vunpack.c.l.b16 %v761
      %v847 = vunpack.c.l.b16 %v762
      %v848 = vunpack.c.l.b16 %v763
      %v849 = vunpack.c.l.b16 %v764
      %v850 = vunpack.c.l.b16 %v765
      %v851 = vunpack.c.l.b16 %v766
      %v852 = vunpack.c.l.b16 %v767
      %v853 = vunpack.c.l.b16 %v768
      %v854 = vunpack.c.l.b16 %v769
      %v855 = vunpack.c.l.b16 %v770
      %v856 = vunpack.c.l.b16 %v771
      %v857 = vunpack.c.l.b16 %v772
      %v858 = vunpack.c.l.b16 %v773
      %v859 = vunpack.c.l.b16 %v774
      %v860 = vunpack.c.l.b16 %v775
      %v861 = vunpack.c.l.b16 %v776
      %v862 = vunpack.c.l.b16 %v777
      %v863 = vpack.c.b16 %v832, %v831
      %v864 = vpack.c.b16 %v834, %v833
      %v865 = vpack.c.b16 %v836, %v835
      %v866 = vpack.c.b16 %v838, %v837
      %v867 = vpack.c.b16 %v840, %v839
      %v868 = vpack.c.b16 %v842, %v841
      %v869 = vpack.c.b16 %v844, %v843
      %v870 = vpack.c.b16 %v846, %v845
      %v871 = vpack.c.b16 %v848, %v847
      %v872 = vpack.c.b16 %v850, %v849
      %v873 = vpack.c.b16 %v852, %v851
      %v874 = vpack.c.b16 %v854, %v853
      %v875 = vpack.c.b16 %v856, %v855
      %v876 = vpack.c.b16 %v858, %v857
      %v877 = vpack.c.b16 %v860, %v859
      %v878 = vpack.c.b16 %v862, %v861
      %895 = vmatprep.subr.bf16.mxu0 0
      %896 = vmatpush1.bf16.msra.mxu0 %v863
      %897 = vmatprep.subr.bf16.mxu0 0
      %898 = vmatpush1.bf16.msra.mxu0 %v864
      %899 = vmatprep.subr.bf16.mxu0 0
      %900 = vmatpush1.bf16.msra.mxu0 %v865
      %901 = vmatprep.subr.bf16.mxu0 0
      %902 = vmatpush1.bf16.msra.mxu0 %v866
      %903 = vmatprep.subr.bf16.mxu0 0
      %904 = vmatpush1.bf16.msra.mxu0 %v867
      %905 = vmatprep.subr.bf16.mxu0 0
      %906 = vmatpush1.bf16.msra.mxu0 %v868
      %907 = vmatprep.subr.bf16.mxu0 0
      %908 = vmatpush1.bf16.msra.mxu0 %v869
      %909 = vmatprep.subr.bf16.mxu0 0
      %910 = vmatpush1.bf16.msra.mxu0 %v870
      %911 = vmatprep.subr.bf16.mxu0 0
      %912 = vmatpush1.bf16.msra.mxu0 %v871
      %913 = vmatprep.subr.bf16.mxu0 0
      %914 = vmatpush1.bf16.msra.mxu0 %v872
      %915 = vmatprep.subr.bf16.mxu0 0
      %916 = vmatpush1.bf16.msra.mxu0 %v873
      %917 = vmatprep.subr.bf16.mxu0 0
      %918 = vmatpush1.bf16.msra.mxu0 %v874
      %919 = vmatprep.subr.bf16.mxu0 0
      %920 = vmatpush1.bf16.msra.mxu0 %v875
      %921 = vmatprep.subr.bf16.mxu0 0
      %922 = vmatpush1.bf16.msra.mxu0 %v876
      %923 = vmatprep.subr.bf16.mxu0 0
      %924 = vmatpush1.bf16.msra.mxu0 %v877
      %925 = vmatprep.subr.bf16.mxu0 0
      %926 = vmatpush1.bf16.msra.mxu0 %v878
      %927 = vmatprep.mubr.bf16.mxu0 %v796
      %928 = vmatmul.mubr.bf16.gmra.mrb[0].mxu0 %v789
      %v929 = vpop.f32.mrb[0].mxu0
      %v930 = vadd.f32 0.0, %v929
      %v931 = vpop.f32.mrb[0].mxu0
      %v932 = vpop.f32.mrb[0].mxu0
      %v933 = vpop.f32.mrb[0].mxu0
      %934 = vdwg.mxu0
      %v935 = vadd.f32 %v743, %v930
      %v936 = vld [vmem:[%s2] sm:$0x1]
      %v938 = vlaneseq
      %v939 = vshrl.u32 %v938, 7
      %v940 = vsub.s32 0, %v939
      %v941 = vrot.slane %v936, %v940
      %v943 = vadd.f32 %v935, %v941
      %vm944 = vcmp.gt.f32.partialorder %v943, 0.0
      %v945 = vmul.f32 %v943, 0.01
      %v946 = vsel %vm944, %v943, %v945
      %v947 = vpack.c.bf16 %v946, %v946
      %948 = vst [vmem:[%s190] sm:$0x3] %v947
      %p949 = scmp.lt.s32.totalorder %s18, 1
      %s950 = scalar_select %p949, %s18, 1
      %p951 = scmp.lt.s32.totalorder %s19, 3
      %s952 = scalar_select %p951, %s19, 3
      %s953 = smul.addr %s950, 4
      %s954 = sadd.s32 %s952, %s953
      %s955 = smul.addr %s954, 2
      %s956 = scalar_lea.vmem %s3, %s955
      // Predicated region
      $region33: #{forward.5} parent=31 // pred_check
        %p957 = pneg %p114
      $region34: #{forward.5} parent=31 // pred_check_branch
        %959 = sbr.rel (%p957) target = $region36
      $region35: #{forward.5} parent=31 // pred_region
        _
      $region36: #{forward.5} parent=31 // pred_fallthru
        _
    $region32: #{forward.5} parent=5 // pred_fallthru
      _
    %p960 = scmp.le.s32.totalorder 2, %s9
    // Predicated region
    $region37: #{forward.5} parent=5 // pred_check
      %p961 = pneg %p960
    $region38: #{forward.5} parent=5 // pred_check_branch
      %963 = sbr.rel (%p961) target = $region40
    $region39: #{forward.5} parent=5 // pred_region
      %s964 = ssub.s32 %s9, 2
      // Predicated region
      $region41: #{forward.5} parent=39 // pred_check
        %p965 = pneg %p120
      $region42: #{forward.5} parent=39 // pred_check_branch
        %967 = sbr.rel (%p965) target = $region44
      $region43: #{forward.5} parent=39 // pred_region
        %p968 = scmp.lt.s32.totalorder %s20, 1
        %s969 = scalar_select %p968, %s20, 1
        %p970 = scmp.lt.s32.totalorder %s21, 3
        %s971 = scalar_select %p970, %s21, 3
        %s972 = smul.addr %s969, 4
        %s973 = sadd.s32 %s971, %s972
        %s974 = smul.addr %s973, 2
        %s975 = scalar_lea.vmem %s3, %s974
      $region44: #{forward.5} parent=39 // pred_fallthru
        _
    $region40: #{forward.5} parent=5 // pred_fallthru
      _
  $region6: #{forward.5} parent=0 // loop_footer
    %s13 = sadd.s32 1, %s9
  $region7: #{forward.5} parent=0 // loop_footer_branch
    %8 = sbr.rel target = $region3
  $region8: #{forward.5} parent=0 // loop_exit
    _

// kernel: forward.6
$region0: #{forward.6}
  #allocation0 [shape = 'u32[]', space=smem, size = 0x4, offset = 0x4, fixed_abs, tag = 'smem constant byte address 0x4 - core index']
  #allocation1 [shape = 'u32[144,128]{1,0:T(1,128)}', space=vmem, size = 0x12000, scoped, tag = 'internal scratch']
  %s0 = inlined_call_operand.vmem [shape: bf16[2,3,3,512], index: 0, kind: input, shape index: {}]
  %s1 = inlined_call_operand.vmem [shape: bf16[2,2,512,256], index: 1, kind: input, shape index: {}]
  %s2 = inlined_call_operand.vmem [shape: f32[1,256], index: 2, kind: input, shape index: {}]
  %s3 = inlined_call_operand.vmem [shape: bf16[2,2,2,256], index: 3, kind: output, shape index: {}]
  %s4 = sld [smem:[#allocation0]]
  $region45: #{forward.6} parent=0
    _
  %s6 = ssub.s32 1, %s4
  %s7 = scalar_select 0, %s6, %s4
  loop: start=0, step=1, limit=6
  $region2: #{forward.6} parent=0 // loop_pre_header
    _
  $region3: #{forward.6} parent=0 // loop_header
    %s9 = sphi 0, %s13
    %p10 = scmp.ge.s32.totalorder %s9, 6
    %s16 = sphi 0, %s28
    %s17 = sphi 0, %s24
    %s18 = sphi 0, %s16
    %s19 = sphi 0, %s17
    %s20 = sphi 0, %s18
    %s21 = sphi 0, %s19
    %s31 = sphi 0, %s33
    %s34 = sphi 0, %s31
    %s35 = sphi 0, %s34
    %s51 = sphi 0, %s35
    %s55 = sphi 0, %s55
    %s57 = sphi 0, %s55
    %s58 = sphi 0, %s57
    %s72 = sphi 0, %s58
    %s76 = sphi 0, %s76
    %s78 = sphi 0, %s76
    %s79 = sphi 0, %s78
    %s93 = sphi 0, %s79
    %s101 = sphi 0, %s103
    %s104 = sphi 0, %s101
    %s105 = sphi 0, %s104
    %s121 = sphi 0, %s105
  $region4: #{forward.6} parent=0 // loop_header_branch
    %12 = sbr.rel (%p10) target = $region8
  $region5: #{forward.6} parent=0 // loop_body
    %s14 = ssub.s32 %s9, 1
    %s15 = ssub.s32 %s9, 2
    %s22 = sadd.s32 1, %s17
    %p23 = scmp.ge.s32.totalorder %s22, 2
    %s24 = scalar_select %p23, 0, %s22
    %s25 = sadd.s32 1, %s16
    %s26 = scalar_select %p23, %s25, %s16
    %p27 = scmp.ge.s32.totalorder %s26, 2
    %s28 = scalar_select %p27, 0, %s26
    %s29 = ssub.s32 %s16, %s28
    %p30 = scmp.eq.s32.totalorder %s29, 0
    %s32 = sadd.s32 %s31, 1
    %s33 = scalar_select %p30, %s31, %s32
    %p36 = pneg %p30
    %p37 = scmp.eq.s32.totalorder %s9, 3
    %p38 = por %p36, %p37
    %p39 = scmp.ne.s32.totalorder %s31, %s34
    %p40 = scmp.eq.s32.totalorder %s9, 0
    %p41 = por %p39, %p40
    %p42 = scmp.ne.s32.totalorder %s31, %s34
    %p43 = scmp.eq.s32.totalorder %s14, 3
    %p44 = por %p42, %p43
    %p45 = scmp.ne.s32.totalorder %s34, %s35
    %p46 = scmp.eq.s32.totalorder %s14, 0
    %p47 = por %p45, %p46
    %p48 = scmp.ne.s32.totalorder %s34, %s35
    %p49 = scmp.eq.s32.totalorder %s15, 3
    %p50 = por %p48, %p49
    %p52 = scmp.ne.s32.totalorder %s35, %s51
    %p53 = scmp.eq.s32.totalorder %s15, 0
    %p54 = por %p52, %p53
    %s56 = sadd.s32 %s55, 1
    %p59 = scmp.eq.s32.totalorder %s9, 3
    %p60 = scmp.ne.s32.totalorder %s55, %s57
    %p61 = scmp.eq.s32.totalorder %s9, 0
    %p62 = por %p60, %p61
    %p63 = scmp.ne.s32.totalorder %s55, %s57
    %p64 = scmp.eq.s32.totalorder %s14, 3
    %p65 = por %p63, %p64
    %p66 = scmp.ne.s32.totalorder %s57, %s58
    %p67 = scmp.eq.s32.totalorder %s14, 0
    %p68 = por %p66, %p67
    %p69 = scmp.ne.s32.totalorder %s57, %s58
    %p70 = scmp.eq.s32.totalorder %s15, 3
    %p71 = por %p69, %p70
    %p73 = scmp.ne.s32.totalorder %s58, %s72
    %p74 = scmp.eq.s32.totalorder %s15, 0
    %p75 = por %p73, %p74
    %s77 = sadd.s32 %s76, 1
    %p80 = scmp.eq.s32.totalorder %s9, 3
    %p81 = scmp.ne.s32.totalorder %s76, %s78
    %p82 = scmp.eq.s32.totalorder %s9, 0
    %p83 = por %p81, %p82
    %p84 = scmp.ne.s32.totalorder %s76, %s78
    %p85 = scmp.eq.s32.totalorder %s14, 3
    %p86 = por %p84, %p85
    %p87 = scmp.ne.s32.totalorder %s78, %s79
    %p88 = scmp.eq.s32.totalorder %s14, 0
    %p89 = por %p87, %p88
    %p90 = scmp.ne.s32.totalorder %s78, %s79
    %p91 = scmp.eq.s32.totalorder %s15, 3
    %p92 = por %p90, %p91
    %p94 = scmp.ne.s32.totalorder %s79, %s93
    %p95 = scmp.eq.s32.totalorder %s15, 0
    %p96 = por %p94, %p95
    %s97 = ssub.s32 %s16, %s28
    %s98 = ssub.s32 %s17, %s24
    %s99 = sor.u32 %s97, %s98
    %p100 = scmp.eq.s32.totalorder %s99, 0
    %s102 = sadd.s32 %s101, 1
    %s103 = scalar_select %p100, %s101, %s102
    %p106 = pneg %p100
    %p107 = scmp.eq.s32.totalorder %s9, 3
    %p108 = por %p106, %p107
    %p109 = scmp.ne.s32.totalorder %s101, %s104
    %p110 = scmp.eq.s32.totalorder %s9, 0
    %p111 = por %p109, %p110
    %p112 = scmp.ne.s32.totalorder %s101, %s104
    %p113 = scmp.eq.s32.totalorder %s14, 3
    %p114 = por %p112, %p113
    %p115 = scmp.ne.s32.totalorder %s104, %s105
    %p116 = scmp.eq.s32.totalorder %s14, 0
    %p117 = por %p115, %p116
    %p118 = scmp.ne.s32.totalorder %s104, %s105
    %p119 = scmp.eq.s32.totalorder %s15, 3
    %p120 = por %p118, %p119
    %p122 = scmp.ne.s32.totalorder %s105, %s121
    %p123 = scmp.eq.s32.totalorder %s15, 0
    %p124 = por %p122, %p123
    %p125 = scmp.le.s32.totalorder 1, %s9
    %p126 = scmp.lt.s32.totalorder %s9, 5
    %p127 = pnand %p125, %p126
    %p128 = pneg %p127
    // Predicated region
    $region9: #{forward.6} parent=5 // pred_check
      _
    $region10: #{forward.6} parent=5 // pred_check_branch
      %130 = sbr.rel (%p127) target = $region12
    $region11: #{forward.6} parent=5 // pred_region
      %s131 = ssub.s32 %s9, 1
      // Predicated region
      $region13: #{forward.6} parent=11 // pred_check
        %p132 = pneg %p68
      $region14: #{forward.6} parent=11 // pred_check_branch
        %134 = sbr.rel (%p132) target = $region16
      $region15: #{forward.6} parent=11 // pred_region
        _
      $region16: #{forward.6} parent=11 // pred_fallthru
        _
      // Predicated region
      $region17: #{forward.6} parent=11 // pred_check
        %p135 = pneg %p89
      $region18: #{forward.6} parent=11 // pred_check_branch
        %137 = sbr.rel (%p135) target = $region20
      $region19: #{forward.6} parent=11 // pred_region
        _
      $region20: #{forward.6} parent=11 // pred_fallthru
        _
    $region12: #{forward.6} parent=5 // pred_fallthru
      _
    %p138 = scmp.lt.s32.totalorder %s9, 4
    // Predicated region
    $region21: #{forward.6} parent=5 // pred_check
      %p139 = pneg %p138
    $region22: #{forward.6} parent=5 // pred_check_branch
      %141 = sbr.rel (%p139) target = $region24
    $region23: #{forward.6} parent=5 // pred_region
      // Predicated region
      $region25: #{forward.6} parent=23 // pred_check
        %p142 = pneg %p41
      $region26: #{forward.6} parent=23 // pred_check_branch
        %144 = sbr.rel (%p142) target = $region28
      $region27: #{forward.6} parent=23 // pred_region
        %p145 = scmp.lt.s32.totalorder %s16, 1
        %s146 = scalar_select %p145, %s16, 1
        %s147 = smul.addr %s146, 12
        %s148 = smul.addr %s147, 2
        %s149 = scalar_lea.vmem %s0, %s148
      $region28: #{forward.6} parent=23 // pred_fallthru
        _
    $region24: #{forward.6} parent=5 // pred_fallthru
      _
    %p150 = scmp.le.s32.totalorder 1, %s9
    %p151 = scmp.lt.s32.totalorder %s9, 5
    %p152 = pnand %p150, %p151
    %p153 = pneg %p152
    // Predicated region
    $region29: #{forward.6} parent=5 // pred_check
      _
    $region30: #{forward.6} parent=5 // pred_check_branch
      %155 = sbr.rel (%p152) target = $region32
    $region31: #{forward.6} parent=5 // pred_region
      %s156 = ssub.s32 %s9, 1
      %p157 = scmp.lt.s32.totalorder %s18, 1
      %s158 = scalar_select %p157, %s18, 1
      %s159 = smul.addr %s158, 12
      %s160 = smul.addr %s159, 2
      %s161 = scalar_lea.vmem %s0, %s160
      %p162 = pneg %p47
      %p163 = pneg %p44
      %p164 = pneg %p68
      %p165 = pneg %p65
      %p166 = pneg %p89
      %p167 = pneg %p86
      %p168 = pneg %p117
      %p169 = pneg %p114
      %p170 = scmp.lt.s32.totalorder %s18, 1
      %s171 = scalar_select %p170, %s18, 1
      %p172 = scmp.lt.s32.totalorder %s19, 1
      %s173 = scalar_select %p172, %s19, 1
      %s174 = smul.addr %s173, 2
      %s175 = smul.addr %s171, 4
      %s176 = sadd.s32 %s174, %s175
      %s177 = scalar_lea.vmem %s3, %s176
      %p178 = scmp.lt.s32.totalorder %s18, 1
      %s179 = scalar_select %p178, %s18, 1
      %s180 = smul.addr %s179, 12
      %s181 = smul.addr %s180, 2
      %s182 = scalar_lea.vmem %s0, %s181
      %p183 = scmp.lt.s32.totalorder %s18, 1
      %s184 = scalar_select %p183, %s18, 1
      %p185 = scmp.lt.s32.totalorder %s19, 1
      %s186 = scalar_select %p185, %s19, 1
      %s187 = smul.addr %s186, 2
      %s188 = smul.addr %s184, 4
      %s189 = sadd.s32 %s187, %s188
      %s190 = scalar_lea.vmem %s3, %s189
      %s191 = smul.u32 %s19, 4
      %s192 = smul.addr %s191, 2
      %s193 = scalar_lea.vmem %s182, %s192
      %v194 = vld [vmem:[%s193] sm:$0x55]
      %v195 = vld [vmem:[%s1] sm:$0xff]
      %v196 = vld [vmem:[%s1 + $0x8] sm:$0xff]
      %v197 = vld [vmem:[%s1 + $0x10] sm:$0xff]
      %v198 = vld [vmem:[%s1 + $0x18] sm:$0xff]
      %v199 = vld [vmem:[%s1 + $0x20] sm:$0xff]
      %v200 = vld [vmem:[%s1 + $0x28] sm:$0xff]
      %v201 = vld [vmem:[%s1 + $0x30] sm:$0xff]
      %v202 = vld [vmem:[%s1 + $0x38] sm:$0xff]
      %v203 = vld [vmem:[%s1 + $0x40] sm:$0xff]
      %v204 = vld [vmem:[%s1 + $0x48] sm:$0xff]
      %v205 = vld [vmem:[%s1 + $0x50] sm:$0xff]
      %v206 = vld [vmem:[%s1 + $0x58] sm:$0xff]
      %v207 = vld [vmem:[%s1 + $0x60] sm:$0xff]
      %v208 = vld [vmem:[%s1 + $0x68] sm:$0xff]
      %v209 = vld [vmem:[%s1 + $0x70] sm:$0xff]
      %v210 = vld [vmem:[%s1 + $0x78] sm:$0xff]
      %v211 = vld [vmem:[%s1 + $0x80] sm:$0xff]
      %v212 = vld [vmem:[%s1 + $0x88] sm:$0xff]
      %v213 = vld [vmem:[%s1 + $0x90] sm:$0xff]
      %v214 = vld [vmem:[%s1 + $0x98] sm:$0xff]
      %v215 = vld [vmem:[%s1 + $0xa0] sm:$0xff]
      %v216 = vld [vmem:[%s1 + $0xa8] sm:$0xff]
      %v217 = vld [vmem:[%s1 + $0xb0] sm:$0xff]
      %v218 = vld [vmem:[%s1 + $0xb8] sm:$0xff]
      %v219 = vld [vmem:[%s1 + $0xc0] sm:$0xff]
      %v220 = vld [vmem:[%s1 + $0xc8] sm:$0xff]
      %v221 = vld [vmem:[%s1 + $0xd0] sm:$0xff]
      %v222 = vld [vmem:[%s1 + $0xd8] sm:$0xff]
      %v223 = vld [vmem:[%s1 + $0xe0] sm:$0xff]
      %v224 = vld [vmem:[%s1 + $0xe8] sm:$0xff]
      %v225 = vld [vmem:[%s1 + $0xf0] sm:$0xff]
      %v226 = vld [vmem:[%s1 + $0xf8] sm:$0xff]
      %v227 = vld [vmem:[%s1 + $0x100] sm:$0xff]
      %v228 = vld [vmem:[%s1 + $0x108] sm:$0xff]
      %v229 = vld [vmem:[%s1 + $0x110] sm:$0xff]
      %v230 = vld [vmem:[%s1 + $0x118] sm:$0xff]
      %v231 = vld [vmem:[%s1 + $0x120] sm:$0xff]
      %v232 = vld [vmem:[%s1 + $0x128] sm:$0xff]
      %v233 = vld [vmem:[%s1 + $0x130] sm:$0xff]
      %v234 = vld [vmem:[%s1 + $0x138] sm:$0xff]
      %v235 = vld [vmem:[%s1 + $0x140] sm:$0xff]
      %v236 = vld [vmem:[%s1 + $0x148] sm:$0xff]
      %v237 = vld [vmem:[%s1 + $0x150] sm:$0xff]
      %v238 = vld [vmem:[%s1 + $0x158] sm:$0xff]
      %v239 = vld [vmem:[%s1 + $0x160] sm:$0xff]
      %v240 = vld [vmem:[%s1 + $0x168] sm:$0xff]
      %v241 = vld [vmem:[%s1 + $0x170] sm:$0xff]
      %v242 = vld [vmem:[%s1 + $0x178] sm:$0xff]
      %v243 = vld [vmem:[%s1 + $0x180] sm:$0xff]
      %v244 = vld [vmem:[%s1 + $0x188] sm:$0xff]
      %v245 = vld [vmem:[%s1 + $0x190] sm:$0xff]
      %v246 = vld [vmem:[%s1 + $0x198] sm:$0xff]
      %v247 = vld [vmem:[%s1 + $0x1a0] sm:$0xff]
      %v248 = vld [vmem:[%s1 + $0x1a8] sm:$0xff]
      %v249 = vld [vmem:[%s1 + $0x1b0] sm:$0xff]
      %v250 = vld [vmem:[%s1 + $0x1b8] sm:$0xff]
      %v251 = vld [vmem:[%s1 + $0x1c0] sm:$0xff]
      %v252 = vld [vmem:[%s1 + $0x1c8] sm:$0xff]
      %v253 = vld [vmem:[%s1 + $0x1d0] sm:$0xff]
      %v254 = vld [vmem:[%s1 + $0x1d8] sm:$0xff]
      %v255 = vld [vmem:[%s1 + $0x1e0] sm:$0xff]
      %v256 = vld [vmem:[%s1 + $0x1e8] sm:$0xff]
      %v257 = vld [vmem:[%s1 + $0x1f0] sm:$0xff]
      %v258 = vld [vmem:[%s1 + $0x1f8] sm:$0xff]
      %v259 = vld [vmem:[%s193] sm:$0xff]
      %s260 = scalar_lea.vmem %s1, 512
      %v261 = vld [vmem:[%s260] sm:$0xff]
      %v262 = vld [vmem:[%s260 + $0x8] sm:$0xff]
      %v263 = vld [vmem:[%s260 + $0x10] sm:$0xff]
      %v264 = vld [vmem:[%s260 + $0x18] sm:$0xff]
      %v265 = vld [vmem:[%s260 + $0x20] sm:$0xff]
      %v266 = vld [vmem:[%s260 + $0x28] sm:$0xff]
      %v267 = vld [vmem:[%s260 + $0x30] sm:$0xff]
      %v268 = vld [vmem:[%s260 + $0x38] sm:$0xff]
      %v269 = vld [vmem:[%s260 + $0x40] sm:$0xff]
      %v270 = vld [vmem:[%s260 + $0x48] sm:$0xff]
      %v271 = vld [vmem:[%s260 + $0x50] sm:$0xff]
      %v272 = vld [vmem:[%s260 + $0x58] sm:$0xff]
      %v273 = vld [vmem:[%s260 + $0x60] sm:$0xff]
      %v274 = vld [vmem:[%s260 + $0x68] sm:$0xff]
      %v275 = vld [vmem:[%s260 + $0x70] sm:$0xff]
      %v276 = vld [vmem:[%s260 + $0x78] sm:$0xff]
      %v277 = vld [vmem:[%s260 + $0x80] sm:$0xff]
      %v278 = vld [vmem:[%s260 + $0x88] sm:$0xff]
      %v279 = vld [vmem:[%s260 + $0x90] sm:$0xff]
      %v280 = vld [vmem:[%s260 + $0x98] sm:$0xff]
      %v281 = vld [vmem:[%s260 + $0xa0] sm:$0xff]
      %v282 = vld [vmem:[%s260 + $0xa8] sm:$0xff]
      %v283 = vld [vmem:[%s260 + $0xb0] sm:$0xff]
      %v284 = vld [vmem:[%s260 + $0xb8] sm:$0xff]
      %v285 = vld [vmem:[%s260 + $0xc0] sm:$0xff]
      %v286 = vld [vmem:[%s260 + $0xc8] sm:$0xff]
      %v287 = vld [vmem:[%s260 + $0xd0] sm:$0xff]
      %v288 = vld [vmem:[%s260 + $0xd8] sm:$0xff]
      %v289 = vld [vmem:[%s260 + $0xe0] sm:$0xff]
      %v290 = vld [vmem:[%s260 + $0xe8] sm:$0xff]
      %v291 = vld [vmem:[%s260 + $0xf0] sm:$0xff]
      %v292 = vld [vmem:[%s260 + $0xf8] sm:$0xff]
      %v293 = vld [vmem:[%s260 + $0x100] sm:$0xff]
      %v294 = vld [vmem:[%s260 + $0x108] sm:$0xff]
      %v295 = vld [vmem:[%s260 + $0x110] sm:$0xff]
      %v296 = vld [vmem:[%s260 + $0x118] sm:$0xff]
      %v297 = vld [vmem:[%s260 + $0x120] sm:$0xff]
      %v298 = vld [vmem:[%s260 + $0x128] sm:$0xff]
      %v299 = vld [vmem:[%s260 + $0x130] sm:$0xff]
      %v300 = vld [vmem:[%s260 + $0x138] sm:$0xff]
      %v301 = vld [vmem:[%s260 + $0x140] sm:$0xff]
      %v302 = vld [vmem:[%s260 + $0x148] sm:$0xff]
      %v303 = vld [vmem:[%s260 + $0x150] sm:$0xff]
      %v304 = vld [vmem:[%s260 + $0x158] sm:$0xff]
      %v305 = vld [vmem:[%s260 + $0x160] sm:$0xff]
      %v306 = vld [vmem:[%s260 + $0x168] sm:$0xff]
      %v307 = vld [vmem:[%s260 + $0x170] sm:$0xff]
      %v308 = vld [vmem:[%s260 + $0x178] sm:$0xff]
      %v309 = vld [vmem:[%s260 + $0x180] sm:$0xff]
      %v310 = vld [vmem:[%s260 + $0x188] sm:$0xff]
      %v311 = vld [vmem:[%s260 + $0x190] sm:$0xff]
      %v312 = vld [vmem:[%s260 + $0x198] sm:$0xff]
      %v313 = vld [vmem:[%s260 + $0x1a0] sm:$0xff]
      %v314 = vld [vmem:[%s260 + $0x1a8] sm:$0xff]
      %v315 = vld [vmem:[%s260 + $0x1b0] sm:$0xff]
      %v316 = vld [vmem:[%s260 + $0x1b8] sm:$0xff]
      %v317 = vld [vmem:[%s260 + $0x1c0] sm:$0xff]
      %v318 = vld [vmem:[%s260 + $0x1c8] sm:$0xff]
      %v319 = vld [vmem:[%s260 + $0x1d0] sm:$0xff]
      %v320 = vld [vmem:[%s260 + $0x1d8] sm:$0xff]
      %v321 = vld [vmem:[%s260 + $0x1e0] sm:$0xff]
      %v322 = vld [vmem:[%s260 + $0x1e8] sm:$0xff]
      %v323 = vld [vmem:[%s260 + $0x1f0] sm:$0xff]
      %v324 = vld [vmem:[%s260 + $0x1f8] sm:$0xff]
      %v326 = vcombine.high %v259, %v259
      %v328 = vunpack.c.l.s4 1983009808
      %v329 = vunpack.c.0.s8 %v328
      %v330 = vlaneseq
      %v331 = vshrl.u32 %v330, 7
      %v332 = vsub.s32 %v329, %v331
      %v333 = vrot.slane %v259, %v332
      %v335 = vunpack.c.l.s4 1983009808
      %v336 = vunpack.c.0.s8 %v335
      %v337 = vlaneseq
      %v338 = vshrl.u32 %v337, 7
      %v339 = vsub.s32 %v336, %v338
      %v340 = vrot.slane %v326, %v339
      %v341 = vcombine.high %v333, %v333
      %v342 = vcombine.high %v340, %v340
      %v344 = vshrl.u32 %v333, 16
      %v346 = vshll.u32 %v333, 16
      %v348 = vrot.slane %v346, 1
      %v349 = vor.u32 %v344, %v348
      %v351 = vshrl.u32 %v341, 16
      %v353 = vshll.u32 %v341, 16
      %v355 = vrot.slane %v353, 1
      %v356 = vor.u32 %v351, %v355
      %v358 = vshrl.u32 %v340, 16
      %v360 = vshll.u32 %v340, 16
      %v362 = vrot.slane %v360, 1
      %v363 = vor.u32 %v358, %v362
      %v365 = vshrl.u32 %v342, 16
      %v367 = vshll.u32 %v342, 16
      %v369 = vrot.slane %v367, 1
      %v370 = vor.u32 %v365, %v369
      %v439 = vunpack.c.l.b16 %v261
      %v440 = vunpack.c.h.b16 %v261
      %v441 = vunpack.c.l.b16 %v262
      %v442 = vunpack.c.h.b16 %v262
      %v443 = vunpack.c.l.b16 %v263
      %v444 = vunpack.c.h.b16 %v263
      %v445 = vunpack.c.l.b16 %v264
      %v446 = vunpack.c.h.b16 %v264
      %v447 = vunpack.c.l.b16 %v265
      %v448 = vunpack.c.h.b16 %v265
      %v449 = vunpack.c.l.b16 %v266
      %v450 = vunpack.c.h.b16 %v266
      %v451 = vunpack.c.l.b16 %v267
      %v452 = vunpack.c.h.b16 %v267
      %v453 = vunpack.c.l.b16 %v268
      %v454 = vunpack.c.h.b16 %v268
      %v455 = vunpack.c.l.b16 %v269
      %v456 = vunpack.c.h.b16 %v269
      %v457 = vunpack.c.l.b16 %v270
      %v458 = vunpack.c.h.b16 %v270
      %v459 = vunpack.c.l.b16 %v271
      %v460 = vunpack.c.h.b16 %v271
      %v461 = vunpack.c.l.b16 %v272
      %v462 = vunpack.c.h.b16 %v272
      %v463 = vunpack.c.l.b16 %v273
      %v464 = vunpack.c.h.b16 %v273
      %v465 = vunpack.c.l.b16 %v274
      %v466 = vunpack.c.h.b16 %v274
      %v467 = vunpack.c.l.b16 %v275
      %v468 = vunpack.c.h.b16 %v275
      %v469 = vunpack.c.l.b16 %v276
      %v470 = vunpack.c.h.b16 %v276
      %v471 = vunpack.c.l.b16 %v277
      %v472 = vunpack.c.h.b16 %v277
      %v473 = vunpack.c.l.b16 %v278
      %v474 = vunpack.c.h.b16 %v278
      %v475 = vunpack.c.l.b16 %v279
      %v476 = vunpack.c.h.b16 %v279
      %v477 = vunpack.c.l.b16 %v280
      %v478 = vunpack.c.h.b16 %v280
      %v479 = vunpack.c.l.b16 %v281
      %v480 = vunpack.c.h.b16 %v281
      %v481 = vunpack.c.l.b16 %v282
      %v482 = vunpack.c.h.b16 %v282
      %v483 = vunpack.c.l.b16 %v283
      %v484 = vunpack.c.h.b16 %v283
      %v485 = vunpack.c.l.b16 %v284
      %v486 = vunpack.c.h.b16 %v284
      %v487 = vunpack.c.l.b16 %v285
      %v488 = vunpack.c.h.b16 %v285
      %v489 = vunpack.c.l.b16 %v286
      %v490 = vunpack.c.h.b16 %v286
      %v491 = vunpack.c.l.b16 %v287
      %v492 = vunpack.c.h.b16 %v287
      %v493 = vunpack.c.l.b16 %v288
      %v494 = vunpack.c.h.b16 %v288
      %v495 = vunpack.c.l.b16 %v289
      %v496 = vunpack.c.h.b16 %v289
      %v497 = vunpack.c.l.b16 %v290
      %v498 = vunpack.c.h.b16 %v290
      %v499 = vunpack.c.l.b16 %v291
      %v500 = vunpack.c.h.b16 %v291
      %v501 = vunpack.c.l.b16 %v292
      %v502 = vunpack.c.h.b16 %v292
      %v503 = vunpack.c.l.b16 %v293
      %v504 = vunpack.c.h.b16 %v293
      %v505 = vunpack.c.l.b16 %v294
      %v506 = vunpack.c.h.b16 %v294
      %v507 = vunpack.c.l.b16 %v295
      %v508 = vunpack.c.h.b16 %v295
      %v509 = vunpack.c.l.b16 %v296
      %v510 = vunpack.c.h.b16 %v296
      %v511 = vunpack.c.l.b16 %v297
      %v512 = vunpack.c.h.b16 %v297
      %v513 = vunpack.c.l.b16 %v298
      %v514 = vunpack.c.h.b16 %v298
      %v515 = vunpack.c.l.b16 %v299
      %v516 = vunpack.c.h.b16 %v299
      %v517 = vunpack.c.l.b16 %v300
      %v518 = vunpack.c.h.b16 %v300
      %v519 = vunpack.c.l.b16 %v301
      %v520 = vunpack.c.h.b16 %v301
      %v521 = vunpack.c.l.b16 %v302
      %v522 = vunpack.c.h.b16 %v302
      %v523 = vunpack.c.l.b16 %v303
      %v524 = vunpack.c.h.b16 %v303
      %v525 = vunpack.c.l.b16 %v304
      %v526 = vunpack.c.h.b16 %v304
      %v527 = vunpack.c.l.b16 %v305
      %v528 = vunpack.c.h.b16 %v305
      %v529 = vunpack.c.l.b16 %v306
      %v530 = vunpack.c.h.b16 %v306
      %v531 = vunpack.c.l.b16 %v307
      %v532 = vunpack.c.h.b16 %v307
      %v533 = vunpack.c.l.b16 %v308
      %v534 = vunpack.c.h.b16 %v308
      %v535 = vunpack.c.l.b16 %v309
      %v536 = vunpack.c.h.b16 %v309
      %v537 = vunpack.c.l.b16 %v310
      %v538 = vunpack.c.h.b16 %v310
      %v539 = vunpack.c.l.b16 %v311
      %v540 = vunpack.c.h.b16 %v311
      %v541 = vunpack.c.l.b16 %v312
      %v542 = vunpack.c.h.b16 %v312
      %v543 = vunpack.c.l.b16 %v313
      %v544 = vunpack.c.h.b16 %v313
      %v545 = vunpack.c.l.b16 %v314
      %v546 = vunpack.c.h.b16 %v314
      %v547 = vunpack.c.l.b16 %v315
      %v548 = vunpack.c.h.b16 %v315
      %v549 = vunpack.c.l.b16 %v316
      %v550 = vunpack.c.h.b16 %v316
      %v551 = vunpack.c.l.b16 %v317
      %v552 = vunpack.c.h.b16 %v317
      %v553 = vunpack.c.l.b16 %v318
      %v554 = vunpack.c.h.b16 %v318
      %v555 = vunpack.c.l.b16 %v319
      %v556 = vunpack.c.h.b16 %v319
      %v557 = vunpack.c.l.b16 %v320
      %v558 = vunpack.c.h.b16 %v320
      %v559 = vunpack.c.l.b16 %v321
      %v560 = vunpack.c.h.b16 %v321
      %v561 = vunpack.c.l.b16 %v322
      %v562 = vunpack.c.h.b16 %v322
      %v563 = vunpack.c.l.b16 %v323
      %v564 = vunpack.c.h.b16 %v323
      %v565 = vunpack.c.l.b16 %v324
      %v566 = vunpack.c.h.b16 %v324
      %v567 = vpack.c.b16 %v441, %v439
      %v568 = vpack.c.b16 %v442, %v440
      %v569 = vpack.c.b16 %v445, %v443
      %v570 = vpack.c.b16 %v446, %v444
      %v571 = vpack.c.b16 %v449, %v447
      %v572 = vpack.c.b16 %v450, %v448
      %v573 = vpack.c.b16 %v453, %v451
      %v574 = vpack.c.b16 %v454, %v452
      %v575 = vpack.c.b16 %v457, %v455
      %v576 = vpack.c.b16 %v458, %v456
      %v577 = vpack.c.b16 %v461, %v459
      %v578 = vpack.c.b16 %v462, %v460
      %v579 = vpack.c.b16 %v465, %v463
      %v580 = vpack.c.b16 %v466, %v464
      %v581 = vpack.c.b16 %v469, %v467
      %v582 = vpack.c.b16 %v470, %v468
      %v583 = vpack.c.b16 %v473, %v471
      %v584 = vpack.c.b16 %v474, %v472
      %v585 = vpack.c.b16 %v477, %v475
      %v586 = vpack.c.b16 %v478, %v476
      %v587 = vpack.c.b16 %v481, %v479
      %v588 = vpack.c.b16 %v482, %v480
      %v589 = vpack.c.b16 %v485, %v483
      %v590 = vpack.c.b16 %v486, %v484
      %v591 = vpack.c.b16 %v489, %v487
      %v592 = vpack.c.b16 %v490, %v488
      %v593 = vpack.c.b16 %v493, %v491
      %v594 = vpack.c.b16 %v494, %v492
      %v595 = vpack.c.b16 %v497, %v495
      %v596 = vpack.c.b16 %v498, %v496
      %v597 = vpack.c.b16 %v501, %v499
      %v598 = vpack.c.b16 %v502, %v500
      %v599 = vpack.c.b16 %v505, %v503
      %v600 = vpack.c.b16 %v506, %v504
      %v601 = vpack.c.b16 %v509, %v507
      %v602 = vpack.c.b16 %v510, %v508
      %v603 = vpack.c.b16 %v513, %v511
      %v604 = vpack.c.b16 %v514, %v512
      %v605 = vpack.c.b16 %v517, %v515
      %v606 = vpack.c.b16 %v518, %v516
      %v607 = vpack.c.b16 %v521, %v519
      %v608 = vpack.c.b16 %v522, %v520
      %v609 = vpack.c.b16 %v525, %v523
      %v610 = vpack.c.b16 %v526, %v524
      %v611 = vpack.c.b16 %v529, %v527
      %v612 = vpack.c.b16 %v530, %v528
      %v613 = vpack.c.b16 %v533, %v531
      %v614 = vpack.c.b16 %v534, %v532
      %v615 = vpack.c.b16 %v537, %v535
      %v616 = vpack.c.b16 %v538, %v536
      %v617 = vpack.c.b16 %v541, %v539
      %v618 = vpack.c.b16 %v542, %v540
      %v619 = vpack.c.b16 %v545, %v543
      %v620 = vpack.c.b16 %v546, %v544
      %v621 = vpack.c.b16 %v549, %v547
      %v622 = vpack.c.b16 %v550, %v548
      %v623 = vpack.c.b16 %v553, %v551
      %v624 = vpack.c.b16 %v554, %v552
      %v625 = vpack.c.b16 %v557, %v555
      %v626 = vpack.c.b16 %v558, %v556
      %v627 = vpack.c.b16 %v561, %v559
      %v628 = vpack.c.b16 %v562, %v560
      %v629 = vpack.c.b16 %v565, %v563
      %v630 = vpack.c.b16 %v566, %v564
      %695 = vmatprep.subr.bf16.mxu0 %v568
      %696 = vmatpush1.bf16.msra.mxu0 %v567
      %697 = vmatprep.subr.bf16.mxu0 %v570
      %698 = vmatpush1.bf16.msra.mxu0 %v569
      %699 = vmatprep.subr.bf16.mxu0 %v572
      %700 = vmatpush1.bf16.msra.mxu0 %v571
      %701 = vmatprep.subr.bf16.mxu0 %v574
      %702 = vmatpush1.bf16.msra.mxu0 %v573
      %703 = vmatprep.subr.bf16.mxu0 %v576
      %704 = vmatpush1.bf16.msra.mxu0 %v575
      %705 = vmatprep.subr.bf16.mxu0 %v578
      %706 = vmatpush1.bf16.msra.mxu0 %v577
      %707 = vmatprep.subr.bf16.mxu0 %v580
      %708 = vmatpush1.bf16.msra.mxu0 %v579
      %709 = vmatprep.subr.bf16.mxu0 %v582
      %710 = vmatpush1.bf16.msra.mxu0 %v581
      %711 = vmatprep.subr.bf16.mxu0 %v584
      %712 = vmatpush1.bf16.msra.mxu0 %v583
      %713 = vmatprep.subr.bf16.mxu0 %v586
      %714 = vmatpush1.bf16.msra.mxu0 %v585
      %715 = vmatprep.subr.bf16.mxu0 %v588
      %716 = vmatpush1.bf16.msra.mxu0 %v587
      %717 = vmatprep.subr.bf16.mxu0 %v590
      %718 = vmatpush1.bf16.msra.mxu0 %v589
      %719 = vmatprep.subr.bf16.mxu0 %v592
      %720 = vmatpush1.bf16.msra.mxu0 %v591
      %721 = vmatprep.subr.bf16.mxu0 %v594
      %722 = vmatpush1.bf16.msra.mxu0 %v593
      %723 = vmatprep.subr.bf16.mxu0 %v596
      %724 = vmatpush1.bf16.msra.mxu0 %v595
      %725 = vmatprep.subr.bf16.mxu0 %v598
      %726 = vmatpush1.bf16.msra.mxu0 %v597
      %727 = vmatprep.mubr.bf16.mxu0 %v356
      %728 = vmatmul.mubr.bf16.gmra.mrb[0].mxu0 %v349
      %v729 = vpop.f32.mrb[0].mxu0
      %v730 = vadd.f32 0.0, %v729
      %v731 = vpop.f32.mrb[0].mxu0
      %v732 = vadd.f32 0.0, %v731
      %v733 = vpop.f32.mrb[0].mxu0
      %v734 = vpop.f32.mrb[0].mxu0
      %735 = vdwg.mxu0
      %736 = vmatprep.subr.bf16.mxu0 %v600
      %737 = vmatpush1.bf16.msra.mxu0 %v599
      %738 = vmatprep.subr.bf16.mxu0 %v602
      %739 = vmatpush1.bf16.msra.mxu0 %v601
      %740 = vmatprep.subr.bf16.mxu0 %v604
      %741 = vmatpush1.bf16.msra.mxu0 %v603
      %742 = vmatprep.subr.bf16.mxu0 %v606
      %743 = vmatpush1.bf16.msra.mxu0 %v605
      %744 = vmatprep.subr.bf16.mxu0 %v608
      %745 = vmatpush1.bf16.msra.mxu0 %v607
      %746 = vmatprep.subr.bf16.mxu0 %v610
      %747 = vmatpush1.bf16.msra.mxu0 %v609
      %748 = vmatprep.subr.bf16.mxu0 %v612
      %749 = vmatpush1.bf16.msra.mxu0 %v611
      %750 = vmatprep.subr.bf16.mxu0 %v614
      %751 = vmatpush1.bf16.msra.mxu0 %v613
      %752 = vmatprep.subr.bf16.mxu0 %v616
      %753 = vmatpush1.bf16.msra.mxu0 %v615
      %754 = vmatprep.subr.bf16.mxu0 %v618
      %755 = vmatpush1.bf16.msra.mxu0 %v617
      %756 = vmatprep.subr.bf16.mxu0 %v620
      %757 = vmatpush1.bf16.msra.mxu0 %v619
      %758 = vmatprep.subr.bf16.mxu0 %v622
      %759 = vmatpush1.bf16.msra.mxu0 %v621
      %760 = vmatprep.subr.bf16.mxu0 %v624
      %761 = vmatpush1.bf16.msra.mxu0 %v623
      %762 = vmatprep.subr.bf16.mxu0 %v626
      %763 = vmatpush1.bf16.msra.mxu0 %v625
      %764 = vmatprep.subr.bf16.mxu0 %v628
      %765 = vmatpush1.bf16.msra.mxu0 %v627
      %766 = vmatprep.subr.bf16.mxu0 %v630
      %767 = vmatpush1.bf16.msra.mxu0 %v629
      %768 = vmatprep.mubr.bf16.mxu0 %v370
      %769 = vmatmul.mubr.bf16.gmra.mrb[0].mxu0 %v363
      %v770 = vpop.f32.mrb[0].mxu0
      %v771 = vadd.f32 %v730, %v770
      %v772 = vpop.f32.mrb[0].mxu0
      %v773 = vadd.f32 %v732, %v772
      %v774 = vpop.f32.mrb[0].mxu0
      %v775 = vpop.f32.mrb[0].mxu0
      %776 = vdwg.mxu0
      %v778 = vcombine.high %v194, %v194
      %v780 = vunpack.c.l.s4 1983009808
      %v781 = vunpack.c.0.s8 %v780
      %v782 = vlaneseq
      %v783 = vshrl.u32 %v782, 7
      %v784 = vsub.s32 %v781, %v783
      %v785 = vrot.slane %v194, %v784
      %v787 = vunpack.c.l.s4 1983009808
      %v788 = vunpack.c.0.s8 %v787
      %v789 = vlaneseq
      %v790 = vshrl.u32 %v789, 7
      %v791 = vsub.s32 %v788, %v790
      %v792 = vrot.slane %v778, %v791
      %v793 = vcombine.high %v785, %v785
      %v794 = vcombine.high %v792, %v792
      %v863 = vunpack.c.l.b16 %v195
      %v864 = vunpack.c.h.b16 %v195
      %v865 = vunpack.c.l.b16 %v196
      %v866 = vunpack.c.h.b16 %v196
      %v867 = vunpack.c.l.b16 %v197
      %v868 = vunpack.c.h.b16 %v197
      %v869 = vunpack.c.l.b16 %v198
      %v870 = vunpack.c.h.b16 %v198
      %v871 = vunpack.c.l.b16 %v199
      %v872 = vunpack.c.h.b16 %v199
      %v873 = vunpack.c.l.b16 %v200
      %v874 = vunpack.c.h.b16 %v200
      %v875 = vunpack.c.l.b16 %v201
      %v876 = vunpack.c.h.b16 %v201
      %v877 = vunpack.c.l.b16 %v202
      %v878 = vunpack.c.h.b16 %v202
      %v879 = vunpack.c.l.b16 %v203
      %v880 = vunpack.c.h.b16 %v203
      %v881 = vunpack.c.l.b16 %v204
      %v882 = vunpack.c.h.b16 %v204
      %v883 = vunpack.c.l.b16 %v205
      %v884 = vunpack.c.h.b16 %v205
      %v885 = vunpack.c.l.b16 %v206
      %v886 = vunpack.c.h.b16 %v206
      %v887 = vunpack.c.l.b16 %v207
      %v888 = vunpack.c.h.b16 %v207
      %v889 = vunpack.c.l.b16 %v208
      %v890 = vunpack.c.h.b16 %v208
      %v891 = vunpack.c.l.b16 %v209
      %v892 = vunpack.c.h.b16 %v209
      %v893 = vunpack.c.l.b16 %v210
      %v894 = vunpack.c.h.b16 %v210
      %v895 = vunpack.c.l.b16 %v211
      %v896 = vunpack.c.h.b16 %v211
      %v897 = vunpack.c.l.b16 %v212
      %v898 = vunpack.c.h.b16 %v212
      %v899 = vunpack.c.l.b16 %v213
      %v900 = vunpack.c.h.b16 %v213
      %v901 = vunpack.c.l.b16 %v214
      %v902 = vunpack.c.h.b16 %v214
      %v903 = vunpack.c.l.b16 %v215
      %v904 = vunpack.c.h.b16 %v215
      %v905 = vunpack.c.l.b16 %v216
      %v906 = vunpack.c.h.b16 %v216
      %v907 = vunpack.c.l.b16 %v217
      %v908 = vunpack.c.h.b16 %v217
      %v909 = vunpack.c.l.b16 %v218
      %v910 = vunpack.c.h.b16 %v218
      %v911 = vunpack.c.l.b16 %v219
      %v912 = vunpack.c.h.b16 %v219
      %v913 = vunpack.c.l.b16 %v220
      %v914 = vunpack.c.h.b16 %v220
      %v915 = vunpack.c.l.b16 %v221
      %v916 = vunpack.c.h.b16 %v221
      %v917 = vunpack.c.l.b16 %v222
      %v918 = vunpack.c.h.b16 %v222
      %v919 = vunpack.c.l.b16 %v223
      %v920 = vunpack.c.h.b16 %v223
      %v921 = vunpack.c.l.b16 %v224
      %v922 = vunpack.c.h.b16 %v224
      %v923 = vunpack.c.l.b16 %v225
      %v924 = vunpack.c.h.b16 %v225
      %v925 = vunpack.c.l.b16 %v226
      %v926 = vunpack.c.h.b16 %v226
      %v927 = vunpack.c.l.b16 %v227
      %v928 = vunpack.c.h.b16 %v227
      %v929 = vunpack.c.l.b16 %v228
      %v930 = vunpack.c.h.b16 %v228
      %v931 = vunpack.c.l.b16 %v229
      %v932 = vunpack.c.h.b16 %v229
      %v933 = vunpack.c.l.b16 %v230
      %v934 = vunpack.c.h.b16 %v230
      %v935 = vunpack.c.l.b16 %v231
      %v936 = vunpack.c.h.b16 %v231
      %v937 = vunpack.c.l.b16 %v232
      %v938 = vunpack.c.h.b16 %v232
      %v939 = vunpack.c.l.b16 %v233
      %v940 = vunpack.c.h.b16 %v233
      %v941 = vunpack.c.l.b16 %v234
      %v942 = vunpack.c.h.b16 %v234
      %v943 = vunpack.c.l.b16 %v235
      %v944 = vunpack.c.h.b16 %v235
      %v945 = vunpack.c.l.b16 %v236
      %v946 = vunpack.c.h.b16 %v236
      %v947 = vunpack.c.l.b16 %v237
      %v948 = vunpack.c.h.b16 %v237
      %v949 = vunpack.c.l.b16 %v238
      %v950 = vunpack.c.h.b16 %v238
      %v951 = vunpack.c.l.b16 %v239
      %v952 = vunpack.c.h.b16 %v239
      %v953 = vunpack.c.l.b16 %v240
      %v954 = vunpack.c.h.b16 %v240
      %v955 = vunpack.c.l.b16 %v241
      %v956 = vunpack.c.h.b16 %v241
      %v957 = vunpack.c.l.b16 %v242
      %v958 = vunpack.c.h.b16 %v242
      %v959 = vunpack.c.l.b16 %v243
      %v960 = vunpack.c.h.b16 %v243
      %v961 = vunpack.c.l.b16 %v244
      %v962 = vunpack.c.h.b16 %v244
      %v963 = vunpack.c.l.b16 %v245
      %v964 = vunpack.c.h.b16 %v245
      %v965 = vunpack.c.l.b16 %v246
      %v966 = vunpack.c.h.b16 %v246
      %v967 = vunpack.c.l.b16 %v247
      %v968 = vunpack.c.h.b16 %v247
      %v969 = vunpack.c.l.b16 %v248
      %v970 = vunpack.c.h.b16 %v248
      %v971 = vunpack.c.l.b16 %v249
      %v972 = vunpack.c.h.b16 %v249
      %v973 = vunpack.c.l.b16 %v250
      %v974 = vunpack.c.h.b16 %v250
      %v975 = vunpack.c.l.b16 %v251
      %v976 = vunpack.c.h.b16 %v251
      %v977 = vunpack.c.l.b16 %v252
      %v978 = vunpack.c.h.b16 %v252
      %v979 = vunpack.c.l.b16 %v253
      %v980 = vunpack.c.h.b16 %v253
      %v981 = vunpack.c.l.b16 %v254
      %v982 = vunpack.c.h.b16 %v254
      %v983 = vunpack.c.l.b16 %v255
      %v984 = vunpack.c.h.b16 %v255
      %v985 = vunpack.c.l.b16 %v256
      %v986 = vunpack.c.h.b16 %v256
      %v987 = vunpack.c.l.b16 %v257
      %v988 = vunpack.c.h.b16 %v257
      %v989 = vunpack.c.l.b16 %v258
      %v990 = vunpack.c.h.b16 %v258
      %v991 = vpack.c.b16 %v865, %v863
      %v992 = vpack.c.b16 %v866, %v864
      %v993 = vpack.c.b16 %v869, %v867
      %v994 = vpack.c.b16 %v870, %v868
      %v995 = vpack.c.b16 %v873, %v871
      %v996 = vpack.c.b16 %v874, %v872
      %v997 = vpack.c.b16 %v877, %v875
      %v998 = vpack.c.b16 %v878, %v876
      %v999 = vpack.c.b16 %v881, %v879
      %v1000 = vpack.c.b16 %v882, %v880
      %v1001 = vpack.c.b16 %v885, %v883
      %v1002 = vpack.c.b16 %v886, %v884
      %v1003 = vpack.c.b16 %v889, %v887
      %v1004 = vpack.c.b16 %v890, %v888
      %v1005 = vpack.c.b16 %v893, %v891
      %v1006 = vpack.c.b16 %v894, %v892
      %v1007 = vpack.c.b16 %v897, %v895
      %v1008 = vpack.c.b16 %v898, %v896
      %v1009 = vpack.c.b16 %v901, %v899
      %v1010 = vpack.c.b16 %v902, %v900
      %v1011 = vpack.c.b16 %v905, %v903
      %v1012 = vpack.c.b16 %v906, %v904
      %v1013 = vpack.c.b16 %v909, %v907
      %v1014 = vpack.c.b16 %v910, %v908
      %v1015 = vpack.c.b16 %v913, %v911
      %v1016 = vpack.c.b16 %v914, %v912
      %v1017 = vpack.c.b16 %v917, %v915
      %v1018 = vpack.c.b16 %v918, %v916
      %v1019 = vpack.c.b16 %v921, %v919
      %v1020 = vpack.c.b16 %v922, %v920
      %v1021 = vpack.c.b16 %v925, %v923
      %v1022 = vpack.c.b16 %v926, %v924
      %v1023 = vpack.c.b16 %v929, %v927
      %v1024 = vpack.c.b16 %v930, %v928
      %v1025 = vpack.c.b16 %v933, %v931
      %v1026 = vpack.c.b16 %v934, %v932
      %v1027 = vpack.c.b16 %v937, %v935
      %v1028 = vpack.c.b16 %v938, %v936
      %v1029 = vpack.c.b16 %v941, %v939
      %v1030 = vpack.c.b16 %v942, %v940
      %v1031 = vpack.c.b16 %v945, %v943
      %v1032 = vpack.c.b16 %v946, %v944
      %v1033 = vpack.c.b16 %v949, %v947
      %v1034 = vpack.c.b16 %v950, %v948
      %v1035 = vpack.c.b16 %v953, %v951
      %v1036 = vpack.c.b16 %v954, %v952
      %v1037 = vpack.c.b16 %v957, %v955
      %v1038 = vpack.c.b16 %v958, %v956
      %v1039 = vpack.c.b16 %v961, %v959
      %v1040 = vpack.c.b16 %v962, %v960
      %v1041 = vpack.c.b16 %v965, %v963
      %v1042 = vpack.c.b16 %v966, %v964
      %v1043 = vpack.c.b16 %v969, %v967
      %v1044 = vpack.c.b16 %v970, %v968
      %v1045 = vpack.c.b16 %v973, %v971
      %v1046 = vpack.c.b16 %v974, %v972
      %v1047 = vpack.c.b16 %v977, %v975
      %v1048 = vpack.c.b16 %v978, %v976
      %v1049 = vpack.c.b16 %v981, %v979
      %v1050 = vpack.c.b16 %v982, %v980
      %v1051 = vpack.c.b16 %v985, %v983
      %v1052 = vpack.c.b16 %v986, %v984
      %v1053 = vpack.c.b16 %v989, %v987
      %v1054 = vpack.c.b16 %v990, %v988
      %1119 = vmatprep.subr.bf16.mxu0 %v992
      %1120 = vmatpush1.bf16.msra.mxu0 %v991
      %1121 = vmatprep.subr.bf16.mxu0 %v994
      %1122 = vmatpush1.bf16.msra.mxu0 %v993
      %1123 = vmatprep.subr.bf16.mxu0 %v996
      %1124 = vmatpush1.bf16.msra.mxu0 %v995
      %1125 = vmatprep.subr.bf16.mxu0 %v998
      %1126 = vmatpush1.bf16.msra.mxu0 %v997
      %1127 = vmatprep.subr.bf16.mxu0 %v1000
      %1128 = vmatpush1.bf16.msra.mxu0 %v999
      %1129 = vmatprep.subr.bf16.mxu0 %v1002
      %1130 = vmatpush1.bf16.msra.mxu0 %v1001
      %1131 = vmatprep.subr.bf16.mxu0 %v1004
      %1132 = vmatpush1.bf16.msra.mxu0 %v1003
      %1133 = vmatprep.subr.bf16.mxu0 %v1006
      %1134 = vmatpush1.bf16.msra.mxu0 %v1005
      %1135 = vmatprep.subr.bf16.mxu0 %v1008
      %1136 = vmatpush1.bf16.msra.mxu0 %v1007
      %1137 = vmatprep.subr.bf16.mxu0 %v1010
      %1138 = vmatpush1.bf16.msra.mxu0 %v1009
      %1139 = vmatprep.subr.bf16.mxu0 %v1012
      %1140 = vmatpush1.bf16.msra.mxu0 %v1011
      %1141 = vmatprep.subr.bf16.mxu0 %v1014
      %1142 = vmatpush1.bf16.msra.mxu0 %v1013
      %1143 = vmatprep.subr.bf16.mxu0 %v1016
      %1144 = vmatpush1.bf16.msra.mxu0 %v1015
      %1145 = vmatprep.subr.bf16.mxu0 %v1018
      %1146 = vmatpush1.bf16.msra.mxu0 %v1017
      %1147 = vmatprep.subr.bf16.mxu0 %v1020
      %1148 = vmatpush1.bf16.msra.mxu0 %v1019
      %1149 = vmatprep.subr.bf16.mxu0 %v1022
      %1150 = vmatpush1.bf16.msra.mxu0 %v1021
      %1151 = vmatprep.mubr.bf16.mxu0 %v793
      %1152 = vmatmul.mubr.bf16.gmra.mrb[0].mxu0 %v785
      %v1153 = vpop.f32.mrb[0].mxu0
      %v1154 = vadd.f32 %v771, %v1153
      %v1155 = vpop.f32.mrb[0].mxu0
      %v1156 = vadd.f32 %v773, %v1155
      %v1157 = vpop.f32.mrb[0].mxu0
      %v1158 = vpop.f32.mrb[0].mxu0
      %1159 = vdwg.mxu0
      %1160 = vmatprep.subr.bf16.mxu0 %v1024
      %1161 = vmatpush1.bf16.msra.mxu0 %v1023
      %1162 = vmatprep.subr.bf16.mxu0 %v1026
      %1163 = vmatpush1.bf16.msra.mxu0 %v1025
      %1164 = vmatprep.subr.bf16.mxu0 %v1028
      %1165 = vmatpush1.bf16.msra.mxu0 %v1027
      %1166 = vmatprep.subr.bf16.mxu0 %v1030
      %1167 = vmatpush1.bf16.msra.mxu0 %v1029
      %1168 = vmatprep.subr.bf16.mxu0 %v1032
      %1169 = vmatpush1.bf16.msra.mxu0 %v1031
      %1170 = vmatprep.subr.bf16.mxu0 %v1034
      %1171 = vmatpush1.bf16.msra.mxu0 %v1033
      %1172 = vmatprep.subr.bf16.mxu0 %v1036
      %1173 = vmatpush1.bf16.msra.mxu0 %v1035
      %1174 = vmatprep.subr.bf16.mxu0 %v1038
      %1175 = vmatpush1.bf16.msra.mxu0 %v1037
      %1176 = vmatprep.subr.bf16.mxu0 %v1040
      %1177 = vmatpush1.bf16.msra.mxu0 %v1039
      %1178 = vmatprep.subr.bf16.mxu0 %v1042
      %1179 = vmatpush1.bf16.msra.mxu0 %v1041
      %1180 = vmatprep.subr.bf16.mxu0 %v1044
      %1181 = vmatpush1.bf16.msra.mxu0 %v1043
      %1182 = vmatprep.subr.bf16.mxu0 %v1046
      %1183 = vmatpush1.bf16.msra.mxu0 %v1045
      %1184 = vmatprep.subr.bf16.mxu0 %v1048
      %1185 = vmatpush1.bf16.msra.mxu0 %v1047
      %1186 = vmatprep.subr.bf16.mxu0 %v1050
      %1187 = vmatpush1.bf16.msra.mxu0 %v1049
      %1188 = vmatprep.subr.bf16.mxu0 %v1052
      %1189 = vmatpush1.bf16.msra.mxu0 %v1051
      %1190 = vmatprep.subr.bf16.mxu0 %v1054
      %1191 = vmatpush1.bf16.msra.mxu0 %v1053
      %1192 = vmatprep.mubr.bf16.mxu0 %v794
      %1193 = vmatmul.mubr.bf16.gmra.mrb[0].mxu0 %v792
      %v1194 = vpop.f32.mrb[0].mxu0
      %v1195 = vadd.f32 %v1154, %v1194
      %v1196 = vpop.f32.mrb[0].mxu0
      %v1197 = vadd.f32 %v1156, %v1196
      %v1198 = vpop.f32.mrb[0].mxu0
      %v1199 = vpop.f32.mrb[0].mxu0
      %1200 = vdwg.mxu0
      %s1201 = sadd.s32 %s19, 1
      %s1202 = smul.u32 %s1201, 4
      %s1203 = smul.addr %s1202, 2
      %s1204 = scalar_lea.vmem %s182, %s1203
      %v1205 = vld [vmem:[%s1204] sm:$0x55]
      %s1206 = scalar_lea.vmem %s1, 1024
      %v1207 = vld [vmem:[%s1206] sm:$0xff]
      %v1208 = vld [vmem:[%s1206 + $0x8] sm:$0xff]
      %v1209 = vld [vmem:[%s1206 + $0x10] sm:$0xff]
      %v1210 = vld [vmem:[%s1206 + $0x18] sm:$0xff]
      %v1211 = vld [vmem:[%s1206 + $0x20] sm:$0xff]
      %v1212 = vld [vmem:[%s1206 + $0x28] sm:$0xff]
      %v1213 = vld [vmem:[%s1206 + $0x30] sm:$0xff]
      %v1214 = vld [vmem:[%s1206 + $0x38] sm:$0xff]
      %v1215 = vld [vmem:[%s1206 + $0x40] sm:$0xff]
      %v1216 = vld [vmem:[%s1206 + $0x48] sm:$0xff]
      %v1217 = vld [vmem:[%s1206 + $0x50] sm:$0xff]
      %v1218 = vld [vmem:[%s1206 + $0x58] sm:$0xff]
      %v1219 = vld [vmem:[%s1206 + $0x60] sm:$0xff]
      %v1220 = vld [vmem:[%s1206 + $0x68] sm:$0xff]
      %v1221 = vld [vmem:[%s1206 + $0x70] sm:$0xff]
      %v1222 = vld [vmem:[%s1206 + $0x78] sm:$0xff]
      %v1223 = vld [vmem:[%s1206 + $0x80] sm:$0xff]
      %v1224 = vld [vmem:[%s1206 + $0x88] sm:$0xff]
      %v1225 = vld [vmem:[%s1206 + $0x90] sm:$0xff]
      %v1226 = vld [vmem:[%s1206 + $0x98] sm:$0xff]
      %v1227 = vld [vmem:[%s1206 + $0xa0] sm:$0xff]
      %v1228 = vld [vmem:[%s1206 + $0xa8] sm:$0xff]
      %v1229 = vld [vmem:[%s1206 + $0xb0] sm:$0xff]
      %v1230 = vld [vmem:[%s1206 + $0xb8] sm:$0xff]
      %v1231 = vld [vmem:[%s1206 + $0xc0] sm:$0xff]
      %v1232 = vld [vmem:[%s1206 + $0xc8] sm:$0xff]
      %v1233 = vld [vmem:[%s1206 + $0xd0] sm:$0xff]
      %v1234 = vld [vmem:[%s1206 + $0xd8] sm:$0xff]
      %v1235 = vld [vmem:[%s1206 + $0xe0] sm:$0xff]
      %v1236 = vld [vmem:[%s1206 + $0xe8] sm:$0xff]
      %v1237 = vld [vmem:[%s1206 + $0xf0] sm:$0xff]
      %v1238 = vld [vmem:[%s1206 + $0xf8] sm:$0xff]
      %v1239 = vld [vmem:[%s1206 + $0x100] sm:$0xff]
      %v1240 = vld [vmem:[%s1206 + $0x108] sm:$0xff]
      %v1241 = vld [vmem:[%s1206 + $0x110] sm:$0xff]
      %v1242 = vld [vmem:[%s1206 + $0x118] sm:$0xff]
      %v1243 = vld [vmem:[%s1206 + $0x120] sm:$0xff]
      %v1244 = vld [vmem:[%s1206 + $0x128] sm:$0xff]
      %v1245 = vld [vmem:[%s1206 + $0x130] sm:$0xff]
      %v1246 = vld [vmem:[%s1206 + $0x138] sm:$0xff]
      %v1247 = vld [vmem:[%s1206 + $0x140] sm:$0xff]
      %v1248 = vld [vmem:[%s1206 + $0x148] sm:$0xff]
      %v1249 = vld [vmem:[%s1206 + $0x150] sm:$0xff]
      %v1250 = vld [vmem:[%s1206 + $0x158] sm:$0xff]
      %v1251 = vld [vmem:[%s1206 + $0x160] sm:$0xff]
      %v1252 = vld [vmem:[%s1206 + $0x168] sm:$0xff]
      %v1253 = vld [vmem:[%s1206 + $0x170] sm:$0xff]
      %v1254 = vld [vmem:[%s1206 + $0x178] sm:$0xff]
      %v1255 = vld [vmem:[%s1206 + $0x180] sm:$0xff]
      %v1256 = vld [vmem:[%s1206 + $0x188] sm:$0xff]
      %v1257 = vld [vmem:[%s1206 + $0x190] sm:$0xff]
      %v1258 = vld [vmem:[%s1206 + $0x198] sm:$0xff]
      %v1259 = vld [vmem:[%s1206 + $0x1a0] sm:$0xff]
      %v1260 = vld [vmem:[%s1206 + $0x1a8] sm:$0xff]
      %v1261 = vld [vmem:[%s1206 + $0x1b0] sm:$0xff]
      %v1262 = vld [vmem:[%s1206 + $0x1b8] sm:$0xff]
      %v1263 = vld [vmem:[%s1206 + $0x1c0] sm:$0xff]
      %v1264 = vld [vmem:[%s1206 + $0x1c8] sm:$0xff]
      %v1265 = vld [vmem:[%s1206 + $0x1d0] sm:$0xff]
      %v1266 = vld [vmem:[%s1206 + $0x1d8] sm:$0xff]
      %v1267 = vld [vmem:[%s1206 + $0x1e0] sm:$0xff]
      %v1268 = vld [vmem:[%s1206 + $0x1e8] sm:$0xff]
      %v1269 = vld [vmem:[%s1206 + $0x1f0] sm:$0xff]
      %v1270 = vld [vmem:[%s1206 + $0x1f8] sm:$0xff]
      %v1272 = vcombine.high %v1205, %v1205
      %v1274 = vunpack.c.l.s4 1983009808
      %v1275 = vunpack.c.0.s8 %v1274
      %v1276 = vlaneseq
      %v1277 = vshrl.u32 %v1276, 7
      %v1278 = vsub.s32 %v1275, %v1277
      %v1279 = vrot.slane %v1205, %v1278
      %v1281 = vunpack.c.l.s4 1983009808
      %v1282 = vunpack.c.0.s8 %v1281
      %v1283 = vlaneseq
      %v1284 = vshrl.u32 %v1283, 7
      %v1285 = vsub.s32 %v1282, %v1284
      %v1286 = vrot.slane %v1272, %v1285
      %v1287 = vcombine.high %v1279, %v1279
      %v1288 = vcombine.high %v1286, %v1286
      %v1357 = vunpack.c.l.b16 %v1207
      %v1358 = vunpack.c.h.b16 %v1207
      %v1359 = vunpack.c.l.b16 %v1208
      %v1360 = vunpack.c.h.b16 %v1208
      %v1361 = vunpack.c.l.b16 %v1209
      %v1362 = vunpack.c.h.b16 %v1209
      %v1363 = vunpack.c.l.b16 %v1210
      %v1364 = vunpack.c.h.b16 %v1210
      %v1365 = vunpack.c.l.b16 %v1211
      %v1366 = vunpack.c.h.b16 %v1211
      %v1367 = vunpack.c.l.b16 %v1212
      %v1368 = vunpack.c.h.b16 %v1212
      %v1369 = vunpack.c.l.b16 %v1213
      %v1370 = vunpack.c.h.b16 %v1213
      %v1371 = vunpack.c.l.b16 %v1214
      %v1372 = vunpack.c.h.b16 %v1214
      %v1373 = vunpack.c.l.b16 %v1215
      %v1374 = vunpack.c.h.b16 %v1215
      %v1375 = vunpack.c.l.b16 %v1216
      %v1376 = vunpack.c.h.b16 %v1216
      %v1377 = vunpack.c.l.b16 %v1217
      %v1378 = vunpack.c.h.b16 %v1217
      %v1379 = vunpack.c.l.b16 %v1218
      %v1380 = vunpack.c.h.b16 %v1218
      %v1381 = vunpack.c.l.b16 %v1219
      %v1382 = vunpack.c.h.b16 %v1219
      %v1383 = vunpack.c.l.b16 %v1220
      %v1384 = vunpack.c.h.b16 %v1220
      %v1385 = vunpack.c.l.b16 %v1221
      %v1386 = vunpack.c.h.b16 %v1221
      %v1387 = vunpack.c.l.b16 %v1222
      %v1388 = vunpack.c.h.b16 %v1222
      %v1389 = vunpack.c.l.b16 %v1223
      %v1390 = vunpack.c.h.b16 %v1223
      %v1391 = vunpack.c.l.b16 %v1224
      %v1392 = vunpack.c.h.b16 %v1224
      %v1393 = vunpack.c.l.b16 %v1225
      %v1394 = vunpack.c.h.b16 %v1225
      %v1395 = vunpack.c.l.b16 %v1226
      %v1396 = vunpack.c.h.b16 %v1226
      %v1397 = vunpack.c.l.b16 %v1227
      %v1398 = vunpack.c.h.b16 %v1227
      %v1399 = vunpack.c.l.b16 %v1228
      %v1400 = vunpack.c.h.b16 %v1228
      %v1401 = vunpack.c.l.b16 %v1229
      %v1402 = vunpack.c.h.b16 %v1229
      %v1403 = vunpack.c.l.b16 %v1230
      %v1404 = vunpack.c.h.b16 %v1230
      %v1405 = vunpack.c.l.b16 %v1231
      %v1406 = vunpack.c.h.b16 %v1231
      %v1407 = vunpack.c.l.b16 %v1232
      %v1408 = vunpack.c.h.b16 %v1232
      %v1409 = vunpack.c.l.b16 %v1233
      %v1410 = vunpack.c.h.b16 %v1233
      %v1411 = vunpack.c.l.b16 %v1234
      %v1412 = vunpack.c.h.b16 %v1234
      %v1413 = vunpack.c.l.b16 %v1235
      %v1414 = vunpack.c.h.b16 %v1235
      %v1415 = vunpack.c.l.b16 %v1236
      %v1416 = vunpack.c.h.b16 %v1236
      %v1417 = vunpack.c.l.b16 %v1237
      %v1418 = vunpack.c.h.b16 %v1237
      %v1419 = vunpack.c.l.b16 %v1238
      %v1420 = vunpack.c.h.b16 %v1238
      %v1421 = vunpack.c.l.b16 %v1239
      %v1422 = vunpack.c.h.b16 %v1239
      %v1423 = vunpack.c.l.b16 %v1240
      %v1424 = vunpack.c.h.b16 %v1240
      %v1425 = vunpack.c.l.b16 %v1241
      %v1426 = vunpack.c.h.b16 %v1241
      %v1427 = vunpack.c.l.b16 %v1242
      %v1428 = vunpack.c.h.b16 %v1242
      %v1429 = vunpack.c.l.b16 %v1243
      %v1430 = vunpack.c.h.b16 %v1243
      %v1431 = vunpack.c.l.b16 %v1244
      %v1432 = vunpack.c.h.b16 %v1244
      %v1433 = vunpack.c.l.b16 %v1245
      %v1434 = vunpack.c.h.b16 %v1245
      %v1435 = vunpack.c.l.b16 %v1246
      %v1436 = vunpack.c.h.b16 %v1246
      %v1437 = vunpack.c.l.b16 %v1247
      %v1438 = vunpack.c.h.b16 %v1247
      %v1439 = vunpack.c.l.b16 %v1248
      %v1440 = vunpack.c.h.b16 %v1248
      %v1441 = vunpack.c.l.b16 %v1249
      %v1442 = vunpack.c.h.b16 %v1249
      %v1443 = vunpack.c.l.b16 %v1250
      %v1444 = vunpack.c.h.b16 %v1250
      %v1445 = vunpack.c.l.b16 %v1251
      %v1446 = vunpack.c.h.b16 %v1251
      %v1447 = vunpack.c.l.b16 %v1252
      %v1448 = vunpack.c.h.b16 %v1252
      %v1449 = vunpack.c.l.b16 %v1253
      %v1450 = vunpack.c.h.b16 %v1253
      %v1451 = vunpack.c.l.b16 %v1254
      %v1452 = vunpack.c.h.b16 %v1254
      %v1453 = vunpack.c.l.b16 %v1255
      %v1454 = vunpack.c.h.b16 %v1255
      %v1455 = vunpack.c.l.b16 %v1256
      %v1456 = vunpack.c.h.b16 %v1256
      %v1457 = vunpack.c.l.b16 %v1257
      %v1458 = vunpack.c.h.b16 %v1257
      %v1459 = vunpack.c.l.b16 %v1258
      %v1460 = vunpack.c.h.b16 %v1258
      %v1461 = vunpack.c.l.b16 %v1259
      %v1462 = vunpack.c.h.b16 %v1259
      %v1463 = vunpack.c.l.b16 %v1260
      %v1464 = vunpack.c.h.b16 %v1260
      %v1465 = vunpack.c.l.b16 %v1261
      %v1466 = vunpack.c.h.b16 %v1261
      %v1467 = vunpack.c.l.b16 %v1262
      %v1468 = vunpack.c.h.b16 %v1262
      %v1469 = vunpack.c.l.b16 %v1263
      %v1470 = vunpack.c.h.b16 %v1263
      %v1471 = vunpack.c.l.b16 %v1264
      %v1472 = vunpack.c.h.b16 %v1264
      %v1473 = vunpack.c.l.b16 %v1265
      %v1474 = vunpack.c.h.b16 %v1265
      %v1475 = vunpack.c.l.b16 %v1266
      %v1476 = vunpack.c.h.b16 %v1266
      %v1477 = vunpack.c.l.b16 %v1267
      %v1478 = vunpack.c.h.b16 %v1267
      %v1479 = vunpack.c.l.b16 %v1268
      %v1480 = vunpack.c.h.b16 %v1268
      %v1481 = vunpack.c.l.b16 %v1269
      %v1482 = vunpack.c.h.b16 %v1269
      %v1483 = vunpack.c.l.b16 %v1270
      %v1484 = vunpack.c.h.b16 %v1270
      %v1485 = vpack.c.b16 %v1359, %v1357
      %v1486 = vpack.c.b16 %v1360, %v1358
      %v1487 = vpack.c.b16 %v1363, %v1361
      %v1488 = vpack.c.b16 %v1364, %v1362
      %v1489 = vpack.c.b16 %v1367, %v1365
      %v1490 = vpack.c.b16 %v1368, %v1366
      %v1491 = vpack.c.b16 %v1371, %v1369
      %v1492 = vpack.c.b16 %v1372, %v1370
      %v1493 = vpack.c.b16 %v1375, %v1373
      %v1494 = vpack.c.b16 %v1376, %v1374
      %v1495 = vpack.c.b16 %v1379, %v1377
      %v1496 = vpack.c.b16 %v1380, %v1378
      %v1497 = vpack.c.b16 %v1383, %v1381
      %v1498 = vpack.c.b16 %v1384, %v1382
      %v1499 = vpack.c.b16 %v1387, %v1385
      %v1500 = vpack.c.b16 %v1388, %v1386
      %v1501 = vpack.c.b16 %v1391, %v1389
      %v1502 = vpack.c.b16 %v1392, %v1390
      %v1503 = vpack.c.b16 %v1395, %v1393
      %v1504 = vpack.c.b16 %v1396, %v1394
      %v1505 = vpack.c.b16 %v1399, %v1397
      %v1506 = vpack.c.b16 %v1400, %v1398
      %v1507 = vpack.c.b16 %v1403, %v1401
      %v1508 = vpack.c.b16 %v1404, %v1402
      %v1509 = vpack.c.b16 %v1407, %v1405
      %v1510 = vpack.c.b16 %v1408, %v1406
      %v1511 = vpack.c.b16 %v1411, %v1409
      %v1512 = vpack.c.b16 %v1412, %v1410
      %v1513 = vpack.c.b16 %v1415, %v1413
      %v1514 = vpack.c.b16 %v1416, %v1414
      %v1515 = vpack.c.b16 %v1419, %v1417
      %v1516 = vpack.c.b16 %v1420, %v1418
      %v1517 = vpack.c.b16 %v1423, %v1421
      %v1518 = vpack.c.b16 %v1424, %v1422
      %v1519 = vpack.c.b16 %v1427, %v1425
      %v1520 = vpack.c.b16 %v1428, %v1426
      %v1521 = vpack.c.b16 %v1431, %v1429
      %v1522 = vpack.c.b16 %v1432, %v1430
      %v1523 = vpack.c.b16 %v1435, %v1433
      %v1524 = vpack.c.b16 %v1436, %v1434
      %v1525 = vpack.c.b16 %v1439, %v1437
      %v1526 = vpack.c.b16 %v1440, %v1438
      %v1527 = vpack.c.b16 %v1443, %v1441
      %v1528 = vpack.c.b16 %v1444, %v1442
      %v1529 = vpack.c.b16 %v1447, %v1445
      %v1530 = vpack.c.b16 %v1448, %v1446
      %v1531 = vpack.c.b16 %v1451, %v1449
      %v1532 = vpack.c.b16 %v1452, %v1450
      %v1533 = vpack.c.b16 %v1455, %v1453
      %v1534 = vpack.c.b16 %v1456, %v1454
      %v1535 = vpack.c.b16 %v1459, %v1457
      %v1536 = vpack.c.b16 %v1460, %v1458
      %v1537 = vpack.c.b16 %v1463, %v1461
      %v1538 = vpack.c.b16 %v1464, %v1462
      %v1539 = vpack.c.b16 %v1467, %v1465
      %v1540 = vpack.c.b16 %v1468, %v1466
      %v1541 = vpack.c.b16 %v1471, %v1469
      %v1542 = vpack.c.b16 %v1472, %v1470
      %v1543 = vpack.c.b16 %v1475, %v1473
      %v1544 = vpack.c.b16 %v1476, %v1474
      %v1545 = vpack.c.b16 %v1479, %v1477
      %v1546 = vpack.c.b16 %v1480, %v1478
      %v1547 = vpack.c.b16 %v1483, %v1481
      %v1548 = vpack.c.b16 %v1484, %v1482
      %1613 = vmatprep.subr.bf16.mxu0 %v1486
      %1614 = vmatpush1.bf16.msra.mxu0 %v1485
      %1615 = vmatprep.subr.bf16.mxu0 %v1488
      %1616 = vmatpush1.bf16.msra.mxu0 %v1487
      %1617 = vmatprep.subr.bf16.mxu0 %v1490
      %1618 = vmatpush1.bf16.msra.mxu0 %v1489
      %1619 = vmatprep.subr.bf16.mxu0 %v1492
      %1620 = vmatpush1.bf16.msra.mxu0 %v1491
      %1621 = vmatprep.subr.bf16.mxu0 %v1494
      %1622 = vmatpush1.bf16.msra.mxu0 %v1493
      %1623 = vmatprep.subr.bf16.mxu0 %v1496
      %1624 = vmatpush1.bf16.msra.mxu0 %v1495
      %1625 = vmatprep.subr.bf16.mxu0 %v1498
      %1626 = vmatpush1.bf16.msra.mxu0 %v1497
      %1627 = vmatprep.subr.bf16.mxu0 %v1500
      %1628 = vmatpush1.bf16.msra.mxu0 %v1499
      %1629 = vmatprep.subr.bf16.mxu0 %v1502
      %1630 = vmatpush1.bf16.msra.mxu0 %v1501
      %1631 = vmatprep.subr.bf16.mxu0 %v1504
      %1632 = vmatpush1.bf16.msra.mxu0 %v1503
      %1633 = vmatprep.subr.bf16.mxu0 %v1506
      %1634 = vmatpush1.bf16.msra.mxu0 %v1505
      %1635 = vmatprep.subr.bf16.mxu0 %v1508
      %1636 = vmatpush1.bf16.msra.mxu0 %v1507
      %1637 = vmatprep.subr.bf16.mxu0 %v1510
      %1638 = vmatpush1.bf16.msra.mxu0 %v1509
      %1639 = vmatprep.subr.bf16.mxu0 %v1512
      %1640 = vmatpush1.bf16.msra.mxu0 %v1511
      %1641 = vmatprep.subr.bf16.mxu0 %v1514
      %1642 = vmatpush1.bf16.msra.mxu0 %v1513
      %1643 = vmatprep.subr.bf16.mxu0 %v1516
      %1644 = vmatpush1.bf16.msra.mxu0 %v1515
      %1645 = vmatprep.mubr.bf16.mxu0 %v1287
      %1646 = vmatmul.mubr.bf16.gmra.mrb[0].mxu0 %v1279
      %v1647 = vpop.f32.mrb[0].mxu0
      %v1648 = vadd.f32 0.0, %v1647
      %v1649 = vpop.f32.mrb[0].mxu0
      %v1650 = vadd.f32 0.0, %v1649
      %v1651 = vpop.f32.mrb[0].mxu0
      %v1652 = vpop.f32.mrb[0].mxu0
      %1653 = vdwg.mxu0
      %1654 = vmatprep.subr.bf16.mxu0 %v1518
      %1655 = vmatpush1.bf16.msra.mxu0 %v1517
      %1656 = vmatprep.subr.bf16.mxu0 %v1520
      %1657 = vmatpush1.bf16.msra.mxu0 %v1519
      %1658 = vmatprep.subr.bf16.mxu0 %v1522
      %1659 = vmatpush1.bf16.msra.mxu0 %v1521
      %1660 = vmatprep.subr.bf16.mxu0 %v1524
      %1661 = vmatpush1.bf16.msra.mxu0 %v1523
      %1662 = vmatprep.subr.bf16.mxu0 %v1526
      %1663 = vmatpush1.bf16.msra.mxu0 %v1525
      %1664 = vmatprep.subr.bf16.mxu0 %v1528
      %1665 = vmatpush1.bf16.msra.mxu0 %v1527
      %1666 = vmatprep.subr.bf16.mxu0 %v1530
      %1667 = vmatpush1.bf16.msra.mxu0 %v1529
      %1668 = vmatprep.subr.bf16.mxu0 %v1532
      %1669 = vmatpush1.bf16.msra.mxu0 %v1531
      %1670 = vmatprep.subr.bf16.mxu0 %v1534
      %1671 = vmatpush1.bf16.msra.mxu0 %v1533
      %1672 = vmatprep.subr.bf16.mxu0 %v1536
      %1673 = vmatpush1.bf16.msra.mxu0 %v1535
      %1674 = vmatprep.subr.bf16.mxu0 %v1538
      %1675 = vmatpush1.bf16.msra.mxu0 %v1537
      %1676 = vmatprep.subr.bf16.mxu0 %v1540
      %1677 = vmatpush1.bf16.msra.mxu0 %v1539
      %1678 = vmatprep.subr.bf16.mxu0 %v1542
      %1679 = vmatpush1.bf16.msra.mxu0 %v1541
      %1680 = vmatprep.subr.bf16.mxu0 %v1544
      %1681 = vmatpush1.bf16.msra.mxu0 %v1543
      %1682 = vmatprep.subr.bf16.mxu0 %v1546
      %1683 = vmatpush1.bf16.msra.mxu0 %v1545
      %1684 = vmatprep.subr.bf16.mxu0 %v1548
      %1685 = vmatpush1.bf16.msra.mxu0 %v1547
      %1686 = vmatprep.mubr.bf16.mxu0 %v1288
      %1687 = vmatmul.mubr.bf16.gmra.mrb[0].mxu0 %v1286
      %v1688 = vpop.f32.mrb[0].mxu0
      %v1689 = vadd.f32 %v1648, %v1688
      %v1690 = vpop.f32.mrb[0].mxu0
      %v1691 = vadd.f32 %v1650, %v1690
      %v1692 = vpop.f32.mrb[0].mxu0
      %v1693 = vpop.f32.mrb[0].mxu0
      %1694 = vdwg.mxu0
      %v1695 = vadd.f32 %v1195, %v1689
      %v1696 = vadd.f32 %v1197, %v1691
      %v1697 = vld [vmem:[%s1204] sm:$0xff]
      %s1698 = scalar_lea.vmem %s1, 1536
      %v1699 = vld [vmem:[%s1698] sm:$0xff]
      %v1700 = vld [vmem:[%s1698 + $0x8] sm:$0xff]
      %v1701 = vld [vmem:[%s1698 + $0x10] sm:$0xff]
      %v1702 = vld [vmem:[%s1698 + $0x18] sm:$0xff]
      %v1703 = vld [vmem:[%s1698 + $0x20] sm:$0xff]
      %v1704 = vld [vmem:[%s1698 + $0x28] sm:$0xff]
      %v1705 = vld [vmem:[%s1698 + $0x30] sm:$0xff]
      %v1706 = vld [vmem:[%s1698 + $0x38] sm:$0xff]
      %v1707 = vld [vmem:[%s1698 + $0x40] sm:$0xff]
      %v1708 = vld [vmem:[%s1698 + $0x48] sm:$0xff]
      %v1709 = vld [vmem:[%s1698 + $0x50] sm:$0xff]
      %v1710 = vld [vmem:[%s1698 + $0x58] sm:$0xff]
      %v1711 = vld [vmem:[%s1698 + $0x60] sm:$0xff]
      %v1712 = vld [vmem:[%s1698 + $0x68] sm:$0xff]
      %v1713 = vld [vmem:[%s1698 + $0x70] sm:$0xff]
      %v1714 = vld [vmem:[%s1698 + $0x78] sm:$0xff]
      %v1715 = vld [vmem:[%s1698 + $0x80] sm:$0xff]
      %v1716 = vld [vmem:[%s1698 + $0x88] sm:$0xff]
      %v1717 = vld [vmem:[%s1698 + $0x90] sm:$0xff]
      %v1718 = vld [vmem:[%s1698 + $0x98] sm:$0xff]
      %v1719 = vld [vmem:[%s1698 + $0xa0] sm:$0xff]
      %v1720 = vld [vmem:[%s1698 + $0xa8] sm:$0xff]
      %v1721 = vld [vmem:[%s1698 + $0xb0] sm:$0xff]
      %v1722 = vld [vmem:[%s1698 + $0xb8] sm:$0xff]
      %v1723 = vld [vmem:[%s1698 + $0xc0] sm:$0xff]
      %v1724 = vld [vmem:[%s1698 + $0xc8] sm:$0xff]
      %v1725 = vld [vmem:[%s1698 + $0xd0] sm:$0xff]
      %v1726 = vld [vmem:[%s1698 + $0xd8] sm:$0xff]
      %v1727 = vld [vmem:[%s1698 + $0xe0] sm:$0xff]
      %v1728 = vld [vmem:[%s1698 + $0xe8] sm:$0xff]
      %v1729 = vld [vmem:[%s1698 + $0xf0] sm:$0xff]
      %v1730 = vld [vmem:[%s1698 + $0xf8] sm:$0xff]
      %v1731 = vld [vmem:[%s1698 + $0x100] sm:$0xff]
      %v1732 = vld [vmem:[%s1698 + $0x108] sm:$0xff]
      %v1733 = vld [vmem:[%s1698 + $0x110] sm:$0xff]
      %v1734 = vld [vmem:[%s1698 + $0x118] sm:$0xff]
      %v1735 = vld [vmem:[%s1698 + $0x120] sm:$0xff]
      %v1736 = vld [vmem:[%s1698 + $0x128] sm:$0xff]
      %v1737 = vld [vmem:[%s1698 + $0x130] sm:$0xff]
      %v1738 = vld [vmem:[%s1698 + $0x138] sm:$0xff]
      %v1739 = vld [vmem:[%s1698 + $0x140] sm:$0xff]
      %v1740 = vld [vmem:[%s1698 + $0x148] sm:$0xff]
      %v1741 = vld [vmem:[%s1698 + $0x150] sm:$0xff]
      %v1742 = vld [vmem:[%s1698 + $0x158] sm:$0xff]
      %v1743 = vld [vmem:[%s1698 + $0x160] sm:$0xff]
      %v1744 = vld [vmem:[%s1698 + $0x168] sm:$0xff]
      %v1745 = vld [vmem:[%s1698 + $0x170] sm:$0xff]
      %v1746 = vld [vmem:[%s1698 + $0x178] sm:$0xff]
      %v1747 = vld [vmem:[%s1698 + $0x180] sm:$0xff]
      %v1748 = vld [vmem:[%s1698 + $0x188] sm:$0xff]
      %v1749 = vld [vmem:[%s1698 + $0x190] sm:$0xff]
      %v1750 = vld [vmem:[%s1698 + $0x198] sm:$0xff]
      %v1751 = vld [vmem:[%s1698 + $0x1a0] sm:$0xff]
      %v1752 = vld [vmem:[%s1698 + $0x1a8] sm:$0xff]
      %v1753 = vld [vmem:[%s1698 + $0x1b0] sm:$0xff]
      %v1754 = vld [vmem:[%s1698 + $0x1b8] sm:$0xff]
      %v1755 = vld [vmem:[%s1698 + $0x1c0] sm:$0xff]
      %v1756 = vld [vmem:[%s1698 + $0x1c8] sm:$0xff]
      %v1757 = vld [vmem:[%s1698 + $0x1d0] sm:$0xff]
      %v1758 = vld [vmem:[%s1698 + $0x1d8] sm:$0xff]
      %v1759 = vld [vmem:[%s1698 + $0x1e0] sm:$0xff]
      %v1760 = vld [vmem:[%s1698 + $0x1e8] sm:$0xff]
      %v1761 = vld [vmem:[%s1698 + $0x1f0] sm:$0xff]
      %v1762 = vld [vmem:[%s1698 + $0x1f8] sm:$0xff]
      %v1764 = vcombine.high %v1697, %v1697
      %v1766 = vunpack.c.l.s4 1983009808
      %v1767 = vunpack.c.0.s8 %v1766
      %v1768 = vlaneseq
      %v1769 = vshrl.u32 %v1768, 7
      %v1770 = vsub.s32 %v1767, %v1769
      %v1771 = vrot.slane %v1697, %v1770
      %v1773 = vunpack.c.l.s4 1983009808
      %v1774 = vunpack.c.0.s8 %v1773
      %v1775 = vlaneseq
      %v1776 = vshrl.u32 %v1775, 7
      %v1777 = vsub.s32 %v1774, %v1776
      %v1778 = vrot.slane %v1764, %v1777
      %v1779 = vcombine.high %v1771, %v1771
      %v1780 = vcombine.high %v1778, %v1778
      %v1782 = vshrl.u32 %v1771, 16
      %v1784 = vshll.u32 %v1771, 16
      %v1786 = vrot.slane %v1784, 1
      %v1787 = vor.u32 %v1782, %v1786
      %v1789 = vshrl.u32 %v1779, 16
      %v1791 = vshll.u32 %v1779, 16
      %v1793 = vrot.slane %v1791, 1
      %v1794 = vor.u32 %v1789, %v1793
      %v1796 = vshrl.u32 %v1778, 16
      %v1798 = vshll.u32 %v1778, 16
      %v1800 = vrot.slane %v1798, 1
      %v1801 = vor.u32 %v1796, %v1800
      %v1803 = vshrl.u32 %v1780, 16
      %v1805 = vshll.u32 %v1780, 16
      %v1807 = vrot.slane %v1805, 1
      %v1808 = vor.u32 %v1803, %v1807
      %v1877 = vunpack.c.l.b16 %v1699
      %v1878 = vunpack.c.h.b16 %v1699
      %v1879 = vunpack.c.l.b16 %v1700
      %v1880 = vunpack.c.h.b16 %v1700
      %v1881 = vunpack.c.l.b16 %v1701
      %v1882 = vunpack.c.h.b16 %v1701
      %v1883 = vunpack.c.l.b16 %v1702
      %v1884 = vunpack.c.h.b16 %v1702
      %v1885 = vunpack.c.l.b16 %v1703
      %v1886 = vunpack.c.h.b16 %v1703
      %v1887 = vunpack.c.l.b16 %v1704
      %v1888 = vunpack.c.h.b16 %v1704
      %v1889 = vunpack.c.l.b16 %v1705
      %v1890 = vunpack.c.h.b16 %v1705
      %v1891 = vunpack.c.l.b16 %v1706
      %v1892 = vunpack.c.h.b16 %v1706
      %v1893 = vunpack.c.l.b16 %v1707
      %v1894 = vunpack.c.h.b16 %v1707
      %v1895 = vunpack.c.l.b16 %v1708
      %v1896 = vunpack.c.h.b16 %v1708
      %v1897 = vunpack.c.l.b16 %v1709
      %v1898 = vunpack.c.h.b16 %v1709
      %v1899 = vunpack.c.l.b16 %v1710
      %v1900 = vunpack.c.h.b16 %v1710
      %v1901 = vunpack.c.l.b16 %v1711
      %v1902 = vunpack.c.h.b16 %v1711
      %v1903 = vunpack.c.l.b16 %v1712
      %v1904 = vunpack.c.h.b16 %v1712
      %v1905 = vunpack.c.l.b16 %v1713
      %v1906 = vunpack.c.h.b16 %v1713
      %v1907 = vunpack.c.l.b16 %v1714
      %v1908 = vunpack.c.h.b16 %v1714
      %v1909 = vunpack.c.l.b16 %v1715
      %v1910 = vunpack.c.h.b16 %v1715
      %v1911 = vunpack.c.l.b16 %v1716
      %v1912 = vunpack.c.h.b16 %v1716
      %v1913 = vunpack.c.l.b16 %v1717
      %v1914 = vunpack.c.h.b16 %v1717
      %v1915 = vunpack.c.l.b16 %v1718
      %v1916 = vunpack.c.h.b16 %v1718
      %v1917 = vunpack.c.l.b16 %v1719
      %v1918 = vunpack.c.h.b16 %v1719
      %v1919 = vunpack.c.l.b16 %v1720
      %v1920 = vunpack.c.h.b16 %v1720
      %v1921 = vunpack.c.l.b16 %v1721
      %v1922 = vunpack.c.h.b16 %v1721
      %v1923 = vunpack.c.l.b16 %v1722
      %v1924 = vunpack.c.h.b16 %v1722
      %v1925 = vunpack.c.l.b16 %v1723
      %v1926 = vunpack.c.h.b16 %v1723
      %v1927 = vunpack.c.l.b16 %v1724
      %v1928 = vunpack.c.h.b16 %v1724
      %v1929 = vunpack.c.l.b16 %v1725
      %v1930 = vunpack.c.h.b16 %v1725
      %v1931 = vunpack.c.l.b16 %v1726
      %v1932 = vunpack.c.h.b16 %v1726
      %v1933 = vunpack.c.l.b16 %v1727
      %v1934 = vunpack.c.h.b16 %v1727
      %v1935 = vunpack.c.l.b16 %v1728
      %v1936 = vunpack.c.h.b16 %v1728
      %v1937 = vunpack.c.l.b16 %v1729
      %v1938 = vunpack.c.h.b16 %v1729
      %v1939 = vunpack.c.l.b16 %v1730
      %v1940 = vunpack.c.h.b16 %v1730
      %v1941 = vunpack.c.l.b16 %v1731
      %v1942 = vunpack.c.h.b16 %v1731
      %v1943 = vunpack.c.l.b16 %v1732
      %v1944 = vunpack.c.h.b16 %v1732
      %v1945 = vunpack.c.l.b16 %v1733
      %v1946 = vunpack.c.h.b16 %v1733
      %v1947 = vunpack.c.l.b16 %v1734
      %v1948 = vunpack.c.h.b16 %v1734
      %v1949 = vunpack.c.l.b16 %v1735
      %v1950 = vunpack.c.h.b16 %v1735
      %v1951 = vunpack.c.l.b16 %v1736
      %v1952 = vunpack.c.h.b16 %v1736
      %v1953 = vunpack.c.l.b16 %v1737
      %v1954 = vunpack.c.h.b16 %v1737
      %v1955 = vunpack.c.l.b16 %v1738
      %v1956 = vunpack.c.h.b16 %v1738
      %v1957 = vunpack.c.l.b16 %v1739
      %v1958 = vunpack.c.h.b16 %v1739
      %v1959 = vunpack.c.l.b16 %v1740
      %v1960 = vunpack.c.h.b16 %v1740
      %v1961 = vunpack.c.l.b16 %v1741
      %v1962 = vunpack.c.h.b16 %v1741
      %v1963 = vunpack.c.l.b16 %v1742
      %v1964 = vunpack.c.h.b16 %v1742
      %v1965 = vunpack.c.l.b16 %v1743
      %v1966 = vunpack.c.h.b16 %v1743
      %v1967 = vunpack.c.l.b16 %v1744
      %v1968 = vunpack.c.h.b16 %v1744
      %v1969 = vunpack.c.l.b16 %v1745
      %v1970 = vunpack.c.h.b16 %v1745
      %v1971 = vunpack.c.l.b16 %v1746
      %v1972 = vunpack.c.h.b16 %v1746
      %v1973 = vunpack.c.l.b16 %v1747
      %v1974 = vunpack.c.h.b16 %v1747
      %v1975 = vunpack.c.l.b16 %v1748
      %v1976 = vunpack.c.h.b16 %v1748
      %v1977 = vunpack.c.l.b16 %v1749
      %v1978 = vunpack.c.h.b16 %v1749
      %v1979 = vunpack.c.l.b16 %v1750
      %v1980 = vunpack.c.h.b16 %v1750
      %v1981 = vunpack.c.l.b16 %v1751
      %v1982 = vunpack.c.h.b16 %v1751
      %v1983 = vunpack.c.l.b16 %v1752
      %v1984 = vunpack.c.h.b16 %v1752
      %v1985 = vunpack.c.l.b16 %v1753
      %v1986 = vunpack.c.h.b16 %v1753
      %v1987 = vunpack.c.l.b16 %v1754
      %v1988 = vunpack.c.h.b16 %v1754
      %v1989 = vunpack.c.l.b16 %v1755
      %v1990 = vunpack.c.h.b16 %v1755
      %v1991 = vunpack.c.l.b16 %v1756
      %v1992 = vunpack.c.h.b16 %v1756
      %v1993 = vunpack.c.l.b16 %v1757
      %v1994 = vunpack.c.h.b16 %v1757
      %v1995 = vunpack.c.l.b16 %v1758
      %v1996 = vunpack.c.h.b16 %v1758
      %v1997 = vunpack.c.l.b16 %v1759
      %v1998 = vunpack.c.h.b16 %v1759
      %v1999 = vunpack.c.l.b16 %v1760
      %v2000 = vunpack.c.h.b16 %v1760
      %v2001 = vunpack.c.l.b16 %v1761
      %v2002 = vunpack.c.h.b16 %v1761
      %v2003 = vunpack.c.l.b16 %v1762
      %v2004 = vunpack.c.h.b16 %v1762
      %v2005 = vpack.c.b16 %v1879, %v1877
      %v2006 = vpack.c.b16 %v1880, %v1878
      %v2007 = vpack.c.b16 %v1883, %v1881
      %v2008 = vpack.c.b16 %v1884, %v1882
      %v2009 = vpack.c.b16 %v1887, %v1885
      %v2010 = vpack.c.b16 %v1888, %v1886
      %v2011 = vpack.c.b16 %v1891, %v1889
      %v2012 = vpack.c.b16 %v1892, %v1890
      %v2013 = vpack.c.b16 %v1895, %v1893
      %v2014 = vpack.c.b16 %v1896, %v1894
      %v2015 = vpack.c.b16 %v1899, %v1897
      %v2016 = vpack.c.b16 %v1900, %v1898
      %v2017 = vpack.c.b16 %v1903, %v1901
      %v2018 = vpack.c.b16 %v1904, %v1902
      %v2019 = vpack.c.b16 %v1907, %v1905
      %v2020 = vpack.c.b16 %v1908, %v1906
      %v2021 = vpack.c.b16 %v1911, %v1909
      %v2022 = vpack.c.b16 %v1912, %v1910
      %v2023 = vpack.c.b16 %v1915, %v1913
      %v2024 = vpack.c.b16 %v1916, %v1914
      %v2025 = vpack.c.b16 %v1919, %v1917
      %v2026 = vpack.c.b16 %v1920, %v1918
      %v2027 = vpack.c.b16 %v1923, %v1921
      %v2028 = vpack.c.b16 %v1924, %v1922
      %v2029 = vpack.c.b16 %v1927, %v1925
      %v2030 = vpack.c.b16 %v1928, %v1926
      %v2031 = vpack.c.b16 %v1931, %v1929
      %v2032 = vpack.c.b16 %v1932, %v1930
      %v2033 = vpack.c.b16 %v1935, %v1933
      %v2034 = vpack.c.b16 %v1936, %v1934
      %v2035 = vpack.c.b16 %v1939, %v1937
      %v2036 = vpack.c.b16 %v1940, %v1938
      %v2037 = vpack.c.b16 %v1943, %v1941
      %v2038 = vpack.c.b16 %v1944, %v1942
      %v2039 = vpack.c.b16 %v1947, %v1945
      %v2040 = vpack.c.b16 %v1948, %v1946
      %v2041 = vpack.c.b16 %v1951, %v1949
      %v2042 = vpack.c.b16 %v1952, %v1950
      %v2043 = vpack.c.b16 %v1955, %v1953
      %v2044 = vpack.c.b16 %v1956, %v1954
      %v2045 = vpack.c.b16 %v1959, %v1957
      %v2046 = vpack.c.b16 %v1960, %v1958
      %v2047 = vpack.c.b16 %v1963, %v1961
      %v2048 = vpack.c.b16 %v1964, %v1962
      %v2049 = vpack.c.b16 %v1967, %v1965
      %v2050 = vpack.c.b16 %v1968, %v1966
      %v2051 = vpack.c.b16 %v1971, %v1969
      %v2052 = vpack.c.b16 %v1972, %v1970
      %v2053 = vpack.c.b16 %v1975, %v1973
      %v2054 = vpack.c.b16 %v1976, %v1974
      %v2055 = vpack.c.b16 %v1979, %v1977
      %v2056 = vpack.c.b16 %v1980, %v1978
      %v2057 = vpack.c.b16 %v1983, %v1981
      %v2058 = vpack.c.b16 %v1984, %v1982
      %v2059 = vpack.c.b16 %v1987, %v1985
      %v2060 = vpack.c.b16 %v1988, %v1986
      %v2061 = vpack.c.b16 %v1991, %v1989
      %v2062 = vpack.c.b16 %v1992, %v1990
      %v2063 = vpack.c.b16 %v1995, %v1993
      %v2064 = vpack.c.b16 %v1996, %v1994
      %v2065 = vpack.c.b16 %v1999, %v1997
      %v2066 = vpack.c.b16 %v2000, %v1998
      %v2067 = vpack.c.b16 %v2003, %v2001
      %v2068 = vpack.c.b16 %v2004, %v2002
      %2133 = vmatprep.subr.bf16.mxu0 %v2006
      %2134 = vmatpush1.bf16.msra.mxu0 %v2005
      %2135 = vmatprep.subr.bf16.mxu0 %v2008
      %2136 = vmatpush1.bf16.msra.mxu0 %v2007
      %2137 = vmatprep.subr.bf16.mxu0 %v2010
      %2138 = vmatpush1.bf16.msra.mxu0 %v2009
      %2139 = vmatprep.subr.bf16.mxu0 %v2012
      %2140 = vmatpush1.bf16.msra.mxu0 %v2011
      %2141 = vmatprep.subr.bf16.mxu0 %v2014
      %2142 = vmatpush1.bf16.msra.mxu0 %v2013
      %2143 = vmatprep.subr.bf16.mxu0 %v2016
      %2144 = vmatpush1.bf16.msra.mxu0 %v2015
      %2145 = vmatprep.subr.bf16.mxu0 %v2018
      %2146 = vmatpush1.bf16.msra.mxu0 %v2017
      %2147 = vmatprep.subr.bf16.mxu0 %v2020
      %2148 = vmatpush1.bf16.msra.mxu0 %v2019
      %2149 = vmatprep.subr.bf16.mxu0 %v2022
      %2150 = vmatpush1.bf16.msra.mxu0 %v2021
      %2151 = vmatprep.subr.bf16.mxu0 %v2024
      %2152 = vmatpush1.bf16.msra.mxu0 %v2023
      %2153 = vmatprep.subr.bf16.mxu0 %v2026
      %2154 = vmatpush1.bf16.msra.mxu0 %v2025
      %2155 = vmatprep.subr.bf16.mxu0 %v2028
      %2156 = vmatpush1.bf16.msra.mxu0 %v2027
      %2157 = vmatprep.subr.bf16.mxu0 %v2030
      %2158 = vmatpush1.bf16.msra.mxu0 %v2029
      %2159 = vmatprep.subr.bf16.mxu0 %v2032
      %2160 = vmatpush1.bf16.msra.mxu0 %v2031
      %2161 = vmatprep.subr.bf16.mxu0 %v2034
      %2162 = vmatpush1.bf16.msra.mxu0 %v2033
      %2163 = vmatprep.subr.bf16.mxu0 %v2036
      %2164 = vmatpush1.bf16.msra.mxu0 %v2035
      %2165 = vmatprep.mubr.bf16.mxu0 %v1794
      %2166 = vmatmul.mubr.bf16.gmra.mrb[0].mxu0 %v1787
      %v2167 = vpop.f32.mrb[0].mxu0
      %v2168 = vadd.f32 0.0, %v2167
      %v2169 = vpop.f32.mrb[0].mxu0
      %v2170 = vadd.f32 0.0, %v2169
      %v2171 = vpop.f32.mrb[0].mxu0
      %v2172 = vpop.f32.mrb[0].mxu0
      %2173 = vdwg.mxu0
      %2174 = vmatprep.subr.bf16.mxu0 %v2038
      %2175 = vmatpush1.bf16.msra.mxu0 %v2037
      %2176 = vmatprep.subr.bf16.mxu0 %v2040
      %2177 = vmatpush1.bf16.msra.mxu0 %v2039
      %2178 = vmatprep.subr.bf16.mxu0 %v2042
      %2179 = vmatpush1.bf16.msra.mxu0 %v2041
      %2180 = vmatprep.subr.bf16.mxu0 %v2044
      %2181 = vmatpush1.bf16.msra.mxu0 %v2043
      %2182 = vmatprep.subr.bf16.mxu0 %v2046
      %2183 = vmatpush1.bf16.msra.mxu0 %v2045
      %2184 = vmatprep.subr.bf16.mxu0 %v2048
      %2185 = vmatpush1.bf16.msra.mxu0 %v2047
      %2186 = vmatprep.subr.bf16.mxu0 %v2050
      %2187 = vmatpush1.bf16.msra.mxu0 %v2049
      %2188 = vmatprep.subr.bf16.mxu0 %v2052
      %2189 = vmatpush1.bf16.msra.mxu0 %v2051
      %2190 = vmatprep.subr.bf16.mxu0 %v2054
      %2191 = vmatpush1.bf16.msra.mxu0 %v2053
      %2192 = vmatprep.subr.bf16.mxu0 %v2056
      %2193 = vmatpush1.bf16.msra.mxu0 %v2055
      %2194 = vmatprep.subr.bf16.mxu0 %v2058
      %2195 = vmatpush1.bf16.msra.mxu0 %v2057
      %2196 = vmatprep.subr.bf16.mxu0 %v2060
      %2197 = vmatpush1.bf16.msra.mxu0 %v2059
      %2198 = vmatprep.subr.bf16.mxu0 %v2062
      %2199 = vmatpush1.bf16.msra.mxu0 %v2061
      %2200 = vmatprep.subr.bf16.mxu0 %v2064
      %2201 = vmatpush1.bf16.msra.mxu0 %v2063
      %2202 = vmatprep.subr.bf16.mxu0 %v2066
      %2203 = vmatpush1.bf16.msra.mxu0 %v2065
      %2204 = vmatprep.subr.bf16.mxu0 %v2068
      %2205 = vmatpush1.bf16.msra.mxu0 %v2067
      %2206 = vmatprep.mubr.bf16.mxu0 %v1808
      %2207 = vmatmul.mubr.bf16.gmra.mrb[0].mxu0 %v1801
      %v2208 = vpop.f32.mrb[0].mxu0
      %v2209 = vadd.f32 %v2168, %v2208
      %v2210 = vpop.f32.mrb[0].mxu0
      %v2211 = vadd.f32 %v2170, %v2210
      %v2212 = vpop.f32.mrb[0].mxu0
      %v2213 = vpop.f32.mrb[0].mxu0
      %2214 = vdwg.mxu0
      %v2215 = vadd.f32 %v1695, %v2209
      %v2216 = vadd.f32 %v1696, %v2211
      %v2217 = vld [vmem:[%s2] sm:$0x3]
      %v2219 = vlaneseq
      %v2220 = vshrl.u32 %v2219, 7
      %v2221 = vsub.s32 0, %v2220
      %v2222 = vrot.slane %v2217, %v2221
      %v2223 = vlaneseq
      %v2224 = vshrl.u32 %v2223, 7
      %v2225 = vsub.s32 1, %v2224
      %v2226 = vrot.slane %v2217, %v2225
      %v2229 = vadd.f32 %v2215, %v2222
      %v2230 = vadd.f32 %v2216, %v2226
      %vm2231 = vcmp.gt.f32.partialorder %v2229, 0.0
      %vm2232 = vcmp.gt.f32.partialorder %v2230, 0.0
      %v2233 = vmul.f32 %v2229, 0.01
      %v2234 = vmul.f32 %v2230, 0.01
      %v2235 = vsel %vm2231, %v2229, %v2233
      %v2236 = vsel %vm2232, %v2230, %v2234
      %v2237 = vpack.c.bf16 %v2235, %v2235
      %v2238 = vpack.c.bf16 %v2236, %v2236
      %v2241 = vcombine.low %v2237, %v2238
      %v2243 = vunpack.c.l.s4 1966171168
      %v2244 = vunpack.c.0.s8 %v2243
      %v2245 = vlaneseq
      %v2246 = vshrl.u32 %v2245, 7
      %v2247 = vsub.s32 %v2244, %v2246
      %v2248 = vrot.slane %v2241, %v2247
      %v2250 = vunpack.c.l.s4 1966171168
      %v2251 = vunpack.c.0.s8 %v2250
      %v2252 = vlaneseq
      %v2253 = vshrl.u32 %v2252, 7
      %v2254 = vsub.s32 %v2251, %v2253
      %v2255 = vrot.slane %v2248, %v2254
      %2257 = vst [vmem:[%s190] sm:$0x3] %v2255
      %p2258 = scmp.lt.s32.totalorder %s18, 1
      %s2259 = scalar_select %p2258, %s18, 1
      %p2260 = scmp.lt.s32.totalorder %s19, 1
      %s2261 = scalar_select %p2260, %s19, 1
      %s2262 = smul.addr %s2261, 2
      %s2263 = smul.addr %s2259, 4
      %s2264 = sadd.s32 %s2262, %s2263
      %s2265 = scalar_lea.vmem %s3, %s2264
      // Predicated region
      $region33: #{forward.6} parent=31 // pred_check
        %p2266 = pneg %p114
      $region34: #{forward.6} parent=31 // pred_check_branch
        %2268 = sbr.rel (%p2266) target = $region36
      $region35: #{forward.6} parent=31 // pred_region
        _
      $region36: #{forward.6} parent=31 // pred_fallthru
        _
    $region32: #{forward.6} parent=5 // pred_fallthru
      _
    %p2269 = scmp.le.s32.totalorder 2, %s9
    // Predicated region
    $region37: #{forward.6} parent=5 // pred_check
      %p2270 = pneg %p2269
    $region38: #{forward.6} parent=5 // pred_check_branch
      %2272 = sbr.rel (%p2270) target = $region40
    $region39: #{forward.6} parent=5 // pred_region
      %s2273 = ssub.s32 %s9, 2
      // Predicated region
      $region41: #{forward.6} parent=39 // pred_check
        %p2274 = pneg %p120
      $region42: #{forward.6} parent=39 // pred_check_branch
        %2276 = sbr.rel (%p2274) target = $region44
      $region43: #{forward.6} parent=39 // pred_region
        %p2277 = scmp.lt.s32.totalorder %s20, 1
        %s2278 = scalar_select %p2277, %s20, 1
        %p2279 = scmp.lt.s32.totalorder %s21, 1
        %s2280 = scalar_select %p2279, %s21, 1
        %s2281 = smul.addr %s2280, 2
        %s2282 = smul.addr %s2278, 4
        %s2283 = sadd.s32 %s2281, %s2282
        %s2284 = scalar_lea.vmem %s3, %s2283
      $region44: #{forward.6} parent=39 // pred_fallthru
        _
    $region40: #{forward.6} parent=5 // pred_fallthru
      _
  $region6: #{forward.6} parent=0 // loop_footer
    %s13 = sadd.s32 1, %s9
  $region7: #{forward.6} parent=0 // loop_footer_branch
    %8 = sbr.rel target = $region3
  $region8: #{forward.6} parent=0 // loop_exit
    _

// kernel: forward.7
$region0: #{forward.7}
  #allocation0 [shape = 'u32[]', space=smem, size = 0x4, offset = 0x4, fixed_abs, tag = 'smem constant byte address 0x4 - core index']
  #allocation1 [shape = 'u32[144,128]{1,0:T(1,128)}', space=vmem, size = 0x12000, scoped, tag = 'internal scratch']
  #allocation2 [shape = 'f32[2,256]{1,0:T(2,128)}', space=vmem, size = 0x800, scoped, tag = 'scratch operand']
  %s0 = inlined_call_operand.vmem [shape: bf16[2,1024], index: 0, kind: input, shape index: {}]
  %s1 = inlined_call_operand.vmem [shape: bf16[1024,256], index: 1, kind: input, shape index: {}]
  %s2 = inlined_call_operand.vmem [shape: bf16[2,4], index: 2, kind: input, shape index: {}]
  %s3 = inlined_call_operand.vmem [shape: bf16[4,256], index: 3, kind: input, shape index: {}]
  %s4 = inlined_call_operand.vmem [shape: f32[1,256], index: 4, kind: input, shape index: {}]
  %s5 = inlined_call_operand.vmem [shape: bf16[256,256], index: 5, kind: input, shape index: {}]
  %s6 = inlined_call_operand.vmem [shape: f32[1,256], index: 6, kind: input, shape index: {}]
  %s7 = inlined_call_operand.vmem [shape: bf16[256,256], index: 7, kind: input, shape index: {}]
  %s8 = inlined_call_operand.vmem [shape: f32[1,256], index: 8, kind: input, shape index: {}]
  %s9 = inlined_call_operand.vmem [shape: bf16[256,256], index: 9, kind: input, shape index: {}]
  %s10 = inlined_call_operand.vmem [shape: f32[1,256], index: 10, kind: input, shape index: {}]
  %s11 = inlined_call_operand.vmem [shape: f32[2,128], index: 11, kind: input, shape index: {}]
  %s12 = inlined_call_operand.hbm [shape: f32[2,128], index: 12, kind: output, shape index: {}]
  %s13 = sld [smem:[#allocation0]]
  $region66: #{forward.7} parent=0
    _
  %s15 = ssub.s32 1, %s13
  %s16 = scalar_select 0, %s15, %s13
  $region1: #{forward.7} parent=0
    #allocation3 [shape = 'u8[1024]{0}', space=vmem, size = 0x400, scoped, tag = 'output window, operand 0, single buffered']
    #allocation4 [shape = 's32[1]{0}', space=sflag, size = 0x4, scoped, tag = 'scoped memory for forward.7']
    %17 = vsyncpa [#allocation4], 0
    // Predicated region
    $region2: #{forward.7} parent=1 // pred_check
      _
    $region3: #{forward.7} parent=1 // pred_check_branch
      %19 = sbr.rel (0) target = $region5
    $region4: #{forward.7} parent=1 // pred_region
      _
    $region5: #{forward.7} parent=1 // pred_fallthru
      _
    // Predicated region
    $region6: #{forward.7} parent=1 // pred_check
      _
    $region7: #{forward.7} parent=1 // pred_check_branch
      %21 = sbr.rel (0) target = $region9
    $region8: #{forward.7} parent=1 // pred_region
      _
    $region9: #{forward.7} parent=1 // pred_fallthru
      _
    // Predicated region
    $region10: #{forward.7} parent=1 // pred_check
      _
    $region11: #{forward.7} parent=1 // pred_check_branch
      %23 = sbr.rel (0) target = $region13
    $region12: #{forward.7} parent=1 // pred_region
      _
    $region13: #{forward.7} parent=1 // pred_fallthru
      _
    // Predicated region
    $region14: #{forward.7} parent=1 // pred_check
      _
    $region15: #{forward.7} parent=1 // pred_check_branch
      %25 = sbr.rel (0) target = $region17
    $region16: #{forward.7} parent=1 // pred_region
      _
    $region17: #{forward.7} parent=1 // pred_fallthru
      _
    // Predicated region
    $region18: #{forward.7} parent=1 // pred_check
      _
    $region19: #{forward.7} parent=1 // pred_check_branch
      %27 = sbr.rel (0) target = $region21
    $region20: #{forward.7} parent=1 // pred_region
      _
    $region21: #{forward.7} parent=1 // pred_fallthru
      _
    // Predicated region
    $region22: #{forward.7} parent=1 // pred_check
      _
    $region23: #{forward.7} parent=1 // pred_check_branch
      %29 = sbr.rel (0) target = $region25
    $region24: #{forward.7} parent=1 // pred_region
      _
    $region25: #{forward.7} parent=1 // pred_fallthru
      _
    // Predicated region
    $region26: #{forward.7} parent=1 // pred_check
      _
    $region27: #{forward.7} parent=1 // pred_check_branch
      %31 = sbr.rel (0) target = $region29
    $region28: #{forward.7} parent=1 // pred_region
      _
    $region29: #{forward.7} parent=1 // pred_fallthru
      _
    // Predicated region
    $region30: #{forward.7} parent=1 // pred_check
      _
    $region31: #{forward.7} parent=1 // pred_check_branch
      %33 = sbr.rel (0) target = $region33
    $region32: #{forward.7} parent=1 // pred_region
      _
    $region33: #{forward.7} parent=1 // pred_fallthru
      _
    // Predicated region
    $region34: #{forward.7} parent=1 // pred_check
      _
    $region35: #{forward.7} parent=1 // pred_check_branch
      %35 = sbr.rel (0) target = $region37
    $region36: #{forward.7} parent=1 // pred_region
      _
    $region37: #{forward.7} parent=1 // pred_fallthru
      _
    // Predicated region
    $region38: #{forward.7} parent=1 // pred_check
      _
    $region39: #{forward.7} parent=1 // pred_check_branch
      %37 = sbr.rel (0) target = $region41
    $region40: #{forward.7} parent=1 // pred_region
      _
    $region41: #{forward.7} parent=1 // pred_fallthru
      _
    // Predicated region
    $region42: #{forward.7} parent=1 // pred_check
      _
    $region43: #{forward.7} parent=1 // pred_check_branch
      %39 = sbr.rel (0) target = $region45
    $region44: #{forward.7} parent=1 // pred_region
      _
    $region45: #{forward.7} parent=1 // pred_fallthru
      _
    // Predicated region
    $region46: #{forward.7} parent=1 // pred_check
      _
    $region47: #{forward.7} parent=1 // pred_check_branch
      %41 = sbr.rel (0) target = $region49
    $region48: #{forward.7} parent=1 // pred_region
      _
    $region49: #{forward.7} parent=1 // pred_fallthru
      _
    %p43 = scmp.eq.s32.totalorder 0, 0
    // Predicated region
    $region50: #{forward.7} parent=1 // pred_check
      %p44 = pneg %p43
    $region51: #{forward.7} parent=1 // pred_check_branch
      %46 = sbr.rel (%p44) target = $region53
    $region52: #{forward.7} parent=1 // pred_region
      %47 = vst [vmem:[#allocation2] sm:$0xf] 0.0
    $region53: #{forward.7} parent=1 // pred_fallthru
      _
    %v48 = vld [vmem:[#allocation2] sm:$0xf]
    %v49 = vld [vmem:[%s0] sm:$0xff]
    %v50 = vld [vmem:[%s1] sm:$0xff]
    %v51 = vld [vmem:[%s1 + $0x8] sm:$0xff]
    %v52 = vld [vmem:[%s1 + $0x10] sm:$0xff]
    %v53 = vld [vmem:[%s1 + $0x18] sm:$0xff]
    %v54 = vld [vmem:[%s1 + $0x20] sm:$0xff]
    %v55 = vld [vmem:[%s1 + $0x28] sm:$0xff]
    %v56 = vld [vmem:[%s1 + $0x30] sm:$0xff]
    %v57 = vld [vmem:[%s1 + $0x38] sm:$0xff]
    %v58 = vld [vmem:[%s1 + $0x40] sm:$0xff]
    %v59 = vld [vmem:[%s1 + $0x48] sm:$0xff]
    %v60 = vld [vmem:[%s1 + $0x50] sm:$0xff]
    %v61 = vld [vmem:[%s1 + $0x58] sm:$0xff]
    %v62 = vld [vmem:[%s1 + $0x60] sm:$0xff]
    %v63 = vld [vmem:[%s1 + $0x68] sm:$0xff]
    %v64 = vld [vmem:[%s1 + $0x70] sm:$0xff]
    %v65 = vld [vmem:[%s1 + $0x78] sm:$0xff]
    %v66 = vld [vmem:[%s1 + $0x80] sm:$0xff]
    %v67 = vld [vmem:[%s1 + $0x88] sm:$0xff]
    %v68 = vld [vmem:[%s1 + $0x90] sm:$0xff]
    %v69 = vld [vmem:[%s1 + $0x98] sm:$0xff]
    %v70 = vld [vmem:[%s1 + $0xa0] sm:$0xff]
    %v71 = vld [vmem:[%s1 + $0xa8] sm:$0xff]
    %v72 = vld [vmem:[%s1 + $0xb0] sm:$0xff]
    %v73 = vld [vmem:[%s1 + $0xb8] sm:$0xff]
    %v74 = vld [vmem:[%s1 + $0xc0] sm:$0xff]
    %v75 = vld [vmem:[%s1 + $0xc8] sm:$0xff]
    %v76 = vld [vmem:[%s1 + $0xd0] sm:$0xff]
    %v77 = vld [vmem:[%s1 + $0xd8] sm:$0xff]
    %v78 = vld [vmem:[%s1 + $0xe0] sm:$0xff]
    %v79 = vld [vmem:[%s1 + $0xe8] sm:$0xff]
    %v80 = vld [vmem:[%s1 + $0xf0] sm:$0xff]
    %v81 = vld [vmem:[%s1 + $0xf8] sm:$0xff]
    %v82 = vld [vmem:[%s1 + $0x100] sm:$0xff]
    %v83 = vld [vmem:[%s1 + $0x108] sm:$0xff]
    %v84 = vld [vmem:[%s1 + $0x110] sm:$0xff]
    %v85 = vld [vmem:[%s1 + $0x118] sm:$0xff]
    %v86 = vld [vmem:[%s1 + $0x120] sm:$0xff]
    %v87 = vld [vmem:[%s1 + $0x128] sm:$0xff]
    %v88 = vld [vmem:[%s1 + $0x130] sm:$0xff]
    %v89 = vld [vmem:[%s1 + $0x138] sm:$0xff]
    %v90 = vld [vmem:[%s1 + $0x140] sm:$0xff]
    %v91 = vld [vmem:[%s1 + $0x148] sm:$0xff]
    %v92 = vld [vmem:[%s1 + $0x150] sm:$0xff]
    %v93 = vld [vmem:[%s1 + $0x158] sm:$0xff]
    %v94 = vld [vmem:[%s1 + $0x160] sm:$0xff]
    %v95 = vld [vmem:[%s1 + $0x168] sm:$0xff]
    %v96 = vld [vmem:[%s1 + $0x170] sm:$0xff]
    %v97 = vld [vmem:[%s1 + $0x178] sm:$0xff]
    %v98 = vld [vmem:[%s1 + $0x180] sm:$0xff]
    %v99 = vld [vmem:[%s1 + $0x188] sm:$0xff]
    %v100 = vld [vmem:[%s1 + $0x190] sm:$0xff]
    %v101 = vld [vmem:[%s1 + $0x198] sm:$0xff]
    %v102 = vld [vmem:[%s1 + $0x1a0] sm:$0xff]
    %v103 = vld [vmem:[%s1 + $0x1a8] sm:$0xff]
    %v104 = vld [vmem:[%s1 + $0x1b0] sm:$0xff]
    %v105 = vld [vmem:[%s1 + $0x1b8] sm:$0xff]
    %v106 = vld [vmem:[%s1 + $0x1c0] sm:$0xff]
    %v107 = vld [vmem:[%s1 + $0x1c8] sm:$0xff]
    %v108 = vld [vmem:[%s1 + $0x1d0] sm:$0xff]
    %v109 = vld [vmem:[%s1 + $0x1d8] sm:$0xff]
    %v110 = vld [vmem:[%s1 + $0x1e0] sm:$0xff]
    %v111 = vld [vmem:[%s1 + $0x1e8] sm:$0xff]
    %v112 = vld [vmem:[%s1 + $0x1f0] sm:$0xff]
    %v113 = vld [vmem:[%s1 + $0x1f8] sm:$0xff]
    %v114 = vld [vmem:[%s1 + $0x200] sm:$0xff]
    %v115 = vld [vmem:[%s1 + $0x208] sm:$0xff]
    %v116 = vld [vmem:[%s1 + $0x210] sm:$0xff]
    %v117 = vld [vmem:[%s1 + $0x218] sm:$0xff]
    %v118 = vld [vmem:[%s1 + $0x220] sm:$0xff]
    %v119 = vld [vmem:[%s1 + $0x228] sm:$0xff]
    %v120 = vld [vmem:[%s1 + $0x230] sm:$0xff]
    %v121 = vld [vmem:[%s1 + $0x238] sm:$0xff]
    %v122 = vld [vmem:[%s1 + $0x240] sm:$0xff]
    %v123 = vld [vmem:[%s1 + $0x248] sm:$0xff]
    %v124 = vld [vmem:[%s1 + $0x250] sm:$0xff]
    %v125 = vld [vmem:[%s1 + $0x258] sm:$0xff]
    %v126 = vld [vmem:[%s1 + $0x260] sm:$0xff]
    %v127 = vld [vmem:[%s1 + $0x268] sm:$0xff]
    %v128 = vld [vmem:[%s1 + $0x270] sm:$0xff]
    %v129 = vld [vmem:[%s1 + $0x278] sm:$0xff]
    %v130 = vld [vmem:[%s1 + $0x280] sm:$0xff]
    %v131 = vld [vmem:[%s1 + $0x288] sm:$0xff]
    %v132 = vld [vmem:[%s1 + $0x290] sm:$0xff]
    %v133 = vld [vmem:[%s1 + $0x298] sm:$0xff]
    %v134 = vld [vmem:[%s1 + $0x2a0] sm:$0xff]
    %v135 = vld [vmem:[%s1 + $0x2a8] sm:$0xff]
    %v136 = vld [vmem:[%s1 + $0x2b0] sm:$0xff]
    %v137 = vld [vmem:[%s1 + $0x2b8] sm:$0xff]
    %v138 = vld [vmem:[%s1 + $0x2c0] sm:$0xff]
    %v139 = vld [vmem:[%s1 + $0x2c8] sm:$0xff]
    %v140 = vld [vmem:[%s1 + $0x2d0] sm:$0xff]
    %v141 = vld [vmem:[%s1 + $0x2d8] sm:$0xff]
    %v142 = vld [vmem:[%s1 + $0x2e0] sm:$0xff]
    %v143 = vld [vmem:[%s1 + $0x2e8] sm:$0xff]
    %v144 = vld [vmem:[%s1 + $0x2f0] sm:$0xff]
    %v145 = vld [vmem:[%s1 + $0x2f8] sm:$0xff]
    %v146 = vld [vmem:[%s1 + $0x300] sm:$0xff]
    %v147 = vld [vmem:[%s1 + $0x308] sm:$0xff]
    %v148 = vld [vmem:[%s1 + $0x310] sm:$0xff]
    %v149 = vld [vmem:[%s1 + $0x318] sm:$0xff]
    %v150 = vld [vmem:[%s1 + $0x320] sm:$0xff]
    %v151 = vld [vmem:[%s1 + $0x328] sm:$0xff]
    %v152 = vld [vmem:[%s1 + $0x330] sm:$0xff]
    %v153 = vld [vmem:[%s1 + $0x338] sm:$0xff]
    %v154 = vld [vmem:[%s1 + $0x340] sm:$0xff]
    %v155 = vld [vmem:[%s1 + $0x348] sm:$0xff]
    %v156 = vld [vmem:[%s1 + $0x350] sm:$0xff]
    %v157 = vld [vmem:[%s1 + $0x358] sm:$0xff]
    %v158 = vld [vmem:[%s1 + $0x360] sm:$0xff]
    %v159 = vld [vmem:[%s1 + $0x368] sm:$0xff]
    %v160 = vld [vmem:[%s1 + $0x370] sm:$0xff]
    %v161 = vld [vmem:[%s1 + $0x378] sm:$0xff]
    %v162 = vld [vmem:[%s1 + $0x380] sm:$0xff]
    %v163 = vld [vmem:[%s1 + $0x388] sm:$0xff]
    %v164 = vld [vmem:[%s1 + $0x390] sm:$0xff]
    %v165 = vld [vmem:[%s1 + $0x398] sm:$0xff]
    %v166 = vld [vmem:[%s1 + $0x3a0] sm:$0xff]
    %v167 = vld [vmem:[%s1 + $0x3a8] sm:$0xff]
    %v168 = vld [vmem:[%s1 + $0x3b0] sm:$0xff]
    %v169 = vld [vmem:[%s1 + $0x3b8] sm:$0xff]
    %v170 = vld [vmem:[%s1 + $0x3c0] sm:$0xff]
    %v171 = vld [vmem:[%s1 + $0x3c8] sm:$0xff]
    %v172 = vld [vmem:[%s1 + $0x3d0] sm:$0xff]
    %v173 = vld [vmem:[%s1 + $0x3d8] sm:$0xff]
    %v174 = vld [vmem:[%s1 + $0x3e0] sm:$0xff]
    %v175 = vld [vmem:[%s1 + $0x3e8] sm:$0xff]
    %v176 = vld [vmem:[%s1 + $0x3f0] sm:$0xff]
    %v177 = vld [vmem:[%s1 + $0x3f8] sm:$0xff]
    %v179 = vcombine.high %v49, %v49
    %v181 = vunpack.c.l.s4 1966171168
    %v182 = vunpack.c.0.s8 %v181
    %v183 = vlaneseq
    %v184 = vshrl.u32 %v183, 7
    %v185 = vsub.s32 %v182, %v184
    %v186 = vrot.slane %v49, %v185
    %v188 = vunpack.c.l.s4 1966171168
    %v189 = vunpack.c.0.s8 %v188
    %v190 = vlaneseq
    %v191 = vshrl.u32 %v190, 7
    %v192 = vsub.s32 %v189, %v191
    %v193 = vrot.slane %v179, %v192
    %v194 = vcombine.high %v186, %v186
    %v195 = vcombine.high %v193, %v193
    %v197 = vunpack.c.l.s4 1966171168
    %v198 = vunpack.c.0.s8 %v197
    %v199 = vlaneseq
    %v200 = vshrl.u32 %v199, 7
    %v201 = vsub.s32 %v198, %v200
    %v202 = vrot.slane %v186, %v201
    %v204 = vunpack.c.l.s4 1966171168
    %v205 = vunpack.c.0.s8 %v204
    %v206 = vlaneseq
    %v207 = vshrl.u32 %v206, 7
    %v208 = vsub.s32 %v205, %v207
    %v209 = vrot.slane %v193, %v208
    %v211 = vunpack.c.l.s4 1966171168
    %v212 = vunpack.c.0.s8 %v211
    %v213 = vlaneseq
    %v214 = vshrl.u32 %v213, 7
    %v215 = vsub.s32 %v212, %v214
    %v216 = vrot.slane %v194, %v215
    %v218 = vunpack.c.l.s4 1966171168
    %v219 = vunpack.c.0.s8 %v218
    %v220 = vlaneseq
    %v221 = vshrl.u32 %v220, 7
    %v222 = vsub.s32 %v219, %v221
    %v223 = vrot.slane %v195, %v222
    %v224 = vcombine.high %v202, %v202
    %v225 = vcombine.high %v209, %v209
    %v226 = vcombine.high %v216, %v216
    %v227 = vcombine.high %v223, %v223
    %v364 = vunpack.c.l.b16 %v50
    %v365 = vunpack.c.h.b16 %v50
    %v366 = vunpack.c.l.b16 %v51
    %v367 = vunpack.c.h.b16 %v51
    %v368 = vunpack.c.l.b16 %v52
    %v369 = vunpack.c.h.b16 %v52
    %v370 = vunpack.c.l.b16 %v53
    %v371 = vunpack.c.h.b16 %v53
    %v372 = vunpack.c.l.b16 %v54
    %v373 = vunpack.c.h.b16 %v54
    %v374 = vunpack.c.l.b16 %v55
    %v375 = vunpack.c.h.b16 %v55
    %v376 = vunpack.c.l.b16 %v56
    %v377 = vunpack.c.h.b16 %v56
    %v378 = vunpack.c.l.b16 %v57
    %v379 = vunpack.c.h.b16 %v57
    %v380 = vunpack.c.l.b16 %v58
    %v381 = vunpack.c.h.b16 %v58
    %v382 = vunpack.c.l.b16 %v59
    %v383 = vunpack.c.h.b16 %v59
    %v384 = vunpack.c.l.b16 %v60
    %v385 = vunpack.c.h.b16 %v60
    %v386 = vunpack.c.l.b16 %v61
    %v387 = vunpack.c.h.b16 %v61
    %v388 = vunpack.c.l.b16 %v62
    %v389 = vunpack.c.h.b16 %v62
    %v390 = vunpack.c.l.b16 %v63
    %v391 = vunpack.c.h.b16 %v63
    %v392 = vunpack.c.l.b16 %v64
    %v393 = vunpack.c.h.b16 %v64
    %v394 = vunpack.c.l.b16 %v65
    %v395 = vunpack.c.h.b16 %v65
    %v396 = vunpack.c.l.b16 %v66
    %v397 = vunpack.c.h.b16 %v66
    %v398 = vunpack.c.l.b16 %v67
    %v399 = vunpack.c.h.b16 %v67
    %v400 = vunpack.c.l.b16 %v68
    %v401 = vunpack.c.h.b16 %v68
    %v402 = vunpack.c.l.b16 %v69
    %v403 = vunpack.c.h.b16 %v69
    %v404 = vunpack.c.l.b16 %v70
    %v405 = vunpack.c.h.b16 %v70
    %v406 = vunpack.c.l.b16 %v71
    %v407 = vunpack.c.h.b16 %v71
    %v408 = vunpack.c.l.b16 %v72
    %v409 = vunpack.c.h.b16 %v72
    %v410 = vunpack.c.l.b16 %v73
    %v411 = vunpack.c.h.b16 %v73
    %v412 = vunpack.c.l.b16 %v74
    %v413 = vunpack.c.h.b16 %v74
    %v414 = vunpack.c.l.b16 %v75
    %v415 = vunpack.c.h.b16 %v75
    %v416 = vunpack.c.l.b16 %v76
    %v417 = vunpack.c.h.b16 %v76
    %v418 = vunpack.c.l.b16 %v77
    %v419 = vunpack.c.h.b16 %v77
    %v420 = vunpack.c.l.b16 %v78
    %v421 = vunpack.c.h.b16 %v78
    %v422 = vunpack.c.l.b16 %v79
    %v423 = vunpack.c.h.b16 %v79
    %v424 = vunpack.c.l.b16 %v80
    %v425 = vunpack.c.h.b16 %v80
    %v426 = vunpack.c.l.b16 %v81
    %v427 = vunpack.c.h.b16 %v81
    %v428 = vunpack.c.l.b16 %v82
    %v429 = vunpack.c.h.b16 %v82
    %v430 = vunpack.c.l.b16 %v83
    %v431 = vunpack.c.h.b16 %v83
    %v432 = vunpack.c.l.b16 %v84
    %v433 = vunpack.c.h.b16 %v84
    %v434 = vunpack.c.l.b16 %v85
    %v435 = vunpack.c.h.b16 %v85
    %v436 = vunpack.c.l.b16 %v86
    %v437 = vunpack.c.h.b16 %v86
    %v438 = vunpack.c.l.b16 %v87
    %v439 = vunpack.c.h.b16 %v87
    %v440 = vunpack.c.l.b16 %v88
    %v441 = vunpack.c.h.b16 %v88
    %v442 = vunpack.c.l.b16 %v89
    %v443 = vunpack.c.h.b16 %v89
    %v444 = vunpack.c.l.b16 %v90
    %v445 = vunpack.c.h.b16 %v90
    %v446 = vunpack.c.l.b16 %v91
    %v447 = vunpack.c.h.b16 %v91
    %v448 = vunpack.c.l.b16 %v92
    %v449 = vunpack.c.h.b16 %v92
    %v450 = vunpack.c.l.b16 %v93
    %v451 = vunpack.c.h.b16 %v93
    %v452 = vunpack.c.l.b16 %v94
    %v453 = vunpack.c.h.b16 %v94
    %v454 = vunpack.c.l.b16 %v95
    %v455 = vunpack.c.h.b16 %v95
    %v456 = vunpack.c.l.b16 %v96
    %v457 = vunpack.c.h.b16 %v96
    %v458 = vunpack.c.l.b16 %v97
    %v459 = vunpack.c.h.b16 %v97
    %v460 = vunpack.c.l.b16 %v98
    %v461 = vunpack.c.h.b16 %v98
    %v462 = vunpack.c.l.b16 %v99
    %v463 = vunpack.c.h.b16 %v99
    %v464 = vunpack.c.l.b16 %v100
    %v465 = vunpack.c.h.b16 %v100
    %v466 = vunpack.c.l.b16 %v101
    %v467 = vunpack.c.h.b16 %v101
    %v468 = vunpack.c.l.b16 %v102
    %v469 = vunpack.c.h.b16 %v102
    %v470 = vunpack.c.l.b16 %v103
    %v471 = vunpack.c.h.b16 %v103
    %v472 = vunpack.c.l.b16 %v104
    %v473 = vunpack.c.h.b16 %v104
    %v474 = vunpack.c.l.b16 %v105
    %v475 = vunpack.c.h.b16 %v105
    %v476 = vunpack.c.l.b16 %v106
    %v477 = vunpack.c.h.b16 %v106
    %v478 = vunpack.c.l.b16 %v107
    %v479 = vunpack.c.h.b16 %v107
    %v480 = vunpack.c.l.b16 %v108
    %v481 = vunpack.c.h.b16 %v108
    %v482 = vunpack.c.l.b16 %v109
    %v483 = vunpack.c.h.b16 %v109
    %v484 = vunpack.c.l.b16 %v110
    %v485 = vunpack.c.h.b16 %v110
    %v486 = vunpack.c.l.b16 %v111
    %v487 = vunpack.c.h.b16 %v111
    %v488 = vunpack.c.l.b16 %v112
    %v489 = vunpack.c.h.b16 %v112
    %v490 = vunpack.c.l.b16 %v113
    %v491 = vunpack.c.h.b16 %v113
    %v492 = vunpack.c.l.b16 %v114
    %v493 = vunpack.c.h.b16 %v114
    %v494 = vunpack.c.l.b16 %v115
    %v495 = vunpack.c.h.b16 %v115
    %v496 = vunpack.c.l.b16 %v116
    %v497 = vunpack.c.h.b16 %v116
    %v498 = vunpack.c.l.b16 %v117
    %v499 = vunpack.c.h.b16 %v117
    %v500 = vunpack.c.l.b16 %v118
    %v501 = vunpack.c.h.b16 %v118
    %v502 = vunpack.c.l.b16 %v119
    %v503 = vunpack.c.h.b16 %v119
    %v504 = vunpack.c.l.b16 %v120
    %v505 = vunpack.c.h.b16 %v120
    %v506 = vunpack.c.l.b16 %v121
    %v507 = vunpack.c.h.b16 %v121
    %v508 = vunpack.c.l.b16 %v122
    %v509 = vunpack.c.h.b16 %v122
    %v510 = vunpack.c.l.b16 %v123
    %v511 = vunpack.c.h.b16 %v123
    %v512 = vunpack.c.l.b16 %v124
    %v513 = vunpack.c.h.b16 %v124
    %v514 = vunpack.c.l.b16 %v125
    %v515 = vunpack.c.h.b16 %v125
    %v516 = vunpack.c.l.b16 %v126
    %v517 = vunpack.c.h.b16 %v126
    %v518 = vunpack.c.l.b16 %v127
    %v519 = vunpack.c.h.b16 %v127
    %v520 = vunpack.c.l.b16 %v128
    %v521 = vunpack.c.h.b16 %v128
    %v522 = vunpack.c.l.b16 %v129
    %v523 = vunpack.c.h.b16 %v129
    %v524 = vunpack.c.l.b16 %v130
    %v525 = vunpack.c.h.b16 %v130
    %v526 = vunpack.c.l.b16 %v131
    %v527 = vunpack.c.h.b16 %v131
    %v528 = vunpack.c.l.b16 %v132
    %v529 = vunpack.c.h.b16 %v132
    %v530 = vunpack.c.l.b16 %v133
    %v531 = vunpack.c.h.b16 %v133
    %v532 = vunpack.c.l.b16 %v134
    %v533 = vunpack.c.h.b16 %v134
    %v534 = vunpack.c.l.b16 %v135
    %v535 = vunpack.c.h.b16 %v135
    %v536 = vunpack.c.l.b16 %v136
    %v537 = vunpack.c.h.b16 %v136
    %v538 = vunpack.c.l.b16 %v137
    %v539 = vunpack.c.h.b16 %v137
    %v540 = vunpack.c.l.b16 %v138
    %v541 = vunpack.c.h.b16 %v138
    %v542 = vunpack.c.l.b16 %v139
    %v543 = vunpack.c.h.b16 %v139
    %v544 = vunpack.c.l.b16 %v140
    %v545 = vunpack.c.h.b16 %v140
    %v546 = vunpack.c.l.b16 %v141
    %v547 = vunpack.c.h.b16 %v141
    %v548 = vunpack.c.l.b16 %v142
    %v549 = vunpack.c.h.b16 %v142
    %v550 = vunpack.c.l.b16 %v143
    %v551 = vunpack.c.h.b16 %v143
    %v552 = vunpack.c.l.b16 %v144
    %v553 = vunpack.c.h.b16 %v144
    %v554 = vunpack.c.l.b16 %v145
    %v555 = vunpack.c.h.b16 %v145
    %v556 = vunpack.c.l.b16 %v146
    %v557 = vunpack.c.h.b16 %v146
    %v558 = vunpack.c.l.b16 %v147
    %v559 = vunpack.c.h.b16 %v147
    %v560 = vunpack.c.l.b16 %v148
    %v561 = vunpack.c.h.b16 %v148
    %v562 = vunpack.c.l.b16 %v149
    %v563 = vunpack.c.h.b16 %v149
    %v564 = vunpack.c.l.b16 %v150
    %v565 = vunpack.c.h.b16 %v150
    %v566 = vunpack.c.l.b16 %v151
    %v567 = vunpack.c.h.b16 %v151
    %v568 = vunpack.c.l.b16 %v152
    %v569 = vunpack.c.h.b16 %v152
    %v570 = vunpack.c.l.b16 %v153
    %v571 = vunpack.c.h.b16 %v153
    %v572 = vunpack.c.l.b16 %v154
    %v573 = vunpack.c.h.b16 %v154
    %v574 = vunpack.c.l.b16 %v155
    %v575 = vunpack.c.h.b16 %v155
    %v576 = vunpack.c.l.b16 %v156
    %v577 = vunpack.c.h.b16 %v156
    %v578 = vunpack.c.l.b16 %v157
    %v579 = vunpack.c.h.b16 %v157
    %v580 = vunpack.c.l.b16 %v158
    %v581 = vunpack.c.h.b16 %v158
    %v582 = vunpack.c.l.b16 %v159
    %v583 = vunpack.c.h.b16 %v159
    %v584 = vunpack.c.l.b16 %v160
    %v585 = vunpack.c.h.b16 %v160
    %v586 = vunpack.c.l.b16 %v161
    %v587 = vunpack.c.h.b16 %v161
    %v588 = vunpack.c.l.b16 %v162
    %v589 = vunpack.c.h.b16 %v162
    %v590 = vunpack.c.l.b16 %v163
    %v591 = vunpack.c.h.b16 %v163
    %v592 = vunpack.c.l.b16 %v164
    %v593 = vunpack.c.h.b16 %v164
    %v594 = vunpack.c.l.b16 %v165
    %v595 = vunpack.c.h.b16 %v165
    %v596 = vunpack.c.l.b16 %v166
    %v597 = vunpack.c.h.b16 %v166
    %v598 = vunpack.c.l.b16 %v167
    %v599 = vunpack.c.h.b16 %v167
    %v600 = vunpack.c.l.b16 %v168
    %v601 = vunpack.c.h.b16 %v168
    %v602 = vunpack.c.l.b16 %v169
    %v603 = vunpack.c.h.b16 %v169
    %v604 = vunpack.c.l.b16 %v170
    %v605 = vunpack.c.h.b16 %v170
    %v606 = vunpack.c.l.b16 %v171
    %v607 = vunpack.c.h.b16 %v171
    %v608 = vunpack.c.l.b16 %v172
    %v609 = vunpack.c.h.b16 %v172
    %v610 = vunpack.c.l.b16 %v173
    %v611 = vunpack.c.h.b16 %v173
    %v612 = vunpack.c.l.b16 %v174
    %v613 = vunpack.c.h.b16 %v174
    %v614 = vunpack.c.l.b16 %v175
    %v615 = vunpack.c.h.b16 %v175
    %v616 = vunpack.c.l.b16 %v176
    %v617 = vunpack.c.h.b16 %v176
    %v618 = vunpack.c.l.b16 %v177
    %v619 = vunpack.c.h.b16 %v177
    %v620 = vpack.c.b16 %v366, %v364
    %v621 = vpack.c.b16 %v367, %v365
    %v622 = vpack.c.b16 %v370, %v368
    %v623 = vpack.c.b16 %v371, %v369
    %v624 = vpack.c.b16 %v374, %v372
    %v625 = vpack.c.b16 %v375, %v373
    %v626 = vpack.c.b16 %v378, %v376
    %v627 = vpack.c.b16 %v379, %v377
    %v628 = vpack.c.b16 %v382, %v380
    %v629 = vpack.c.b16 %v383, %v381
    %v630 = vpack.c.b16 %v386, %v384
    %v631 = vpack.c.b16 %v387, %v385
    %v632 = vpack.c.b16 %v390, %v388
    %v633 = vpack.c.b16 %v391, %v389
    %v634 = vpack.c.b16 %v394, %v392
    %v635 = vpack.c.b16 %v395, %v393
    %v636 = vpack.c.b16 %v398, %v396
    %v637 = vpack.c.b16 %v399, %v397
    %v638 = vpack.c.b16 %v402, %v400
    %v639 = vpack.c.b16 %v403, %v401
    %v640 = vpack.c.b16 %v406, %v404
    %v641 = vpack.c.b16 %v407, %v405
    %v642 = vpack.c.b16 %v410, %v408
    %v643 = vpack.c.b16 %v411, %v409
    %v644 = vpack.c.b16 %v414, %v412
    %v645 = vpack.c.b16 %v415, %v413
    %v646 = vpack.c.b16 %v418, %v416
    %v647 = vpack.c.b16 %v419, %v417
    %v648 = vpack.c.b16 %v422, %v420
    %v649 = vpack.c.b16 %v423, %v421
    %v650 = vpack.c.b16 %v426, %v424
    %v651 = vpack.c.b16 %v427, %v425
    %v652 = vpack.c.b16 %v430, %v428
    %v653 = vpack.c.b16 %v431, %v429
    %v654 = vpack.c.b16 %v434, %v432
    %v655 = vpack.c.b16 %v435, %v433
    %v656 = vpack.c.b16 %v438, %v436
    %v657 = vpack.c.b16 %v439, %v437
    %v658 = vpack.c.b16 %v442, %v440
    %v659 = vpack.c.b16 %v443, %v441
    %v660 = vpack.c.b16 %v446, %v444
    %v661 = vpack.c.b16 %v447, %v445
    %v662 = vpack.c.b16 %v450, %v448
    %v663 = vpack.c.b16 %v451, %v449
    %v664 = vpack.c.b16 %v454, %v452
    %v665 = vpack.c.b16 %v455, %v453
    %v666 = vpack.c.b16 %v458, %v456
    %v667 = vpack.c.b16 %v459, %v457
    %v668 = vpack.c.b16 %v462, %v460
    %v669 = vpack.c.b16 %v463, %v461
    %v670 = vpack.c.b16 %v466, %v464
    %v671 = vpack.c.b16 %v467, %v465
    %v672 = vpack.c.b16 %v470, %v468
    %v673 = vpack.c.b16 %v471, %v469
    %v674 = vpack.c.b16 %v474, %v472
    %v675 = vpack.c.b16 %v475, %v473
    %v676 = vpack.c.b16 %v478, %v476
    %v677 = vpack.c.b16 %v479, %v477
    %v678 = vpack.c.b16 %v482, %v480
    %v679 = vpack.c.b16 %v483, %v481
    %v680 = vpack.c.b16 %v486, %v484
    %v681 = vpack.c.b16 %v487, %v485
    %v682 = vpack.c.b16 %v490, %v488
    %v683 = vpack.c.b16 %v491, %v489
    %v684 = vpack.c.b16 %v494, %v492
    %v685 = vpack.c.b16 %v495, %v493
    %v686 = vpack.c.b16 %v498, %v496
    %v687 = vpack.c.b16 %v499, %v497
    %v688 = vpack.c.b16 %v502, %v500
    %v689 = vpack.c.b16 %v503, %v501
    %v690 = vpack.c.b16 %v506, %v504
    %v691 = vpack.c.b16 %v507, %v505
    %v692 = vpack.c.b16 %v510, %v508
    %v693 = vpack.c.b16 %v511, %v509
    %v694 = vpack.c.b16 %v514, %v512
    %v695 = vpack.c.b16 %v515, %v513
    %v696 = vpack.c.b16 %v518, %v516
    %v697 = vpack.c.b16 %v519, %v517
    %v698 = vpack.c.b16 %v522, %v520
    %v699 = vpack.c.b16 %v523, %v521
    %v700 = vpack.c.b16 %v526, %v524
    %v701 = vpack.c.b16 %v527, %v525
    %v702 = vpack.c.b16 %v530, %v528
    %v703 = vpack.c.b16 %v531, %v529
    %v704 = vpack.c.b16 %v534, %v532
    %v705 = vpack.c.b16 %v535, %v533
    %v706 = vpack.c.b16 %v538, %v536
    %v707 = vpack.c.b16 %v539, %v537
    %v708 = vpack.c.b16 %v542, %v540
    %v709 = vpack.c.b16 %v543, %v541
    %v710 = vpack.c.b16 %v546, %v544
    %v711 = vpack.c.b16 %v547, %v545
    %v712 = vpack.c.b16 %v550, %v548
    %v713 = vpack.c.b16 %v551, %v549
    %v714 = vpack.c.b16 %v554, %v552
    %v715 = vpack.c.b16 %v555, %v553
    %v716 = vpack.c.b16 %v558, %v556
    %v717 = vpack.c.b16 %v559, %v557
    %v718 = vpack.c.b16 %v562, %v560
    %v719 = vpack.c.b16 %v563, %v561
    %v720 = vpack.c.b16 %v566, %v564
    %v721 = vpack.c.b16 %v567, %v565
    %v722 = vpack.c.b16 %v570, %v568
    %v723 = vpack.c.b16 %v571, %v569
    %v724 = vpack.c.b16 %v574, %v572
    %v725 = vpack.c.b16 %v575, %v573
    %v726 = vpack.c.b16 %v578, %v576
    %v727 = vpack.c.b16 %v579, %v577
    %v728 = vpack.c.b16 %v582, %v580
    %v729 = vpack.c.b16 %v583, %v581
    %v730 = vpack.c.b16 %v586, %v584
    %v731 = vpack.c.b16 %v587, %v585
    %v732 = vpack.c.b16 %v590, %v588
    %v733 = vpack.c.b16 %v591, %v589
    %v734 = vpack.c.b16 %v594, %v592
    %v735 = vpack.c.b16 %v595, %v593
    %v736 = vpack.c.b16 %v598, %v596
    %v737 = vpack.c.b16 %v599, %v597
    %v738 = vpack.c.b16 %v602, %v600
    %v739 = vpack.c.b16 %v603, %v601
    %v740 = vpack.c.b16 %v606, %v604
    %v741 = vpack.c.b16 %v607, %v605
    %v742 = vpack.c.b16 %v610, %v608
    %v743 = vpack.c.b16 %v611, %v609
    %v744 = vpack.c.b16 %v614, %v612
    %v745 = vpack.c.b16 %v615, %v613
    %v746 = vpack.c.b16 %v618, %v616
    %v747 = vpack.c.b16 %v619, %v617
    %876 = vmatprep.subr.bf16.mxu0 %v621
    %877 = vmatpush1.bf16.msra.mxu0 %v620
    %878 = vmatprep.subr.bf16.mxu0 %v623
    %879 = vmatpush1.bf16.msra.mxu0 %v622
    %880 = vmatprep.subr.bf16.mxu0 %v625
    %881 = vmatpush1.bf16.msra.mxu0 %v624
    %882 = vmatprep.subr.bf16.mxu0 %v627
    %883 = vmatpush1.bf16.msra.mxu0 %v626
    %884 = vmatprep.subr.bf16.mxu0 %v629
    %885 = vmatpush1.bf16.msra.mxu0 %v628
    %886 = vmatprep.subr.bf16.mxu0 %v631
    %887 = vmatpush1.bf16.msra.mxu0 %v630
    %888 = vmatprep.subr.bf16.mxu0 %v633
    %889 = vmatpush1.bf16.msra.mxu0 %v632
    %890 = vmatprep.subr.bf16.mxu0 %v635
    %891 = vmatpush1.bf16.msra.mxu0 %v634
    %892 = vmatprep.subr.bf16.mxu0 %v637
    %893 = vmatpush1.bf16.msra.mxu0 %v636
    %894 = vmatprep.subr.bf16.mxu0 %v639
    %895 = vmatpush1.bf16.msra.mxu0 %v638
    %896 = vmatprep.subr.bf16.mxu0 %v641
    %897 = vmatpush1.bf16.msra.mxu0 %v640
    %898 = vmatprep.subr.bf16.mxu0 %v643
    %899 = vmatpush1.bf16.msra.mxu0 %v642
    %900 = vmatprep.subr.bf16.mxu0 %v645
    %901 = vmatpush1.bf16.msra.mxu0 %v644
    %902 = vmatprep.subr.bf16.mxu0 %v647
    %903 = vmatpush1.bf16.msra.mxu0 %v646
    %904 = vmatprep.subr.bf16.mxu0 %v649
    %905 = vmatpush1.bf16.msra.mxu0 %v648
    %906 = vmatprep.subr.bf16.mxu0 %v651
    %907 = vmatpush1.bf16.msra.mxu0 %v650
    %908 = vmatprep.mubr.bf16.mxu0 %v216
    %909 = vmatmul.mubr.bf16.gmra.mrb[0].mxu0 %v202
    %v910 = vpop.f32.mrb[0].mxu0
    %v911 = vadd.f32 0.0, %v910
    %v912 = vpop.f32.mrb[0].mxu0
    %v913 = vadd.f32 0.0, %v912
    %v914 = vpop.f32.mrb[0].mxu0
    %v915 = vpop.f32.mrb[0].mxu0
    %916 = vdwg.mxu0
    %917 = vmatprep.subr.bf16.mxu0 %v653
    %918 = vmatpush1.bf16.msra.mxu0 %v652
    %919 = vmatprep.subr.bf16.mxu0 %v655
    %920 = vmatpush1.bf16.msra.mxu0 %v654
    %921 = vmatprep.subr.bf16.mxu0 %v657
    %922 = vmatpush1.bf16.msra.mxu0 %v656
    %923 = vmatprep.subr.bf16.mxu0 %v659
    %924 = vmatpush1.bf16.msra.mxu0 %v658
    %925 = vmatprep.subr.bf16.mxu0 %v661
    %926 = vmatpush1.bf16.msra.mxu0 %v660
    %927 = vmatprep.subr.bf16.mxu0 %v663
    %928 = vmatpush1.bf16.msra.mxu0 %v662
    %929 = vmatprep.subr.bf16.mxu0 %v665
    %930 = vmatpush1.bf16.msra.mxu0 %v664
    %931 = vmatprep.subr.bf16.mxu0 %v667
    %932 = vmatpush1.bf16.msra.mxu0 %v666
    %933 = vmatprep.subr.bf16.mxu0 %v669
    %934 = vmatpush1.bf16.msra.mxu0 %v668
    %935 = vmatprep.subr.bf16.mxu0 %v671
    %936 = vmatpush1.bf16.msra.mxu0 %v670
    %937 = vmatprep.subr.bf16.mxu0 %v673
    %938 = vmatpush1.bf16.msra.mxu0 %v672
    %939 = vmatprep.subr.bf16.mxu0 %v675
    %940 = vmatpush1.bf16.msra.mxu0 %v674
    %941 = vmatprep.subr.bf16.mxu0 %v677
    %942 = vmatpush1.bf16.msra.mxu0 %v676
    %943 = vmatprep.subr.bf16.mxu0 %v679
    %944 = vmatpush1.bf16.msra.mxu0 %v678
    %945 = vmatprep.subr.bf16.mxu0 %v681
    %946 = vmatpush1.bf16.msra.mxu0 %v680
    %947 = vmatprep.subr.bf16.mxu0 %v683
    %948 = vmatpush1.bf16.msra.mxu0 %v682
    %949 = vmatprep.mubr.bf16.mxu0 %v226
    %950 = vmatmul.mubr.bf16.gmra.mrb[0].mxu0 %v224
    %v951 = vpop.f32.mrb[0].mxu0
    %v952 = vadd.f32 %v911, %v951
    %v953 = vpop.f32.mrb[0].mxu0
    %v954 = vadd.f32 %v913, %v953
    %v955 = vpop.f32.mrb[0].mxu0
    %v956 = vpop.f32.mrb[0].mxu0
    %957 = vdwg.mxu0
    %958 = vmatprep.subr.bf16.mxu0 %v685
    %959 = vmatpush1.bf16.msra.mxu0 %v684
    %960 = vmatprep.subr.bf16.mxu0 %v687
    %961 = vmatpush1.bf16.msra.mxu0 %v686
    %962 = vmatprep.subr.bf16.mxu0 %v689
    %963 = vmatpush1.bf16.msra.mxu0 %v688
    %964 = vmatprep.subr.bf16.mxu0 %v691
    %965 = vmatpush1.bf16.msra.mxu0 %v690
    %966 = vmatprep.subr.bf16.mxu0 %v693
    %967 = vmatpush1.bf16.msra.mxu0 %v692
    %968 = vmatprep.subr.bf16.mxu0 %v695
    %969 = vmatpush1.bf16.msra.mxu0 %v694
    %970 = vmatprep.subr.bf16.mxu0 %v697
    %971 = vmatpush1.bf16.msra.mxu0 %v696
    %972 = vmatprep.subr.bf16.mxu0 %v699
    %973 = vmatpush1.bf16.msra.mxu0 %v698
    %974 = vmatprep.subr.bf16.mxu0 %v701
    %975 = vmatpush1.bf16.msra.mxu0 %v700
    %976 = vmatprep.subr.bf16.mxu0 %v703
    %977 = vmatpush1.bf16.msra.mxu0 %v702
    %978 = vmatprep.subr.bf16.mxu0 %v705
    %979 = vmatpush1.bf16.msra.mxu0 %v704
    %980 = vmatprep.subr.bf16.mxu0 %v707
    %981 = vmatpush1.bf16.msra.mxu0 %v706
    %982 = vmatprep.subr.bf16.mxu0 %v709
    %983 = vmatpush1.bf16.msra.mxu0 %v708
    %984 = vmatprep.subr.bf16.mxu0 %v711
    %985 = vmatpush1.bf16.msra.mxu0 %v710
    %986 = vmatprep.subr.bf16.mxu0 %v713
    %987 = vmatpush1.bf16.msra.mxu0 %v712
    %988 = vmatprep.subr.bf16.mxu0 %v715
    %989 = vmatpush1.bf16.msra.mxu0 %v714
    %990 = vmatprep.mubr.bf16.mxu0 %v223
    %991 = vmatmul.mubr.bf16.gmra.mrb[0].mxu0 %v209
    %v992 = vpop.f32.mrb[0].mxu0
    %v993 = vadd.f32 %v952, %v992
    %v994 = vpop.f32.mrb[0].mxu0
    %v995 = vadd.f32 %v954, %v994
    %v996 = vpop.f32.mrb[0].mxu0
    %v997 = vpop.f32.mrb[0].mxu0
    %998 = vdwg.mxu0
    %999 = vmatprep.subr.bf16.mxu0 %v717
    %1000 = vmatpush1.bf16.msra.mxu0 %v716
    %1001 = vmatprep.subr.bf16.mxu0 %v719
    %1002 = vmatpush1.bf16.msra.mxu0 %v718
    %1003 = vmatprep.subr.bf16.mxu0 %v721
    %1004 = vmatpush1.bf16.msra.mxu0 %v720
    %1005 = vmatprep.subr.bf16.mxu0 %v723
    %1006 = vmatpush1.bf16.msra.mxu0 %v722
    %1007 = vmatprep.subr.bf16.mxu0 %v725
    %1008 = vmatpush1.bf16.msra.mxu0 %v724
    %1009 = vmatprep.subr.bf16.mxu0 %v727
    %1010 = vmatpush1.bf16.msra.mxu0 %v726
    %1011 = vmatprep.subr.bf16.mxu0 %v729
    %1012 = vmatpush1.bf16.msra.mxu0 %v728
    %1013 = vmatprep.subr.bf16.mxu0 %v731
    %1014 = vmatpush1.bf16.msra.mxu0 %v730
    %1015 = vmatprep.subr.bf16.mxu0 %v733
    %1016 = vmatpush1.bf16.msra.mxu0 %v732
    %1017 = vmatprep.subr.bf16.mxu0 %v735
    %1018 = vmatpush1.bf16.msra.mxu0 %v734
    %1019 = vmatprep.subr.bf16.mxu0 %v737
    %1020 = vmatpush1.bf16.msra.mxu0 %v736
    %1021 = vmatprep.subr.bf16.mxu0 %v739
    %1022 = vmatpush1.bf16.msra.mxu0 %v738
    %1023 = vmatprep.subr.bf16.mxu0 %v741
    %1024 = vmatpush1.bf16.msra.mxu0 %v740
    %1025 = vmatprep.subr.bf16.mxu0 %v743
    %1026 = vmatpush1.bf16.msra.mxu0 %v742
    %1027 = vmatprep.subr.bf16.mxu0 %v745
    %1028 = vmatpush1.bf16.msra.mxu0 %v744
    %1029 = vmatprep.subr.bf16.mxu0 %v747
    %1030 = vmatpush1.bf16.msra.mxu0 %v746
    %1031 = vmatprep.mubr.bf16.mxu0 %v227
    %1032 = vmatmul.mubr.bf16.gmra.mrb[0].mxu0 %v225
    %v1033 = vpop.f32.mrb[0].mxu0
    %v1034 = vadd.f32 %v993, %v1033
    %v1035 = vpop.f32.mrb[0].mxu0
    %v1036 = vadd.f32 %v995, %v1035
    %v1037 = vpop.f32.mrb[0].mxu0
    %v1038 = vpop.f32.mrb[0].mxu0
    %1039 = vdwg.mxu0
    %v1042 = vcombine.low %v1034, %v1036
    %v1044 = vunpack.c.l.s4 1983009808
    %v1045 = vunpack.c.0.s8 %v1044
    %v1046 = vlaneseq
    %v1047 = vshrl.u32 %v1046, 7
    %v1048 = vsub.s32 %v1045, %v1047
    %v1049 = vrot.slane %v1042, %v1048
    %v1051 = vadd.f32 %v48, %v1049
    %1052 = vst [vmem:[#allocation2] sm:$0xf] %v1051
    // Predicated region
    $region54: #{forward.7} parent=1 // pred_check
      %p1053 = pneg %p43
    $region55: #{forward.7} parent=1 // pred_check_branch
      %1055 = sbr.rel (%p1053) target = $region57
    $region56: #{forward.7} parent=1 // pred_region
      %v1056 = vld [vmem:[#allocation2] sm:$0xf]
      %v1057 = vld [vmem:[%s2] sm:$0x1]
      %v1058 = vld [vmem:[%s3] sm:$0xf]
      %v1061 = vunpack.c.l.s4 1983009808
      %v1062 = vunpack.c.0.s8 %v1061
      %v1063 = vlaneseq
      %v1064 = vshrl.u32 %v1063, 7
      %v1065 = vsub.s32 %v1062, %v1064
      %v1066 = vrot.slane %v1058, %v1065
      %v1067 = vcombine.high %v1066, %v1066
      %vm1068 = vcmask 31744
      %v1070 = vsel %vm1068, %v1057, 0
      %vm1072 = vcmask 1041408
      %v1074 = vsel %vm1072, %v1066, 0
      %v1077 = vsel %vm1072, %v1067, 0
      %1079 = vmatprep.subr.bf16.mxu0 %v1077
      %1080 = vmatpush1.bf16.msra.mxu0 %v1074
      %1081 = vmatprep.subr.bf16.mxu0 0
      %1082 = vmatpush1.bf16.msra.mxu0 0
      %1083 = vmatprep.subr.bf16.mxu0 0
      %1084 = vmatpush1.bf16.msra.mxu0 0
      %1085 = vmatprep.subr.bf16.mxu0 0
      %1086 = vmatpush1.bf16.msra.mxu0 0
      %1087 = vmatprep.subr.bf16.mxu0 0
      %1088 = vmatpush1.bf16.msra.mxu0 0
      %1089 = vmatprep.subr.bf16.mxu0 0
      %1090 = vmatpush1.bf16.msra.mxu0 0
      %1091 = vmatprep.subr.bf16.mxu0 0
      %1092 = vmatpush1.bf16.msra.mxu0 0
      %1093 = vmatprep.subr.bf16.mxu0 0
      %1094 = vmatpush1.bf16.msra.mxu0 0
      %1095 = vmatprep.subr.bf16.mxu0 0
      %1096 = vmatpush1.bf16.msra.mxu0 0
      %1097 = vmatprep.subr.bf16.mxu0 0
      %1098 = vmatpush1.bf16.msra.mxu0 0
      %1099 = vmatprep.subr.bf16.mxu0 0
      %1100 = vmatpush1.bf16.msra.mxu0 0
      %1101 = vmatprep.subr.bf16.mxu0 0
      %1102 = vmatpush1.bf16.msra.mxu0 0
      %1103 = vmatprep.subr.bf16.mxu0 0
      %1104 = vmatpush1.bf16.msra.mxu0 0
      %1105 = vmatprep.subr.bf16.mxu0 0
      %1106 = vmatpush1.bf16.msra.mxu0 0
      %1107 = vmatprep.subr.bf16.mxu0 0
      %1108 = vmatpush1.bf16.msra.mxu0 0
      %1109 = vmatprep.subr.bf16.mxu0 0
      %1110 = vmatpush1.bf16.msra.mxu0 0
      %1111 = vmatprep.mubr.bf16.mxu0 0
      %1112 = vmatmul.mubr.bf16.gmra.mrb[0].mxu0 %v1070
      %v1113 = vpop.f32.mrb[0].mxu0
      %v1114 = vadd.f32 0.0, %v1113
      %v1115 = vpop.f32.mrb[0].mxu0
      %v1116 = vadd.f32 0.0, %v1115
      %v1117 = vpop.f32.mrb[0].mxu0
      %v1118 = vpop.f32.mrb[0].mxu0
      %1119 = vdwg.mxu0
      %v1122 = vcombine.low %v1114, %v1116
      %v1124 = vunpack.c.l.s4 1983009808
      %v1125 = vunpack.c.0.s8 %v1124
      %v1126 = vlaneseq
      %v1127 = vshrl.u32 %v1126, 7
      %v1128 = vsub.s32 %v1125, %v1127
      %v1129 = vrot.slane %v1122, %v1128
      %v1131 = vadd.f32 %v1056, %v1129
      %v1132 = vld [vmem:[%s4] sm:$0x3]
      %v1134 = vlaneseq
      %v1135 = vshrl.u32 %v1134, 7
      %v1136 = vsub.s32 0, %v1135
      %v1137 = vrot.slane %v1132, %v1136
      %v1138 = vlaneseq
      %v1139 = vshrl.u32 %v1138, 7
      %v1140 = vsub.s32 1, %v1139
      %v1141 = vrot.slane %v1132, %v1140
      %v1142 = vcombine.low %v1137, %v1141
      %v1144 = vunpack.c.l.s4 1983009808
      %v1145 = vunpack.c.0.s8 %v1144
      %v1146 = vlaneseq
      %v1147 = vshrl.u32 %v1146, 7
      %v1148 = vsub.s32 %v1145, %v1147
      %v1149 = vrot.slane %v1142, %v1148
      %v1151 = vadd.f32 %v1131, %v1149
      %vm1152 = vcmp.gt.f32.partialorder %v1151, 0.0
      %v1153 = vmul.f32 %v1151, 0.01
      %v1154 = vsel %vm1152, %v1151, %v1153
      %v1157 = vunpack.c.l.s4 1983009808
      %v1158 = vunpack.c.0.s8 %v1157
      %v1159 = vlaneseq
      %v1160 = vshrl.u32 %v1159, 7
      %v1161 = vsub.s32 %v1158, %v1160
      %v1162 = vrot.slane %v1154, %v1161
      %v1163 = vcombine.high %v1162, %v1162
      %v1166 = vpack.c.bf16 %v1162, %v1162
      %v1167 = vpack.c.bf16 %v1163, %v1163
      %v1168 = vld [vmem:[%s5] sm:$0xff]
      %v1169 = vld [vmem:[%s5 + $0x8] sm:$0xff]
      %v1170 = vld [vmem:[%s5 + $0x10] sm:$0xff]
      %v1171 = vld [vmem:[%s5 + $0x18] sm:$0xff]
      %v1172 = vld [vmem:[%s5 + $0x20] sm:$0xff]
      %v1173 = vld [vmem:[%s5 + $0x28] sm:$0xff]
      %v1174 = vld [vmem:[%s5 + $0x30] sm:$0xff]
      %v1175 = vld [vmem:[%s5 + $0x38] sm:$0xff]
      %v1176 = vld [vmem:[%s5 + $0x40] sm:$0xff]
      %v1177 = vld [vmem:[%s5 + $0x48] sm:$0xff]
      %v1178 = vld [vmem:[%s5 + $0x50] sm:$0xff]
      %v1179 = vld [vmem:[%s5 + $0x58] sm:$0xff]
      %v1180 = vld [vmem:[%s5 + $0x60] sm:$0xff]
      %v1181 = vld [vmem:[%s5 + $0x68] sm:$0xff]
      %v1182 = vld [vmem:[%s5 + $0x70] sm:$0xff]
      %v1183 = vld [vmem:[%s5 + $0x78] sm:$0xff]
      %v1184 = vld [vmem:[%s5 + $0x80] sm:$0xff]
      %v1185 = vld [vmem:[%s5 + $0x88] sm:$0xff]
      %v1186 = vld [vmem:[%s5 + $0x90] sm:$0xff]
      %v1187 = vld [vmem:[%s5 + $0x98] sm:$0xff]
      %v1188 = vld [vmem:[%s5 + $0xa0] sm:$0xff]
      %v1189 = vld [vmem:[%s5 + $0xa8] sm:$0xff]
      %v1190 = vld [vmem:[%s5 + $0xb0] sm:$0xff]
      %v1191 = vld [vmem:[%s5 + $0xb8] sm:$0xff]
      %v1192 = vld [vmem:[%s5 + $0xc0] sm:$0xff]
      %v1193 = vld [vmem:[%s5 + $0xc8] sm:$0xff]
      %v1194 = vld [vmem:[%s5 + $0xd0] sm:$0xff]
      %v1195 = vld [vmem:[%s5 + $0xd8] sm:$0xff]
      %v1196 = vld [vmem:[%s5 + $0xe0] sm:$0xff]
      %v1197 = vld [vmem:[%s5 + $0xe8] sm:$0xff]
      %v1198 = vld [vmem:[%s5 + $0xf0] sm:$0xff]
      %v1199 = vld [vmem:[%s5 + $0xf8] sm:$0xff]
      %v1200 = vld [vmem:[%s6] sm:$0x3]
      %v1202 = vlaneseq
      %v1203 = vshrl.u32 %v1202, 7
      %v1204 = vsub.s32 0, %v1203
      %v1205 = vrot.slane %v1200, %v1204
      %v1206 = vlaneseq
      %v1207 = vshrl.u32 %v1206, 7
      %v1208 = vsub.s32 1, %v1207
      %v1209 = vrot.slane %v1200, %v1208
      %v1244 = vunpack.c.l.b16 %v1168
      %v1245 = vunpack.c.h.b16 %v1168
      %v1246 = vunpack.c.l.b16 %v1169
      %v1247 = vunpack.c.h.b16 %v1169
      %v1248 = vunpack.c.l.b16 %v1170
      %v1249 = vunpack.c.h.b16 %v1170
      %v1250 = vunpack.c.l.b16 %v1171
      %v1251 = vunpack.c.h.b16 %v1171
      %v1252 = vunpack.c.l.b16 %v1172
      %v1253 = vunpack.c.h.b16 %v1172
      %v1254 = vunpack.c.l.b16 %v1173
      %v1255 = vunpack.c.h.b16 %v1173
      %v1256 = vunpack.c.l.b16 %v1174
      %v1257 = vunpack.c.h.b16 %v1174
      %v1258 = vunpack.c.l.b16 %v1175
      %v1259 = vunpack.c.h.b16 %v1175
      %v1260 = vunpack.c.l.b16 %v1176
      %v1261 = vunpack.c.h.b16 %v1176
      %v1262 = vunpack.c.l.b16 %v1177
      %v1263 = vunpack.c.h.b16 %v1177
      %v1264 = vunpack.c.l.b16 %v1178
      %v1265 = vunpack.c.h.b16 %v1178
      %v1266 = vunpack.c.l.b16 %v1179
      %v1267 = vunpack.c.h.b16 %v1179
      %v1268 = vunpack.c.l.b16 %v1180
      %v1269 = vunpack.c.h.b16 %v1180
      %v1270 = vunpack.c.l.b16 %v1181
      %v1271 = vunpack.c.h.b16 %v1181
      %v1272 = vunpack.c.l.b16 %v1182
      %v1273 = vunpack.c.h.b16 %v1182
      %v1274 = vunpack.c.l.b16 %v1183
      %v1275 = vunpack.c.h.b16 %v1183
      %v1276 = vunpack.c.l.b16 %v1184
      %v1277 = vunpack.c.h.b16 %v1184
      %v1278 = vunpack.c.l.b16 %v1185
      %v1279 = vunpack.c.h.b16 %v1185
      %v1280 = vunpack.c.l.b16 %v1186
      %v1281 = vunpack.c.h.b16 %v1186
      %v1282 = vunpack.c.l.b16 %v1187
      %v1283 = vunpack.c.h.b16 %v1187
      %v1284 = vunpack.c.l.b16 %v1188
      %v1285 = vunpack.c.h.b16 %v1188
      %v1286 = vunpack.c.l.b16 %v1189
      %v1287 = vunpack.c.h.b16 %v1189
      %v1288 = vunpack.c.l.b16 %v1190
      %v1289 = vunpack.c.h.b16 %v1190
      %v1290 = vunpack.c.l.b16 %v1191
      %v1291 = vunpack.c.h.b16 %v1191
      %v1292 = vunpack.c.l.b16 %v1192
      %v1293 = vunpack.c.h.b16 %v1192
      %v1294 = vunpack.c.l.b16 %v1193
      %v1295 = vunpack.c.h.b16 %v1193
      %v1296 = vunpack.c.l.b16 %v1194
      %v1297 = vunpack.c.h.b16 %v1194
      %v1298 = vunpack.c.l.b16 %v1195
      %v1299 = vunpack.c.h.b16 %v1195
      %v1300 = vunpack.c.l.b16 %v1196
      %v1301 = vunpack.c.h.b16 %v1196
      %v1302 = vunpack.c.l.b16 %v1197
      %v1303 = vunpack.c.h.b16 %v1197
      %v1304 = vunpack.c.l.b16 %v1198
      %v1305 = vunpack.c.h.b16 %v1198
      %v1306 = vunpack.c.l.b16 %v1199
      %v1307 = vunpack.c.h.b16 %v1199
      %v1308 = vpack.c.b16 %v1246, %v1244
      %v1309 = vpack.c.b16 %v1247, %v1245
      %v1310 = vpack.c.b16 %v1250, %v1248
      %v1311 = vpack.c.b16 %v1251, %v1249
      %v1312 = vpack.c.b16 %v1254, %v1252
      %v1313 = vpack.c.b16 %v1255, %v1253
      %v1314 = vpack.c.b16 %v1258, %v1256
      %v1315 = vpack.c.b16 %v1259, %v1257
      %v1316 = vpack.c.b16 %v1262, %v1260
      %v1317 = vpack.c.b16 %v1263, %v1261
      %v1318 = vpack.c.b16 %v1266, %v1264
      %v1319 = vpack.c.b16 %v1267, %v1265
      %v1320 = vpack.c.b16 %v1270, %v1268
      %v1321 = vpack.c.b16 %v1271, %v1269
      %v1322 = vpack.c.b16 %v1274, %v1272
      %v1323 = vpack.c.b16 %v1275, %v1273
      %v1324 = vpack.c.b16 %v1278, %v1276
      %v1325 = vpack.c.b16 %v1279, %v1277
      %v1326 = vpack.c.b16 %v1282, %v1280
      %v1327 = vpack.c.b16 %v1283, %v1281
      %v1328 = vpack.c.b16 %v1286, %v1284
      %v1329 = vpack.c.b16 %v1287, %v1285
      %v1330 = vpack.c.b16 %v1290, %v1288
      %v1331 = vpack.c.b16 %v1291, %v1289
      %v1332 = vpack.c.b16 %v1294, %v1292
      %v1333 = vpack.c.b16 %v1295, %v1293
      %v1334 = vpack.c.b16 %v1298, %v1296
      %v1335 = vpack.c.b16 %v1299, %v1297
      %v1336 = vpack.c.b16 %v1302, %v1300
      %v1337 = vpack.c.b16 %v1303, %v1301
      %v1338 = vpack.c.b16 %v1306, %v1304
      %v1339 = vpack.c.b16 %v1307, %v1305
      %1372 = vmatprep.subr.bf16.mxu0 %v1309
      %1373 = vmatpush1.bf16.msra.mxu0 %v1308
      %1374 = vmatprep.subr.bf16.mxu0 %v1311
      %1375 = vmatpush1.bf16.msra.mxu0 %v1310
      %1376 = vmatprep.subr.bf16.mxu0 %v1313
      %1377 = vmatpush1.bf16.msra.mxu0 %v1312
      %1378 = vmatprep.subr.bf16.mxu0 %v1315
      %1379 = vmatpush1.bf16.msra.mxu0 %v1314
      %1380 = vmatprep.subr.bf16.mxu0 %v1317
      %1381 = vmatpush1.bf16.msra.mxu0 %v1316
      %1382 = vmatprep.subr.bf16.mxu0 %v1319
      %1383 = vmatpush1.bf16.msra.mxu0 %v1318
      %1384 = vmatprep.subr.bf16.mxu0 %v1321
      %1385 = vmatpush1.bf16.msra.mxu0 %v1320
      %1386 = vmatprep.subr.bf16.mxu0 %v1323
      %1387 = vmatpush1.bf16.msra.mxu0 %v1322
      %1388 = vmatprep.subr.bf16.mxu0 %v1325
      %1389 = vmatpush1.bf16.msra.mxu0 %v1324
      %1390 = vmatprep.subr.bf16.mxu0 %v1327
      %1391 = vmatpush1.bf16.msra.mxu0 %v1326
      %1392 = vmatprep.subr.bf16.mxu0 %v1329
      %1393 = vmatpush1.bf16.msra.mxu0 %v1328
      %1394 = vmatprep.subr.bf16.mxu0 %v1331
      %1395 = vmatpush1.bf16.msra.mxu0 %v1330
      %1396 = vmatprep.subr.bf16.mxu0 %v1333
      %1397 = vmatpush1.bf16.msra.mxu0 %v1332
      %1398 = vmatprep.subr.bf16.mxu0 %v1335
      %1399 = vmatpush1.bf16.msra.mxu0 %v1334
      %1400 = vmatprep.subr.bf16.mxu0 %v1337
      %1401 = vmatpush1.bf16.msra.mxu0 %v1336
      %1402 = vmatprep.subr.bf16.mxu0 %v1339
      %1403 = vmatpush1.bf16.msra.mxu0 %v1338
      %1404 = vmatprep.mubr.bf16.mxu0 %v1167
      %1405 = vmatmul.mubr.bf16.gmra.mrb[0].mxu0 %v1166
      %v1406 = vpop.f32.mrb[0].mxu0
      %v1407 = vadd.f32 %v1205, %v1406
      %v1408 = vpop.f32.mrb[0].mxu0
      %v1409 = vadd.f32 %v1209, %v1408
      %v1410 = vpop.f32.mrb[0].mxu0
      %v1411 = vpop.f32.mrb[0].mxu0
      %1412 = vdwg.mxu0
      %vm1413 = vcmp.gt.f32.partialorder %v1407, 0.0
      %vm1414 = vcmp.gt.f32.partialorder %v1409, 0.0
      %v1415 = vmul.f32 %v1407, 0.01
      %v1416 = vmul.f32 %v1409, 0.01
      %v1417 = vsel %vm1413, %v1407, %v1415
      %v1418 = vsel %vm1414, %v1409, %v1416
      %v1419 = vpack.c.bf16 %v1417, %v1417
      %v1420 = vpack.c.bf16 %v1418, %v1418
      %v1421 = vld [vmem:[%s7] sm:$0xff]
      %v1422 = vld [vmem:[%s7 + $0x8] sm:$0xff]
      %v1423 = vld [vmem:[%s7 + $0x10] sm:$0xff]
      %v1424 = vld [vmem:[%s7 + $0x18] sm:$0xff]
      %v1425 = vld [vmem:[%s7 + $0x20] sm:$0xff]
      %v1426 = vld [vmem:[%s7 + $0x28] sm:$0xff]
      %v1427 = vld [vmem:[%s7 + $0x30] sm:$0xff]
      %v1428 = vld [vmem:[%s7 + $0x38] sm:$0xff]
      %v1429 = vld [vmem:[%s7 + $0x40] sm:$0xff]
      %v1430 = vld [vmem:[%s7 + $0x48] sm:$0xff]
      %v1431 = vld [vmem:[%s7 + $0x50] sm:$0xff]
      %v1432 = vld [vmem:[%s7 + $0x58] sm:$0xff]
      %v1433 = vld [vmem:[%s7 + $0x60] sm:$0xff]
      %v1434 = vld [vmem:[%s7 + $0x68] sm:$0xff]
      %v1435 = vld [vmem:[%s7 + $0x70] sm:$0xff]
      %v1436 = vld [vmem:[%s7 + $0x78] sm:$0xff]
      %v1437 = vld [vmem:[%s7 + $0x80] sm:$0xff]
      %v1438 = vld [vmem:[%s7 + $0x88] sm:$0xff]
      %v1439 = vld [vmem:[%s7 + $0x90] sm:$0xff]
      %v1440 = vld [vmem:[%s7 + $0x98] sm:$0xff]
      %v1441 = vld [vmem:[%s7 + $0xa0] sm:$0xff]
      %v1442 = vld [vmem:[%s7 + $0xa8] sm:$0xff]
      %v1443 = vld [vmem:[%s7 + $0xb0] sm:$0xff]
      %v1444 = vld [vmem:[%s7 + $0xb8] sm:$0xff]
      %v1445 = vld [vmem:[%s7 + $0xc0] sm:$0xff]
      %v1446 = vld [vmem:[%s7 + $0xc8] sm:$0xff]
      %v1447 = vld [vmem:[%s7 + $0xd0] sm:$0xff]
      %v1448 = vld [vmem:[%s7 + $0xd8] sm:$0xff]
      %v1449 = vld [vmem:[%s7 + $0xe0] sm:$0xff]
      %v1450 = vld [vmem:[%s7 + $0xe8] sm:$0xff]
      %v1451 = vld [vmem:[%s7 + $0xf0] sm:$0xff]
      %v1452 = vld [vmem:[%s7 + $0xf8] sm:$0xff]
      %v1453 = vld [vmem:[%s8] sm:$0x3]
      %v1455 = vlaneseq
      %v1456 = vshrl.u32 %v1455, 7
      %v1457 = vsub.s32 0, %v1456
      %v1458 = vrot.slane %v1453, %v1457
      %v1459 = vlaneseq
      %v1460 = vshrl.u32 %v1459, 7
      %v1461 = vsub.s32 1, %v1460
      %v1462 = vrot.slane %v1453, %v1461
      %v1497 = vunpack.c.l.b16 %v1421
      %v1498 = vunpack.c.h.b16 %v1421
      %v1499 = vunpack.c.l.b16 %v1422
      %v1500 = vunpack.c.h.b16 %v1422
      %v1501 = vunpack.c.l.b16 %v1423
      %v1502 = vunpack.c.h.b16 %v1423
      %v1503 = vunpack.c.l.b16 %v1424
      %v1504 = vunpack.c.h.b16 %v1424
      %v1505 = vunpack.c.l.b16 %v1425
      %v1506 = vunpack.c.h.b16 %v1425
      %v1507 = vunpack.c.l.b16 %v1426
      %v1508 = vunpack.c.h.b16 %v1426
      %v1509 = vunpack.c.l.b16 %v1427
      %v1510 = vunpack.c.h.b16 %v1427
      %v1511 = vunpack.c.l.b16 %v1428
      %v1512 = vunpack.c.h.b16 %v1428
      %v1513 = vunpack.c.l.b16 %v1429
      %v1514 = vunpack.c.h.b16 %v1429
      %v1515 = vunpack.c.l.b16 %v1430
      %v1516 = vunpack.c.h.b16 %v1430
      %v1517 = vunpack.c.l.b16 %v1431
      %v1518 = vunpack.c.h.b16 %v1431
      %v1519 = vunpack.c.l.b16 %v1432
      %v1520 = vunpack.c.h.b16 %v1432
      %v1521 = vunpack.c.l.b16 %v1433
      %v1522 = vunpack.c.h.b16 %v1433
      %v1523 = vunpack.c.l.b16 %v1434
      %v1524 = vunpack.c.h.b16 %v1434
      %v1525 = vunpack.c.l.b16 %v1435
      %v1526 = vunpack.c.h.b16 %v1435
      %v1527 = vunpack.c.l.b16 %v1436
      %v1528 = vunpack.c.h.b16 %v1436
      %v1529 = vunpack.c.l.b16 %v1437
      %v1530 = vunpack.c.h.b16 %v1437
      %v1531 = vunpack.c.l.b16 %v1438
      %v1532 = vunpack.c.h.b16 %v1438
      %v1533 = vunpack.c.l.b16 %v1439
      %v1534 = vunpack.c.h.b16 %v1439
      %v1535 = vunpack.c.l.b16 %v1440
      %v1536 = vunpack.c.h.b16 %v1440
      %v1537 = vunpack.c.l.b16 %v1441
      %v1538 = vunpack.c.h.b16 %v1441
      %v1539 = vunpack.c.l.b16 %v1442
      %v1540 = vunpack.c.h.b16 %v1442
      %v1541 = vunpack.c.l.b16 %v1443
      %v1542 = vunpack.c.h.b16 %v1443
      %v1543 = vunpack.c.l.b16 %v1444
      %v1544 = vunpack.c.h.b16 %v1444
      %v1545 = vunpack.c.l.b16 %v1445
      %v1546 = vunpack.c.h.b16 %v1445
      %v1547 = vunpack.c.l.b16 %v1446
      %v1548 = vunpack.c.h.b16 %v1446
      %v1549 = vunpack.c.l.b16 %v1447
      %v1550 = vunpack.c.h.b16 %v1447
      %v1551 = vunpack.c.l.b16 %v1448
      %v1552 = vunpack.c.h.b16 %v1448
      %v1553 = vunpack.c.l.b16 %v1449
      %v1554 = vunpack.c.h.b16 %v1449
      %v1555 = vunpack.c.l.b16 %v1450
      %v1556 = vunpack.c.h.b16 %v1450
      %v1557 = vunpack.c.l.b16 %v1451
      %v1558 = vunpack.c.h.b16 %v1451
      %v1559 = vunpack.c.l.b16 %v1452
      %v1560 = vunpack.c.h.b16 %v1452
      %v1561 = vpack.c.b16 %v1499, %v1497
      %v1562 = vpack.c.b16 %v1500, %v1498
      %v1563 = vpack.c.b16 %v1503, %v1501
      %v1564 = vpack.c.b16 %v1504, %v1502
      %v1565 = vpack.c.b16 %v1507, %v1505
      %v1566 = vpack.c.b16 %v1508, %v1506
      %v1567 = vpack.c.b16 %v1511, %v1509
      %v1568 = vpack.c.b16 %v1512, %v1510
      %v1569 = vpack.c.b16 %v1515, %v1513
      %v1570 = vpack.c.b16 %v1516, %v1514
      %v1571 = vpack.c.b16 %v1519, %v1517
      %v1572 = vpack.c.b16 %v1520, %v1518
      %v1573 = vpack.c.b16 %v1523, %v1521
      %v1574 = vpack.c.b16 %v1524, %v1522
      %v1575 = vpack.c.b16 %v1527, %v1525
      %v1576 = vpack.c.b16 %v1528, %v1526
      %v1577 = vpack.c.b16 %v1531, %v1529
      %v1578 = vpack.c.b16 %v1532, %v1530
      %v1579 = vpack.c.b16 %v1535, %v1533
      %v1580 = vpack.c.b16 %v1536, %v1534
      %v1581 = vpack.c.b16 %v1539, %v1537
      %v1582 = vpack.c.b16 %v1540, %v1538
      %v1583 = vpack.c.b16 %v1543, %v1541
      %v1584 = vpack.c.b16 %v1544, %v1542
      %v1585 = vpack.c.b16 %v1547, %v1545
      %v1586 = vpack.c.b16 %v1548, %v1546
      %v1587 = vpack.c.b16 %v1551, %v1549
      %v1588 = vpack.c.b16 %v1552, %v1550
      %v1589 = vpack.c.b16 %v1555, %v1553
      %v1590 = vpack.c.b16 %v1556, %v1554
      %v1591 = vpack.c.b16 %v1559, %v1557
      %v1592 = vpack.c.b16 %v1560, %v1558
      %1625 = vmatprep.subr.bf16.mxu0 %v1562
      %1626 = vmatpush1.bf16.msra.mxu0 %v1561
      %1627 = vmatprep.subr.bf16.mxu0 %v1564
      %1628 = vmatpush1.bf16.msra.mxu0 %v1563
      %1629 = vmatprep.subr.bf16.mxu0 %v1566
      %1630 = vmatpush1.bf16.msra.mxu0 %v1565
      %1631 = vmatprep.subr.bf16.mxu0 %v1568
      %1632 = vmatpush1.bf16.msra.mxu0 %v1567
      %1633 = vmatprep.subr.bf16.mxu0 %v1570
      %1634 = vmatpush1.bf16.msra.mxu0 %v1569
      %1635 = vmatprep.subr.bf16.mxu0 %v1572
      %1636 = vmatpush1.bf16.msra.mxu0 %v1571
      %1637 = vmatprep.subr.bf16.mxu0 %v1574
      %1638 = vmatpush1.bf16.msra.mxu0 %v1573
      %1639 = vmatprep.subr.bf16.mxu0 %v1576
      %1640 = vmatpush1.bf16.msra.mxu0 %v1575
      %1641 = vmatprep.subr.bf16.mxu0 %v1578
      %1642 = vmatpush1.bf16.msra.mxu0 %v1577
      %1643 = vmatprep.subr.bf16.mxu0 %v1580
      %1644 = vmatpush1.bf16.msra.mxu0 %v1579
      %1645 = vmatprep.subr.bf16.mxu0 %v1582
      %1646 = vmatpush1.bf16.msra.mxu0 %v1581
      %1647 = vmatprep.subr.bf16.mxu0 %v1584
      %1648 = vmatpush1.bf16.msra.mxu0 %v1583
      %1649 = vmatprep.subr.bf16.mxu0 %v1586
      %1650 = vmatpush1.bf16.msra.mxu0 %v1585
      %1651 = vmatprep.subr.bf16.mxu0 %v1588
      %1652 = vmatpush1.bf16.msra.mxu0 %v1587
      %1653 = vmatprep.subr.bf16.mxu0 %v1590
      %1654 = vmatpush1.bf16.msra.mxu0 %v1589
      %1655 = vmatprep.subr.bf16.mxu0 %v1592
      %1656 = vmatpush1.bf16.msra.mxu0 %v1591
      %1657 = vmatprep.mubr.bf16.mxu0 %v1420
      %1658 = vmatmul.mubr.bf16.gmra.mrb[0].mxu0 %v1419
      %v1659 = vpop.f32.mrb[0].mxu0
      %v1660 = vadd.f32 %v1458, %v1659
      %v1661 = vpop.f32.mrb[0].mxu0
      %v1662 = vadd.f32 %v1462, %v1661
      %v1663 = vpop.f32.mrb[0].mxu0
      %v1664 = vpop.f32.mrb[0].mxu0
      %1665 = vdwg.mxu0
      %v1666 = vmax.f32 %v1660, 0.0
      %v1667 = vmax.f32 %v1662, 0.0
      %v1668 = vpack.c.bf16 %v1666, %v1666
      %v1669 = vpack.c.bf16 %v1667, %v1667
      %v1670 = vld [vmem:[%s9] sm:$0xff]
      %v1671 = vld [vmem:[%s9 + $0x8] sm:$0xff]
      %v1672 = vld [vmem:[%s9 + $0x10] sm:$0xff]
      %v1673 = vld [vmem:[%s9 + $0x18] sm:$0xff]
      %v1674 = vld [vmem:[%s9 + $0x20] sm:$0xff]
      %v1675 = vld [vmem:[%s9 + $0x28] sm:$0xff]
      %v1676 = vld [vmem:[%s9 + $0x30] sm:$0xff]
      %v1677 = vld [vmem:[%s9 + $0x38] sm:$0xff]
      %v1678 = vld [vmem:[%s9 + $0x40] sm:$0xff]
      %v1679 = vld [vmem:[%s9 + $0x48] sm:$0xff]
      %v1680 = vld [vmem:[%s9 + $0x50] sm:$0xff]
      %v1681 = vld [vmem:[%s9 + $0x58] sm:$0xff]
      %v1682 = vld [vmem:[%s9 + $0x60] sm:$0xff]
      %v1683 = vld [vmem:[%s9 + $0x68] sm:$0xff]
      %v1684 = vld [vmem:[%s9 + $0x70] sm:$0xff]
      %v1685 = vld [vmem:[%s9 + $0x78] sm:$0xff]
      %v1686 = vld [vmem:[%s9 + $0x80] sm:$0xff]
      %v1687 = vld [vmem:[%s9 + $0x88] sm:$0xff]
      %v1688 = vld [vmem:[%s9 + $0x90] sm:$0xff]
      %v1689 = vld [vmem:[%s9 + $0x98] sm:$0xff]
      %v1690 = vld [vmem:[%s9 + $0xa0] sm:$0xff]
      %v1691 = vld [vmem:[%s9 + $0xa8] sm:$0xff]
      %v1692 = vld [vmem:[%s9 + $0xb0] sm:$0xff]
      %v1693 = vld [vmem:[%s9 + $0xb8] sm:$0xff]
      %v1694 = vld [vmem:[%s9 + $0xc0] sm:$0xff]
      %v1695 = vld [vmem:[%s9 + $0xc8] sm:$0xff]
      %v1696 = vld [vmem:[%s9 + $0xd0] sm:$0xff]
      %v1697 = vld [vmem:[%s9 + $0xd8] sm:$0xff]
      %v1698 = vld [vmem:[%s9 + $0xe0] sm:$0xff]
      %v1699 = vld [vmem:[%s9 + $0xe8] sm:$0xff]
      %v1700 = vld [vmem:[%s9 + $0xf0] sm:$0xff]
      %v1701 = vld [vmem:[%s9 + $0xf8] sm:$0xff]
      %v1702 = vld [vmem:[%s10] sm:$0x3]
      %v1704 = vlaneseq
      %v1705 = vshrl.u32 %v1704, 7
      %v1706 = vsub.s32 0, %v1705
      %v1707 = vrot.slane %v1702, %v1706
      %v1708 = vlaneseq
      %v1709 = vshrl.u32 %v1708, 7
      %v1710 = vsub.s32 1, %v1709
      %v1711 = vrot.slane %v1702, %v1710
      %v1746 = vunpack.c.l.b16 %v1670
      %v1747 = vunpack.c.h.b16 %v1670
      %v1748 = vunpack.c.l.b16 %v1671
      %v1749 = vunpack.c.h.b16 %v1671
      %v1750 = vunpack.c.l.b16 %v1672
      %v1751 = vunpack.c.h.b16 %v1672
      %v1752 = vunpack.c.l.b16 %v1673
      %v1753 = vunpack.c.h.b16 %v1673
      %v1754 = vunpack.c.l.b16 %v1674
      %v1755 = vunpack.c.h.b16 %v1674
      %v1756 = vunpack.c.l.b16 %v1675
      %v1757 = vunpack.c.h.b16 %v1675
      %v1758 = vunpack.c.l.b16 %v1676
      %v1759 = vunpack.c.h.b16 %v1676
      %v1760 = vunpack.c.l.b16 %v1677
      %v1761 = vunpack.c.h.b16 %v1677
      %v1762 = vunpack.c.l.b16 %v1678
      %v1763 = vunpack.c.h.b16 %v1678
      %v1764 = vunpack.c.l.b16 %v1679
      %v1765 = vunpack.c.h.b16 %v1679
      %v1766 = vunpack.c.l.b16 %v1680
      %v1767 = vunpack.c.h.b16 %v1680
      %v1768 = vunpack.c.l.b16 %v1681
      %v1769 = vunpack.c.h.b16 %v1681
      %v1770 = vunpack.c.l.b16 %v1682
      %v1771 = vunpack.c.h.b16 %v1682
      %v1772 = vunpack.c.l.b16 %v1683
      %v1773 = vunpack.c.h.b16 %v1683
      %v1774 = vunpack.c.l.b16 %v1684
      %v1775 = vunpack.c.h.b16 %v1684
      %v1776 = vunpack.c.l.b16 %v1685
      %v1777 = vunpack.c.h.b16 %v1685
      %v1778 = vunpack.c.l.b16 %v1686
      %v1779 = vunpack.c.h.b16 %v1686
      %v1780 = vunpack.c.l.b16 %v1687
      %v1781 = vunpack.c.h.b16 %v1687
      %v1782 = vunpack.c.l.b16 %v1688
      %v1783 = vunpack.c.h.b16 %v1688
      %v1784 = vunpack.c.l.b16 %v1689
      %v1785 = vunpack.c.h.b16 %v1689
      %v1786 = vunpack.c.l.b16 %v1690
      %v1787 = vunpack.c.h.b16 %v1690
      %v1788 = vunpack.c.l.b16 %v1691
      %v1789 = vunpack.c.h.b16 %v1691
      %v1790 = vunpack.c.l.b16 %v1692
      %v1791 = vunpack.c.h.b16 %v1692
      %v1792 = vunpack.c.l.b16 %v1693
      %v1793 = vunpack.c.h.b16 %v1693
      %v1794 = vunpack.c.l.b16 %v1694
      %v1795 = vunpack.c.h.b16 %v1694
      %v1796 = vunpack.c.l.b16 %v1695
      %v1797 = vunpack.c.h.b16 %v1695
      %v1798 = vunpack.c.l.b16 %v1696
      %v1799 = vunpack.c.h.b16 %v1696
      %v1800 = vunpack.c.l.b16 %v1697
      %v1801 = vunpack.c.h.b16 %v1697
      %v1802 = vunpack.c.l.b16 %v1698
      %v1803 = vunpack.c.h.b16 %v1698
      %v1804 = vunpack.c.l.b16 %v1699
      %v1805 = vunpack.c.h.b16 %v1699
      %v1806 = vunpack.c.l.b16 %v1700
      %v1807 = vunpack.c.h.b16 %v1700
      %v1808 = vunpack.c.l.b16 %v1701
      %v1809 = vunpack.c.h.b16 %v1701
      %v1810 = vpack.c.b16 %v1748, %v1746
      %v1811 = vpack.c.b16 %v1749, %v1747
      %v1812 = vpack.c.b16 %v1752, %v1750
      %v1813 = vpack.c.b16 %v1753, %v1751
      %v1814 = vpack.c.b16 %v1756, %v1754
      %v1815 = vpack.c.b16 %v1757, %v1755
      %v1816 = vpack.c.b16 %v1760, %v1758
      %v1817 = vpack.c.b16 %v1761, %v1759
      %v1818 = vpack.c.b16 %v1764, %v1762
      %v1819 = vpack.c.b16 %v1765, %v1763
      %v1820 = vpack.c.b16 %v1768, %v1766
      %v1821 = vpack.c.b16 %v1769, %v1767
      %v1822 = vpack.c.b16 %v1772, %v1770
      %v1823 = vpack.c.b16 %v1773, %v1771
      %v1824 = vpack.c.b16 %v1776, %v1774
      %v1825 = vpack.c.b16 %v1777, %v1775
      %v1826 = vpack.c.b16 %v1780, %v1778
      %v1827 = vpack.c.b16 %v1781, %v1779
      %v1828 = vpack.c.b16 %v1784, %v1782
      %v1829 = vpack.c.b16 %v1785, %v1783
      %v1830 = vpack.c.b16 %v1788, %v1786
      %v1831 = vpack.c.b16 %v1789, %v1787
      %v1832 = vpack.c.b16 %v1792, %v1790
      %v1833 = vpack.c.b16 %v1793, %v1791
      %v1834 = vpack.c.b16 %v1796, %v1794
      %v1835 = vpack.c.b16 %v1797, %v1795
      %v1836 = vpack.c.b16 %v1800, %v1798
      %v1837 = vpack.c.b16 %v1801, %v1799
      %v1838 = vpack.c.b16 %v1804, %v1802
      %v1839 = vpack.c.b16 %v1805, %v1803
      %v1840 = vpack.c.b16 %v1808, %v1806
      %v1841 = vpack.c.b16 %v1809, %v1807
      %1874 = vmatprep.subr.bf16.mxu0 %v1811
      %1875 = vmatpush1.bf16.msra.mxu0 %v1810
      %1876 = vmatprep.subr.bf16.mxu0 %v1813
      %1877 = vmatpush1.bf16.msra.mxu0 %v1812
      %1878 = vmatprep.subr.bf16.mxu0 %v1815
      %1879 = vmatpush1.bf16.msra.mxu0 %v1814
      %1880 = vmatprep.subr.bf16.mxu0 %v1817
      %1881 = vmatpush1.bf16.msra.mxu0 %v1816
      %1882 = vmatprep.subr.bf16.mxu0 %v1819
      %1883 = vmatpush1.bf16.msra.mxu0 %v1818
      %1884 = vmatprep.subr.bf16.mxu0 %v1821
      %1885 = vmatpush1.bf16.msra.mxu0 %v1820
      %1886 = vmatprep.subr.bf16.mxu0 %v1823
      %1887 = vmatpush1.bf16.msra.mxu0 %v1822
      %1888 = vmatprep.subr.bf16.mxu0 %v1825
      %1889 = vmatpush1.bf16.msra.mxu0 %v1824
      %1890 = vmatprep.subr.bf16.mxu0 %v1827
      %1891 = vmatpush1.bf16.msra.mxu0 %v1826
      %1892 = vmatprep.subr.bf16.mxu0 %v1829
      %1893 = vmatpush1.bf16.msra.mxu0 %v1828
      %1894 = vmatprep.subr.bf16.mxu0 %v1831
      %1895 = vmatpush1.bf16.msra.mxu0 %v1830
      %1896 = vmatprep.subr.bf16.mxu0 %v1833
      %1897 = vmatpush1.bf16.msra.mxu0 %v1832
      %1898 = vmatprep.subr.bf16.mxu0 %v1835
      %1899 = vmatpush1.bf16.msra.mxu0 %v1834
      %1900 = vmatprep.subr.bf16.mxu0 %v1837
      %1901 = vmatpush1.bf16.msra.mxu0 %v1836
      %1902 = vmatprep.subr.bf16.mxu0 %v1839
      %1903 = vmatpush1.bf16.msra.mxu0 %v1838
      %1904 = vmatprep.subr.bf16.mxu0 %v1841
      %1905 = vmatpush1.bf16.msra.mxu0 %v1840
      %1906 = vmatprep.mubr.bf16.mxu0 %v1669
      %1907 = vmatmul.mubr.bf16.gmra.mrb[0].mxu0 %v1668
      %v1908 = vpop.f32.mrb[0].mxu0
      %v1909 = vadd.f32 %v1707, %v1908
      %v1910 = vpop.f32.mrb[0].mxu0
      %v1911 = vadd.f32 %v1711, %v1910
      %v1912 = vpop.f32.mrb[0].mxu0
      %v1913 = vpop.f32.mrb[0].mxu0
      %1914 = vdwg.mxu0
      %v1915 = vmax.f32 %v1911, -10.0
      %v1916 = vmin.f32 %v1915, 2.0
      %v1917 = vld [vmem:[%s11] sm:$0x3]
      %v1918 = vmul.f32 %v1916, 1.442695
      %v1919 = vpow.pop %v1918
      %v1920 = vmul.f32 %v1917, %v1919
      %v1921 = vadd.f32 %v1909, %v1920
      %v1922 = vtanh.pop %v1921
      %1923 = vst [vmem:[#allocation3] sm:$0x3] %v1922
    $region57: #{forward.7} parent=1 // pred_fallthru
      _
    // Predicated region
    $region58: #{forward.7} parent=1 // pred_check
      _
    $region59: #{forward.7} parent=1 // pred_check_branch
      %1925 = sbr.rel (0) target = $region61
    $region60: #{forward.7} parent=1 // pred_region
      %s1927 = ssub.s32 32, 32
      %1928 = vsyncadd [#allocation4], %s1927
      %s1930 = sshll.u32 [#allocation3], 4
      %s1931 = int_to_ptr.vmem [resolvable:$true] %s1930
      %1933 = dma.vmem_to_hbm [thread:$0]  %s1931, 32, %s12, [#allocation4]
    $region61: #{forward.7} parent=1 // pred_fallthru
      _
    // Predicated region
    $region62: #{forward.7} parent=1 // pred_check
      _
    $region63: #{forward.7} parent=1 // pred_check_branch
      %1935 = sbr.rel (0) target = $region65
    $region64: #{forward.7} parent=1 // pred_region
      %1936 = dma.done [#allocation4], 32
    $region65: #{forward.7} parent=1 // pred_fallthru
      _
    %1937 = vsyncpa [#allocation4], 1

</llo_original>
